<compile_context>
chip_gen: v6e
topology: v6e:2x2x1
jax: 0.10.0
libtpu: 0.0.40
codegen_flags: <defaults>
</compile_context>

<pallas_src>
import functools

import jax
import jax.numpy as jnp
from jax.experimental import pallas as pl
from jax.experimental.pallas import tpu as pltpu

NUM_GROUPS = 32      # fixed by the module: nn.GroupNorm(32, channels)
EPS = 1e-5           # nn.GroupNorm default
LANE = 128


# ----------------------------------------------------------------------------
# Monolithic kernel: one grid step per batch element, everything resident.
# ----------------------------------------------------------------------------
def _nonlocal_kernel_fused(x_ref, gamma_ref, beta_ref, gidc_ref, gidr_ref,
                           w_ref, b_ref, o_ref, *, inv_n, hw_valid):
    C = gamma_ref.shape[0]
    x = x_ref[0]                                               # (C, HWp) f32

    # ---- GroupNorm(32, C): per-channel sums -> per-group via exact 0/1 matmul
    ch_sum = jnp.sum(x, axis=1, keepdims=True)                 # (C, 1)
    ch_sq = jnp.sum(x * x, axis=1, keepdims=True)              # (C, 1)
    m = (gidc_ref[...] == gidr_ref[...]).astype(jnp.float32)   # (C, C) same-group
    g_sum = jnp.dot(m, ch_sum, preferred_element_type=jnp.float32,
                    precision=jax.lax.Precision.HIGHEST)
    g_sq = jnp.dot(m, ch_sq, preferred_element_type=jnp.float32,
                   precision=jax.lax.Precision.HIGHEST)
    mean = g_sum * inv_n
    var = g_sq * inv_n - mean * mean
    a = jax.lax.rsqrt(var + EPS) * gamma_ref[...]              # fold norm + affine:
    c0 = beta_ref[...] - mean * a                              #   xn = x * a + c0
    xn_b = (x * a + c0).astype(jnp.bfloat16)                   # single bf16 temp

    # ---- fused QKV: one (3C, C) @ (C, HW) MXU pass, f32 acc + f32 bias, one cast
    qkv = (jnp.dot(w_ref[...], xn_b, preferred_element_type=jnp.float32)
           + b_ref[...]).astype(jnp.bfloat16)                  # (3C, HW) bf16
    q = qkv[0:C]            # attention scale already folded into Wq / bq
    k = qkv[C:2 * C]
    v = qkv[2 * C:3 * C]
    if hw_valid is not None:  # keep padded spatial columns out of the logits
        lane = jax.lax.broadcasted_iota(jnp.int32, k.shape, 1)
        k = jnp.where(lane < hw_valid, k, jnp.zeros_like(k))

    # ---- channel attention, computed transposed (no in-kernel transpose)
    # logits_t[j, i] = sum_p k[j,p] * q[i,p]  ==  (scale * Q K^T)^T
    logits_t = jax.lax.dot_general(k, q, (((1,), (1,)), ((), ())),
                                   preferred_element_type=jnp.float32)   # (C, C)
    lmax = jnp.max(logits_t, axis=0, keepdims=True)
    e = jnp.exp(logits_t - lmax)
    attn_t = (e * pl.reciprocal(jnp.sum(e, axis=0, keepdims=True), approx=True)
              ).astype(jnp.bfloat16)                           # column softmax
    out_sa = jnp.dot(attn_t, v, preferred_element_type=jnp.float32)      # (C, HW)

    o_ref[0] = (x + out_sa).astype(o_ref.dtype)   # residual on pre-norm input


# ----------------------------------------------------------------------------
# HW-tiled three-pass kernel: grid = (B, 3, T), bounded VMEM working set.
# ----------------------------------------------------------------------------
def _nonlocal_kernel_tiled(x_ref, gamma_ref, beta_ref, gidc_ref, gidr_ref,
                           w_ref, b_ref, o_ref,
                           sum_ref, sq_ref, a_ref, c0_ref, logits_ref, attn_ref,
                           *, inv_n, hw_valid, hw_tile):
    C = gamma_ref.shape[0]
    p = pl.program_id(1)
    t = pl.program_id(2)
    nt = pl.num_programs(2)
    x = x_ref[0]                                               # (C, hw_tile) f32

    # ---------------- pass 0: GroupNorm statistics --------------------------
    @pl.when(p == 0)
    def _pass0():
        @pl.when(t == 0)
        def _init():
            sum_ref[...] = jnp.zeros_like(sum_ref)
            sq_ref[...] = jnp.zeros_like(sq_ref)

        sum_ref[...] += jnp.sum(x, axis=1, keepdims=True)
        sq_ref[...] += jnp.sum(x * x, axis=1, keepdims=True)

        @pl.when(t == nt - 1)
        def _finalize():
            m = (gidc_ref[...] == gidr_ref[...]).astype(jnp.float32)   # (C, C)
            g_sum = jnp.dot(m, sum_ref[...], preferred_element_type=jnp.float32,
                            precision=jax.lax.Precision.HIGHEST)
            g_sq = jnp.dot(m, sq_ref[...], preferred_element_type=jnp.float32,
                           precision=jax.lax.Precision.HIGHEST)
            mean = g_sum * inv_n
            var = g_sq * inv_n - mean * mean
            a = jax.lax.rsqrt(var + EPS) * gamma_ref[...]
            a_ref[...] = a
            c0_ref[...] = beta_ref[...] - mean * a

    # ---------------- pass 1: accumulate logits^T, then softmax -------------
    @pl.when(p == 1)
    def _pass1():
        @pl.when(t == 0)
        def _init():
            logits_ref[...] = jnp.zeros_like(logits_ref)

        xn_b = (x * a_ref[...] + c0_ref[...]).astype(jnp.bfloat16)
        qk = (jnp.dot(w_ref[0:2 * C, :], xn_b, preferred_element_type=jnp.float32)
              + b_ref[0:2 * C, :]).astype(jnp.bfloat16)        # (2C, hw_tile)
        q = qk[0:C]
        k = qk[C:2 * C]
        if hw_valid is not None:
            lane = t * hw_tile + jax.lax.broadcasted_iota(jnp.int32, k.shape, 1)
            k = jnp.where(lane < hw_valid, k, jnp.zeros_like(k))
        logits_ref[...] += jax.lax.dot_general(
            k, q, (((1,), (1,)), ((), ())), preferred_element_type=jnp.float32)

        @pl.when(t == nt - 1)
        def _softmax():
            lt = logits_ref[...]
            lmax = jnp.max(lt, axis=0, keepdims=True)
            e = jnp.exp(lt - lmax)
            attn_ref[...] = (e * pl.reciprocal(jnp.sum(e, axis=0, keepdims=True),
                                               approx=True)).astype(jnp.bfloat16)

    # ---------------- pass 2: self-attention output + residual --------------
    @pl.when(p == 2)
    def _pass2():
        xn_b = (x * a_ref[...] + c0_ref[...]).astype(jnp.bfloat16)
        v = (jnp.dot(w_ref[2 * C:3 * C, :], xn_b, preferred_element_type=jnp.float32)
             + b_ref[2 * C:3 * C, :]).astype(jnp.bfloat16)     # (C, hw_tile)
        out_sa = jnp.dot(attn_ref[...], v, preferred_element_type=jnp.float32)
        o_ref[0] = (x + out_sa).astype(o_ref.dtype)


# ----------------------------------------------------------------------------
# Wrapper
# ----------------------------------------------------------------------------
def _vmem_capacity_bytes():
    try:
        return int(pltpu.get_tpu_info().vmem_capacity_bytes)
    except Exception:
        return 64 * 1024 * 1024   # conservative (v7x-sized per-core VMEM)


@functools.partial(jax.jit, static_argnames=("hw_tile",))
def nonlocal_block_forward(x, gn_gamma, gn_beta, qkv_weight, qkv_bias, *,
                           hw_tile=None):
    """Forward pass of NonLocalBlock.

    x          : (B, C, H, W) f32   (PyTorch NCHW layout)
    gn_gamma   : (C,)   gn_beta : (C,)        GroupNorm affine
    qkv_weight : (3C, C, 1, 1)  qkv_bias : (3C,)   Conv2d(C, 3C, 1)
    hw_tile    : None -> auto (monolithic if it fits VMEM, else HW-tiled);
                 int  -> force the HW-tiled kernel with this tile (mult of 128).
    """
    B, C, H, W = x.shape
    assert C % NUM_GROUPS == 0, "GroupNorm(32, C) requires C % 32 == 0"
    HW = H * W
    gs = C // NUM_GROUPS
    scale = float(C) ** -0.5
    inv_n = 1.0 / float(gs * HW)

    # ---- one-time parameter prep (tiny; all heavy work stays in the kernel) --
    # qkv.reshape(b, c, 3, hw) in the module => out-channel 3*i + s is (q,k,v)[s]
    # of channel i (INTERLEAVED rows).  De-interleave into contiguous
    # [Wq; Wk; Wv] blocks and fold the attention scale into Wq / bq.
    w = qkv_weight.reshape(3 * C, C).astype(jnp.float32)
    w3 = jnp.transpose(w.reshape(C, 3, C), (1, 0, 2))              # (3, C, C)
    b3 = jnp.transpose(qkv_bias.reshape(C, 3), (1, 0)).astype(jnp.float32)
    w3 = w3.at[0].multiply(scale)
    b3 = b3.at[0].multiply(scale)
    w_fused = w3.reshape(3 * C, C).astype(jnp.bfloat16)            # (3C, C)
    b_fused = b3.reshape(3 * C, 1)                                 # (3C, 1) f32
    gamma2 = gn_gamma.reshape(C, 1).astype(jnp.float32)
    beta2 = gn_beta.reshape(C, 1).astype(jnp.float32)
    gid = (jnp.arange(C, dtype=jnp.int32) // gs).astype(jnp.float32)
    gid_col = gid.reshape(C, 1)
    gid_row = gid.reshape(1, C)

    # ---- layout / path selection ---------------------------------------------
    hw_128 = -(-HW // LANE) * LANE
    vmem_cap = _vmem_capacity_bytes()
    vmem_limit = int(min(100 * 2 ** 20, max(vmem_cap - 8 * 2 ** 20, 32 * 2 ** 20)))
    budget = (3 * vmem_limit) // 4
    # per-batch monolithic working set: double-buffered f32 x/o blocks + bf16
    # xn/qkv + f32 attention output (+ (C,C) logits/attn and bf16 weights)
    mono_bytes = 28 * C * hw_128 + 12 * C * C

    if hw_tile is None and mono_bytes <= budget:
        tile = None                                                # monolithic
    elif hw_tile is None:
        cols = max((budget - 12 * C * C) // (28 * C), LANE)
        tile = max(LANE, min((int(cols) // LANE) * LANE, 4096, hw_128))
    else:
        assert hw_tile % LANE == 0, "hw_tile must be a multiple of 128"
        tile = int(hw_tile)

    hw_pad = hw_128 if tile is None else -(-HW // tile) * tile
    x2 = x.reshape(B, C, HW)                                       # contiguous view
    if hw_pad != HW:
        x2 = jnp.pad(x2, ((0, 0), (0, 0), (0, hw_pad - HW)))
    hw_valid = HW if hw_pad != HW else None

    cparams = pltpu.CompilerParams(
        dimension_semantics=(("parallel",) if tile is None
                             else ("parallel", "arbitrary", "arbitrary")),
        vmem_limit_bytes=vmem_limit)

    if tile is None:
        kernel = functools.partial(_nonlocal_kernel_fused,
                                   inv_n=inv_n, hw_valid=hw_valid)
        out2 = pl.pallas_call(
            kernel,
            out_shape=jax.ShapeDtypeStruct((B, C, hw_pad), x.dtype),
            grid_spec=pltpu.PrefetchScalarGridSpec(
                num_scalar_prefetch=0,
                grid=(B,),
                in_specs=[
                    pl.BlockSpec((1, C, hw_pad), lambda b: (b, 0, 0)),   # x
                    pl.BlockSpec((C, 1), lambda b: (0, 0)),              # gamma
                    pl.BlockSpec((C, 1), lambda b: (0, 0)),              # beta
                    pl.BlockSpec((C, 1), lambda b: (0, 0)),              # gid col
                    pl.BlockSpec((1, C), lambda b: (0, 0)),              # gid row
                    pl.BlockSpec((3 * C, C), lambda b: (0, 0)),          # [Wq;Wk;Wv]
                    pl.BlockSpec((3 * C, 1), lambda b: (0, 0)),          # [bq;bk;bv]
                ],
                out_specs=pl.BlockSpec((1, C, hw_pad), lambda b: (b, 0, 0)),
            ),
            compiler_params=cparams,
        )(x2, gamma2, beta2, gid_col, gid_row, w_fused, b_fused)
    else:
        n_tiles = hw_pad // tile
        kernel = functools.partial(_nonlocal_kernel_tiled,
                                   inv_n=inv_n, hw_valid=hw_valid, hw_tile=tile)
        out2 = pl.pallas_call(
            kernel,
            out_shape=jax.ShapeDtypeStruct((B, C, hw_pad), x.dtype),
            grid_spec=pltpu.PrefetchScalarGridSpec(
                num_scalar_prefetch=0,
                grid=(B, 3, n_tiles),
                in_specs=[
                    pl.BlockSpec((1, C, tile), lambda b, p, t: (b, 0, t)),   # x
                    pl.BlockSpec((C, 1), lambda b, p, t: (0, 0)),            # gamma
                    pl.BlockSpec((C, 1), lambda b, p, t: (0, 0)),            # beta
                    pl.BlockSpec((C, 1), lambda b, p, t: (0, 0)),            # gid col
                    pl.BlockSpec((1, C), lambda b, p, t: (0, 0)),            # gid row
                    pl.BlockSpec((3 * C, C), lambda b, p, t: (0, 0)),        # W
                    pl.BlockSpec((3 * C, 1), lambda b, p, t: (0, 0)),        # b
                ],
                # only pass 2 (p == 2) writes the output; park the out block at
                # tile 0 during passes 0/1 so no garbage write-backs happen.
                out_specs=pl.BlockSpec((1, C, tile),
                                       lambda b, p, t: (b, 0, t * (p // 2))),
                scratch_shapes=[
                    pltpu.VMEM((C, 1), jnp.float32),    # ch_sum accumulator
                    pltpu.VMEM((C, 1), jnp.float32),    # ch_sumsq accumulator
                    pltpu.VMEM((C, 1), jnp.float32),    # per-channel scale a
                    pltpu.VMEM((C, 1), jnp.float32),    # per-channel shift c0
                    pltpu.VMEM((C, C), jnp.float32),    # logits^T accumulator
                    pltpu.VMEM((C, C), jnp.bfloat16),   # attn^T (post softmax)
                ],
            ),
            compiler_params=cparams,
        )(x2, gamma2, beta2, gid_col, gid_row, w_fused, b_fused)

    if hw_pad != HW:
        out2 = out2[:, :, :HW]
    return out2.reshape(B, C, H, W)


# ----------------------------------------------------------------------------
# Pure-JAX reference that mirrors the PyTorch module exactly.
# ----------------------------------------------------------------------------
def _reference(x, gn_gamma, gn_beta, qkv_weight, qkv_bias):
    B, C, H, W = x.shape
    gs = C // NUM_GROUPS
    xg = x.reshape(B, NUM_GROUPS, gs * H * W)
    mean = jnp.mean(xg, axis=-1, keepdims=True)
    var = jnp.mean((xg - mean) ** 2, axis=-1, keepdims=True)
    xn = ((xg - mean) / jnp.sqrt(var + EPS)).reshape(B, C, H, W)
    xn = xn * gn_gamma[None, :, None, None] + gn_beta[None, :, None, None]
    qkv = jnp.einsum('oc,bchw->bohw', qkv_weight[:, :, 0, 0], xn,
                     precision=jax.lax.Precision.HIGHEST)
    qkv = qkv + qkv_bias[None, :, None, None]
    qkv = qkv.reshape(B, C, 3, H * W)
    qkv = jnp.transpose(qkv, (2, 0, 1, 3))
    q, k, v = qkv[0], qkv[1], qkv[2]
    scale = float(C) ** -0.5
    attn = jnp.einsum('bip,bjp->bij', q, k,
                      precision=jax.lax.Precision.HIGHEST) * scale
    attn = jax.nn.softmax(attn, axis=-1)
    sa = jnp.einsum('bij,bip->bjp', attn, v,
                    precision=jax.lax.Precision.HIGHEST)
    return x + sa.reshape(B, C, H, W)


if __name__ == "__main__":
    key = jax.random.PRNGKey(0)
    k_x, k_w, k_b, k_g, k_be, k_x2 = jax.random.split(key, 6)

    C = 64   # channels must be a multiple of 32 for GroupNorm(32, C)
    limit = (1.0 / C) ** 0.5
    qkv_weight = jax.random.uniform(k_w, (3 * C, C, 1, 1), jnp.float32, -limit, limit)
    qkv_bias = jax.random.uniform(k_b, (3 * C,), jnp.float32, -limit, limit)
    gn_gamma = 1.0 + 0.1 * jax.random.normal(k_g, (C,), dtype=jnp.float32)
    gn_beta = 0.1 * jax.random.normal(k_be, (C,), dtype=jnp.float32)

    # 1) auto path (monolithic per-batch kernel), lane-aligned spatial
    x = jax.random.normal(k_x, (2, C, 16, 16), dtype=jnp.float32)
    out = nonlocal_block_forward(x, gn_gamma, gn_beta, qkv_weight, qkv_bias)
    jax.block_until_ready(out)
    ref = _reference(x, gn_gamma, gn_beta, qkv_weight, qkv_bias)
    assert out.shape == x.shape, out.shape
    assert jnp.allclose(out, ref, atol=2e-2, rtol=2e-2), \
        float(jnp.max(jnp.abs(out - ref)))

    # 2) forced HW-tiled three-pass path (same data, 2 tiles of 128)
    out_t = nonlocal_block_forward(x, gn_gamma, gn_beta, qkv_weight, qkv_bias,
                                   hw_tile=128)
    jax.block_until_ready(out_t)
    assert jnp.allclose(out_t, ref, atol=2e-2, rtol=2e-2), \
        float(jnp.max(jnp.abs(out_t - ref)))

    # 3) non-lane-aligned spatial (15x15 -> HW=225 padded to 256), tiled path
    x3 = jax.random.normal(k_x2, (1, C, 15, 15), dtype=jnp.float32)
    out3 = nonlocal_block_forward(x3, gn_gamma, gn_beta, qkv_weight, qkv_bias,
                                  hw_tile=128)
    jax.block_until_ready(out3)
    ref3 = _reference(x3, gn_gamma, gn_beta, qkv_weight, qkv_bias)
    assert jnp.allclose(out3, ref3, atol=2e-2, rtol=2e-2), \
        float(jnp.max(jnp.abs(out3 - ref3)))

    print("KERNEL_OK")
</pallas_src>

<mosaic_0001>
module attributes {stable_mosaic.version = 11 : i64} {
  func.func @_nonlocal_kernel_fused(%arg0: i32, %arg1: memref<1x64x256xf32, #tpu.memory_space<vmem>>, %arg2: memref<64x1xf32, #tpu.memory_space<vmem>>, %arg3: memref<64x1xf32, #tpu.memory_space<vmem>>, %arg4: memref<64x1xf32, #tpu.memory_space<vmem>>, %arg5: memref<1x64xf32, #tpu.memory_space<vmem>>, %arg6: memref<192x64xbf16, #tpu.memory_space<vmem>>, %arg7: memref<192x1xf32, #tpu.memory_space<vmem>>, %arg8: memref<1x64x256xf32, #tpu.memory_space<vmem>>) attributes {dimension_semantics = [#tpu.dimension_semantics<parallel>], iteration_bounds = array<i64: 2>, scalar_prefetch = 0 : i64, scratch_operands = 0 : i64, tpu.core_type = #tpu.core_type<tc>, window_params = [{transform_indices = @transform_0, window_bounds = array<i64: 1, 64, 256>}, {pipeline_mode = #tpu.pipeline_mode<synchronous>, transform_indices = @transform_1, window_bounds = array<i64: 64, 1>}, {pipeline_mode = #tpu.pipeline_mode<synchronous>, transform_indices = @transform_2, window_bounds = array<i64: 64, 1>}, {pipeline_mode = #tpu.pipeline_mode<synchronous>, transform_indices = @transform_3, window_bounds = array<i64: 64, 1>}, {pipeline_mode = #tpu.pipeline_mode<synchronous>, transform_indices = @transform_4, window_bounds = array<i64: 1, 64>}, {pipeline_mode = #tpu.pipeline_mode<synchronous>, transform_indices = @transform_5, window_bounds = array<i64: 192, 64>}, {pipeline_mode = #tpu.pipeline_mode<synchronous>, transform_indices = @transform_6, window_bounds = array<i64: 192, 1>}, {transform_indices = @transform_7, window_bounds = array<i64: 1, 64, 256>}]} {
    %c0 = arith.constant 0 : index
    %c0_0 = arith.constant 0 : index
    %c0_1 = arith.constant 0 : index
    %0 = vector.load %arg1[%c0, %c0_0, %c0_1] : memref<1x64x256xf32, #tpu.memory_space<vmem>>, vector<1x64x256xf32>
    %1 = vector.shape_cast %0 : vector<1x64x256xf32> to vector<64x256xf32>
    %cst = arith.constant dense<0.000000e+00> : vector<64xf32>
    %2 = vector.multi_reduction <add>, %1, %cst [1] : vector<64x256xf32> to vector<64xf32>
    %3 = vector.shape_cast %2 : vector<64xf32> to vector<64x1xf32>
    %4 = arith.mulf %1, %1 : vector<64x256xf32>
    %cst_2 = arith.constant dense<0.000000e+00> : vector<64xf32>
    %5 = vector.multi_reduction <add>, %4, %cst_2 [1] : vector<64x256xf32> to vector<64xf32>
    %6 = vector.shape_cast %5 : vector<64xf32> to vector<64x1xf32>
    %c0_3 = arith.constant 0 : index
    %c0_4 = arith.constant 0 : index
    %7 = vector.load %arg4[%c0_3, %c0_4] : memref<64x1xf32, #tpu.memory_space<vmem>>, vector<64x1xf32>
    %c0_5 = arith.constant 0 : index
    %c0_6 = arith.constant 0 : index
    %8 = vector.load %arg5[%c0_5, %c0_6] : memref<1x64xf32, #tpu.memory_space<vmem>>, vector<1x64xf32>
    %9 = vector.broadcast %7 : vector<64x1xf32> to vector<64x64xf32>
    %10 = vector.broadcast %8 : vector<1x64xf32> to vector<64x64xf32>
    %11 = arith.cmpf oeq, %9, %10 : vector<64x64xf32>
    %12 = arith.extui %11 : vector<64x64xi1> to vector<64x64xi32>
    %13 = arith.sitofp %12 : vector<64x64xi32> to vector<64x64xf32>
    %cst_7 = arith.constant dense<0.000000e+00> : vector<64x1xf32>
    %14 = tpu.matmul %13, %3, %cst_7 {dimension_numbers = #tpu.dot_dimension_numbers<[1], [0], [0], [1], [0, 0, 1, 1], [], []>, precision = #tpu.contract_precision<fp32>} : vector<64x64xf32>, vector<64x1xf32>, vector<64x1xf32> -> vector<64x1xf32>
    %cst_8 = arith.constant dense<0.000000e+00> : vector<64x1xf32>
    %15 = tpu.matmul %13, %6, %cst_8 {dimension_numbers = #tpu.dot_dimension_numbers<[1], [0], [0], [1], [0, 0, 1, 1], [], []>, precision = #tpu.contract_precision<fp32>} : vector<64x64xf32>, vector<64x1xf32>, vector<64x1xf32> -> vector<64x1xf32>
    %cst_9 = arith.constant 0.001953125 : f32
    %16 = vector.broadcast %cst_9 : f32 to vector<64x1xf32>
    %17 = arith.mulf %14, %16 : vector<64x1xf32>
    %cst_10 = arith.constant 0.001953125 : f32
    %18 = vector.broadcast %cst_10 : f32 to vector<64x1xf32>
    %19 = arith.mulf %15, %18 : vector<64x1xf32>
    %20 = arith.mulf %17, %17 : vector<64x1xf32>
    %21 = arith.subf %19, %20 : vector<64x1xf32>
    %cst_11 = arith.constant 9.99999974E-6 : f32
    %22 = vector.broadcast %cst_11 : f32 to vector<64x1xf32>
    %23 = arith.addf %21, %22 : vector<64x1xf32>
    %24 = math.rsqrt %23 : vector<64x1xf32>
    %c0_12 = arith.constant 0 : index
    %c0_13 = arith.constant 0 : index
    %25 = vector.load %arg2[%c0_12, %c0_13] : memref<64x1xf32, #tpu.memory_space<vmem>>, vector<64x1xf32>
    %26 = arith.mulf %24, %25 : vector<64x1xf32>
    %c0_14 = arith.constant 0 : index
    %c0_15 = arith.constant 0 : index
    %27 = vector.load %arg3[%c0_14, %c0_15] : memref<64x1xf32, #tpu.memory_space<vmem>>, vector<64x1xf32>
    %28 = arith.mulf %17, %26 : vector<64x1xf32>
    %29 = arith.subf %27, %28 : vector<64x1xf32>
    %30 = vector.broadcast %26 : vector<64x1xf32> to vector<64x256xf32>
    %31 = arith.mulf %1, %30 : vector<64x256xf32>
    %32 = vector.broadcast %29 : vector<64x1xf32> to vector<64x256xf32>
    %33 = arith.addf %31, %32 : vector<64x256xf32>
    %34 = arith.truncf %33 : vector<64x256xf32> to vector<64x256xbf16>
    %c0_16 = arith.constant 0 : index
    %c0_17 = arith.constant 0 : index
    %35 = vector.load %arg6[%c0_16, %c0_17] : memref<192x64xbf16, #tpu.memory_space<vmem>>, vector<192x64xbf16>
    %cst_18 = arith.constant dense<0.000000e+00> : vector<192x256xf32>
    %36 = tpu.matmul %35, %34, %cst_18 {dimension_numbers = #tpu.dot_dimension_numbers<[1], [0], [0], [1], [0, 0, 1, 1], [], []>} : vector<192x64xbf16>, vector<64x256xbf16>, vector<192x256xf32> -> vector<192x256xf32>
    %c0_19 = arith.constant 0 : index
    %c0_20 = arith.constant 0 : index
    %37 = vector.load %arg7[%c0_19, %c0_20] : memref<192x1xf32, #tpu.memory_space<vmem>>, vector<192x1xf32>
    %38 = vector.broadcast %37 : vector<192x1xf32> to vector<192x256xf32>
    %39 = arith.addf %36, %38 : vector<192x256xf32>
    %40 = arith.truncf %39 : vector<192x256xf32> to vector<192x256xbf16>
    %41 = vector.extract_strided_slice %40 {offsets = [0, 0], sizes = [64, 256], strides = [1, 1]} : vector<192x256xbf16> to vector<64x256xbf16>
    %42 = vector.extract_strided_slice %40 {offsets = [64, 0], sizes = [64, 256], strides = [1, 1]} : vector<192x256xbf16> to vector<64x256xbf16>
    %43 = vector.extract_strided_slice %40 {offsets = [128, 0], sizes = [64, 256], strides = [1, 1]} : vector<192x256xbf16> to vector<64x256xbf16>
    %cst_21 = arith.constant dense<0.000000e+00> : vector<64x64xf32>
    %44 = tpu.matmul %42, %41, %cst_21 {dimension_numbers = #tpu.dot_dimension_numbers<[1], [1], [0], [0], [0, 0, 1, 0], [], []>} : vector<64x256xbf16>, vector<64x256xbf16>, vector<64x64xf32> -> vector<64x64xf32>
    %cst_22 = arith.constant dense<0xFF800000> : vector<64xf32>
    %45 = vector.multi_reduction <maximumf>, %44, %cst_22 [0] : vector<64x64xf32> to vector<64xf32>
    %46 = vector.shape_cast %45 : vector<64xf32> to vector<1x64xf32>
    %47 = vector.broadcast %46 : vector<1x64xf32> to vector<64x64xf32>
    %48 = arith.subf %44, %47 : vector<64x64xf32>
    %49 = math.exp %48 : vector<64x64xf32>
    %cst_23 = arith.constant dense<0.000000e+00> : vector<64xf32>
    %50 = vector.multi_reduction <add>, %49, %cst_23 [0] : vector<64x64xf32> to vector<64xf32>
    %51 = vector.shape_cast %50 : vector<64xf32> to vector<1x64xf32>
    %52 = tpu.reciprocal %51 {approx = true} : vector<1x64xf32> -> vector<1x64xf32>
    %53 = vector.broadcast %52 : vector<1x64xf32> to vector<64x64xf32>
    %54 = arith.mulf %49, %53 : vector<64x64xf32>
    %55 = arith.truncf %54 : vector<64x64xf32> to vector<64x64xbf16>
    %cst_24 = arith.constant dense<0.000000e+00> : vector<64x256xf32>
    %56 = tpu.matmul %55, %43, %cst_24 {dimension_numbers = #tpu.dot_dimension_numbers<[1], [0], [0], [1], [0, 0, 1, 1], [], []>} : vector<64x64xbf16>, vector<64x256xbf16>, vector<64x256xf32> -> vector<64x256xf32>
    %57 = arith.addf %1, %56 : vector<64x256xf32>
    %c0_25 = arith.constant 0 : index
    %c0_26 = arith.constant 0 : index
    %c0_27 = arith.constant 0 : index
    %58 = vector.load %arg8[%c0_25, %c0_26, %c0_27] : memref<1x64x256xf32, #tpu.memory_space<vmem>>, vector<1x64x256xf32>
    %59 = vector.shape_cast %58 : vector<1x64x256xf32> to vector<64x256xf32>
    %60 = vector.shape_cast %57 : vector<64x256xf32> to vector<1x64x256xf32>
    tpu.vector_store %arg8[%c0_25, %c0_26, %c0_27], %60 {strides = array<i32>} : memref<1x64x256xf32, #tpu.memory_space<vmem>>, vector<1x64x256xf32>,
    return
  }
  func.func @transform_0(%arg0: i32) -> (i32, i32, i32) {
    %c0_i32 = arith.constant 0 : i32
    %c0_i32_0 = arith.constant 0 : i32
    %c0_i32_1 = arith.constant 0 : i32
    return %arg0, %c0_i32, %c0_i32_0 : i32, i32, i32
  }
  func.func @transform_1(%arg0: i32) -> (i32, i32) {
    %c0_i32 = arith.constant 0 : i32
    %c0_i32_0 = arith.constant 0 : i32
    %c0_i32_1 = arith.constant 0 : i32
    return %c0_i32, %c0_i32_0 : i32, i32
  }
  func.func @transform_2(%arg0: i32) -> (i32, i32) {
    %c0_i32 = arith.constant 0 : i32
    %c0_i32_0 = arith.constant 0 : i32
    %c0_i32_1 = arith.constant 0 : i32
    return %c0_i32, %c0_i32_0 : i32, i32
  }
  func.func @transform_3(%arg0: i32) -> (i32, i32) {
    %c0_i32 = arith.constant 0 : i32
    %c0_i32_0 = arith.constant 0 : i32
    %c0_i32_1 = arith.constant 0 : i32
    return %c0_i32, %c0_i32_0 : i32, i32
  }
  func.func @transform_4(%arg0: i32) -> (i32, i32) {
    %c0_i32 = arith.constant 0 : i32
    %c0_i32_0 = arith.constant 0 : i32
    %c0_i32_1 = arith.constant 0 : i32
    return %c0_i32, %c0_i32_0 : i32, i32
  }
  func.func @transform_5(%arg0: i32) -> (i32, i32) {
    %c0_i32 = arith.constant 0 : i32
    %c0_i32_0 = arith.constant 0 : i32
    %c0_i32_1 = arith.constant 0 : i32
    return %c0_i32, %c0_i32_0 : i32, i32
  }
  func.func @transform_6(%arg0: i32) -> (i32, i32) {
    %c0_i32 = arith.constant 0 : i32
    %c0_i32_0 = arith.constant 0 : i32
    %c0_i32_1 = arith.constant 0 : i32
    return %c0_i32, %c0_i32_0 : i32, i32
  }
  func.func @transform_7(%arg0: i32) -> (i32, i32, i32) {
    %c0_i32 = arith.constant 0 : i32
    %c0_i32_0 = arith.constant 0 : i32
    %c0_i32_1 = arith.constant 0 : i32
    return %arg0, %c0_i32, %c0_i32_0 : i32, i32, i32
  }
}

</mosaic_0001>

<llo_original>
// kernel: nonlocal_block_forward.1
$region0: #{nonlocal_block_forward.1}
  #allocation0 [shape = 'u32[]', space=smem, size = 0x4, offset = 0x4, fixed_abs, tag = 'smem constant byte address 0x4 - core index']
  #allocation1 [shape = 'u32[144,128]{1,0:T(1,128)}', space=vmem, size = 0x12000, scoped, tag = 'internal scratch']
  %s0 = inlined_call_operand.vmem [shape: f32[2,64,256], index: 0, kind: input, shape index: {}]
  %s1 = inlined_call_operand.vmem [shape: f32[64,1], index: 1, kind: input, shape index: {}]
  %s2 = inlined_call_operand.vmem [shape: f32[64,1], index: 2, kind: input, shape index: {}]
  %s3 = inlined_call_operand.vmem [shape: f32[64,1], index: 3, kind: input, shape index: {}]
  %s4 = inlined_call_operand.vmem [shape: f32[1,64], index: 4, kind: input, shape index: {}]
  %s5 = inlined_call_operand.vmem [shape: bf16[192,64], index: 5, kind: input, shape index: {}]
  %s6 = inlined_call_operand.vmem [shape: f32[192,1], index: 6, kind: input, shape index: {}]
  %s7 = inlined_call_operand.vmem [shape: f32[2,64,256], index: 7, kind: output, shape index: {}]
  %s8 = sld [smem:[#allocation0]]
  $region61: #{nonlocal_block_forward.1} parent=0
    _
  %s10 = ssub.s32 1, %s8
  %s11 = scalar_select 0, %s10, %s8
  loop: start=0, step=1, limit=4
  $region2: #{nonlocal_block_forward.1} parent=0 // loop_pre_header
    _
  $region3: #{nonlocal_block_forward.1} parent=0 // loop_header
    %s13 = sphi 0, %s17
    %p14 = scmp.ge.s32.totalorder %s13, 4
    %s23 = sphi 0, %s25
    %s26 = sphi 0, %s23
    %s27 = sphi 0, %s26
    %s43 = sphi 0, %s27
    %s47 = sphi 0, %s47
    %s49 = sphi 0, %s47
    %s50 = sphi 0, %s49
    %s64 = sphi 0, %s50
    %s68 = sphi 0, %s68
    %s70 = sphi 0, %s68
    %s71 = sphi 0, %s70
    %s85 = sphi 0, %s71
    %s89 = sphi 0, %s89
    %s91 = sphi 0, %s89
    %s92 = sphi 0, %s91
    %s106 = sphi 0, %s92
    %s110 = sphi 0, %s110
    %s112 = sphi 0, %s110
    %s113 = sphi 0, %s112
    %s127 = sphi 0, %s113
    %s131 = sphi 0, %s131
    %s133 = sphi 0, %s131
    %s134 = sphi 0, %s133
    %s148 = sphi 0, %s134
    %s152 = sphi 0, %s152
    %s154 = sphi 0, %s152
    %s155 = sphi 0, %s154
    %s169 = sphi 0, %s155
    %s175 = sphi 0, %s177
    %s178 = sphi 0, %s175
    %s179 = sphi 0, %s178
    %s195 = sphi 0, %s179
  $region4: #{nonlocal_block_forward.1} parent=0 // loop_header_branch
    %16 = sbr.rel (%p14) target = $region8
  $region5: #{nonlocal_block_forward.1} parent=0 // loop_body
    %s18 = ssub.s32 %s13, 1
    %s19 = ssub.s32 %s13, 2
    %s20 = sadd.s32 %s13, 1
    %s21 = ssub.s32 %s13, %s20
    %p22 = scmp.eq.s32.totalorder %s21, 0
    %s24 = sadd.s32 %s23, 1
    %s25 = scalar_select %p22, %s23, %s24
    %p28 = pneg %p22
    %p29 = scmp.eq.s32.totalorder %s13, 1
    %p30 = por %p28, %p29
    %p31 = scmp.ne.s32.totalorder %s23, %s26
    %p32 = scmp.eq.s32.totalorder %s13, 0
    %p33 = por %p31, %p32
    %p34 = scmp.ne.s32.totalorder %s23, %s26
    %p35 = scmp.eq.s32.totalorder %s18, 1
    %p36 = por %p34, %p35
    %p37 = scmp.ne.s32.totalorder %s26, %s27
    %p38 = scmp.eq.s32.totalorder %s18, 0
    %p39 = por %p37, %p38
    %p40 = scmp.ne.s32.totalorder %s26, %s27
    %p41 = scmp.eq.s32.totalorder %s19, 1
    %p42 = por %p40, %p41
    %p44 = scmp.ne.s32.totalorder %s27, %s43
    %p45 = scmp.eq.s32.totalorder %s19, 0
    %p46 = por %p44, %p45
    %s48 = sadd.s32 %s47, 1
    %p51 = scmp.eq.s32.totalorder %s13, 1
    %p52 = scmp.ne.s32.totalorder %s47, %s49
    %p53 = scmp.eq.s32.totalorder %s13, 0
    %p54 = por %p52, %p53
    %p55 = scmp.ne.s32.totalorder %s47, %s49
    %p56 = scmp.eq.s32.totalorder %s18, 1
    %p57 = por %p55, %p56
    %p58 = scmp.ne.s32.totalorder %s49, %s50
    %p59 = scmp.eq.s32.totalorder %s18, 0
    %p60 = por %p58, %p59
    %p61 = scmp.ne.s32.totalorder %s49, %s50
    %p62 = scmp.eq.s32.totalorder %s19, 1
    %p63 = por %p61, %p62
    %p65 = scmp.ne.s32.totalorder %s50, %s64
    %p66 = scmp.eq.s32.totalorder %s19, 0
    %p67 = por %p65, %p66
    %s69 = sadd.s32 %s68, 1
    %p72 = scmp.eq.s32.totalorder %s13, 1
    %p73 = scmp.ne.s32.totalorder %s68, %s70
    %p74 = scmp.eq.s32.totalorder %s13, 0
    %p75 = por %p73, %p74
    %p76 = scmp.ne.s32.totalorder %s68, %s70
    %p77 = scmp.eq.s32.totalorder %s18, 1
    %p78 = por %p76, %p77
    %p79 = scmp.ne.s32.totalorder %s70, %s71
    %p80 = scmp.eq.s32.totalorder %s18, 0
    %p81 = por %p79, %p80
    %p82 = scmp.ne.s32.totalorder %s70, %s71
    %p83 = scmp.eq.s32.totalorder %s19, 1
    %p84 = por %p82, %p83
    %p86 = scmp.ne.s32.totalorder %s71, %s85
    %p87 = scmp.eq.s32.totalorder %s19, 0
    %p88 = por %p86, %p87
    %s90 = sadd.s32 %s89, 1
    %p93 = scmp.eq.s32.totalorder %s13, 1
    %p94 = scmp.ne.s32.totalorder %s89, %s91
    %p95 = scmp.eq.s32.totalorder %s13, 0
    %p96 = por %p94, %p95
    %p97 = scmp.ne.s32.totalorder %s89, %s91
    %p98 = scmp.eq.s32.totalorder %s18, 1
    %p99 = por %p97, %p98
    %p100 = scmp.ne.s32.totalorder %s91, %s92
    %p101 = scmp.eq.s32.totalorder %s18, 0
    %p102 = por %p100, %p101
    %p103 = scmp.ne.s32.totalorder %s91, %s92
    %p104 = scmp.eq.s32.totalorder %s19, 1
    %p105 = por %p103, %p104
    %p107 = scmp.ne.s32.totalorder %s92, %s106
    %p108 = scmp.eq.s32.totalorder %s19, 0
    %p109 = por %p107, %p108
    %s111 = sadd.s32 %s110, 1
    %p114 = scmp.eq.s32.totalorder %s13, 1
    %p115 = scmp.ne.s32.totalorder %s110, %s112
    %p116 = scmp.eq.s32.totalorder %s13, 0
    %p117 = por %p115, %p116
    %p118 = scmp.ne.s32.totalorder %s110, %s112
    %p119 = scmp.eq.s32.totalorder %s18, 1
    %p120 = por %p118, %p119
    %p121 = scmp.ne.s32.totalorder %s112, %s113
    %p122 = scmp.eq.s32.totalorder %s18, 0
    %p123 = por %p121, %p122
    %p124 = scmp.ne.s32.totalorder %s112, %s113
    %p125 = scmp.eq.s32.totalorder %s19, 1
    %p126 = por %p124, %p125
    %p128 = scmp.ne.s32.totalorder %s113, %s127
    %p129 = scmp.eq.s32.totalorder %s19, 0
    %p130 = por %p128, %p129
    %s132 = sadd.s32 %s131, 1
    %p135 = scmp.eq.s32.totalorder %s13, 1
    %p136 = scmp.ne.s32.totalorder %s131, %s133
    %p137 = scmp.eq.s32.totalorder %s13, 0
    %p138 = por %p136, %p137
    %p139 = scmp.ne.s32.totalorder %s131, %s133
    %p140 = scmp.eq.s32.totalorder %s18, 1
    %p141 = por %p139, %p140
    %p142 = scmp.ne.s32.totalorder %s133, %s134
    %p143 = scmp.eq.s32.totalorder %s18, 0
    %p144 = por %p142, %p143
    %p145 = scmp.ne.s32.totalorder %s133, %s134
    %p146 = scmp.eq.s32.totalorder %s19, 1
    %p147 = por %p145, %p146
    %p149 = scmp.ne.s32.totalorder %s134, %s148
    %p150 = scmp.eq.s32.totalorder %s19, 0
    %p151 = por %p149, %p150
    %s153 = sadd.s32 %s152, 1
    %p156 = scmp.eq.s32.totalorder %s13, 1
    %p157 = scmp.ne.s32.totalorder %s152, %s154
    %p158 = scmp.eq.s32.totalorder %s13, 0
    %p159 = por %p157, %p158
    %p160 = scmp.ne.s32.totalorder %s152, %s154
    %p161 = scmp.eq.s32.totalorder %s18, 1
    %p162 = por %p160, %p161
    %p163 = scmp.ne.s32.totalorder %s154, %s155
    %p164 = scmp.eq.s32.totalorder %s18, 0
    %p165 = por %p163, %p164
    %p166 = scmp.ne.s32.totalorder %s154, %s155
    %p167 = scmp.eq.s32.totalorder %s19, 1
    %p168 = por %p166, %p167
    %p170 = scmp.ne.s32.totalorder %s155, %s169
    %p171 = scmp.eq.s32.totalorder %s19, 0
    %p172 = por %p170, %p171
    %s173 = ssub.s32 %s13, %s20
    %p174 = scmp.eq.s32.totalorder %s173, 0
    %s176 = sadd.s32 %s175, 1
    %s177 = scalar_select %p174, %s175, %s176
    %p180 = pneg %p174
    %p181 = scmp.eq.s32.totalorder %s13, 1
    %p182 = por %p180, %p181
    %p183 = scmp.ne.s32.totalorder %s175, %s178
    %p184 = scmp.eq.s32.totalorder %s13, 0
    %p185 = por %p183, %p184
    %p186 = scmp.ne.s32.totalorder %s175, %s178
    %p187 = scmp.eq.s32.totalorder %s18, 1
    %p188 = por %p186, %p187
    %p189 = scmp.ne.s32.totalorder %s178, %s179
    %p190 = scmp.eq.s32.totalorder %s18, 0
    %p191 = por %p189, %p190
    %p192 = scmp.ne.s32.totalorder %s178, %s179
    %p193 = scmp.eq.s32.totalorder %s19, 1
    %p194 = por %p192, %p193
    %p196 = scmp.ne.s32.totalorder %s179, %s195
    %p197 = scmp.eq.s32.totalorder %s19, 0
    %p198 = por %p196, %p197
    %p199 = scmp.le.s32.totalorder 1, %s13
    %p200 = scmp.lt.s32.totalorder %s13, 3
    %p201 = pnand %p199, %p200
    %p202 = pneg %p201
    // Predicated region
    $region9: #{nonlocal_block_forward.1} parent=5 // pred_check
      _
    $region10: #{nonlocal_block_forward.1} parent=5 // pred_check_branch
      %204 = sbr.rel (%p201) target = $region12
    $region11: #{nonlocal_block_forward.1} parent=5 // pred_region
      %s205 = ssub.s32 %s13, 1
      // Predicated region
      $region13: #{nonlocal_block_forward.1} parent=11 // pred_check
        %p206 = pneg %p60
      $region14: #{nonlocal_block_forward.1} parent=11 // pred_check_branch
        %208 = sbr.rel (%p206) target = $region16
      $region15: #{nonlocal_block_forward.1} parent=11 // pred_region
        _
      $region16: #{nonlocal_block_forward.1} parent=11 // pred_fallthru
        _
      // Predicated region
      $region17: #{nonlocal_block_forward.1} parent=11 // pred_check
        %p209 = pneg %p81
      $region18: #{nonlocal_block_forward.1} parent=11 // pred_check_branch
        %211 = sbr.rel (%p209) target = $region20
      $region19: #{nonlocal_block_forward.1} parent=11 // pred_region
        _
      $region20: #{nonlocal_block_forward.1} parent=11 // pred_fallthru
        _
      // Predicated region
      $region21: #{nonlocal_block_forward.1} parent=11 // pred_check
        %p212 = pneg %p102
      $region22: #{nonlocal_block_forward.1} parent=11 // pred_check_branch
        %214 = sbr.rel (%p212) target = $region24
      $region23: #{nonlocal_block_forward.1} parent=11 // pred_region
        _
      $region24: #{nonlocal_block_forward.1} parent=11 // pred_fallthru
        _
      // Predicated region
      $region25: #{nonlocal_block_forward.1} parent=11 // pred_check
        %p215 = pneg %p123
      $region26: #{nonlocal_block_forward.1} parent=11 // pred_check_branch
        %217 = sbr.rel (%p215) target = $region28
      $region27: #{nonlocal_block_forward.1} parent=11 // pred_region
        _
      $region28: #{nonlocal_block_forward.1} parent=11 // pred_fallthru
        _
      // Predicated region
      $region29: #{nonlocal_block_forward.1} parent=11 // pred_check
        %p218 = pneg %p144
      $region30: #{nonlocal_block_forward.1} parent=11 // pred_check_branch
        %220 = sbr.rel (%p218) target = $region32
      $region31: #{nonlocal_block_forward.1} parent=11 // pred_region
        _
      $region32: #{nonlocal_block_forward.1} parent=11 // pred_fallthru
        _
      // Predicated region
      $region33: #{nonlocal_block_forward.1} parent=11 // pred_check
        %p221 = pneg %p165
      $region34: #{nonlocal_block_forward.1} parent=11 // pred_check_branch
        %223 = sbr.rel (%p221) target = $region36
      $region35: #{nonlocal_block_forward.1} parent=11 // pred_region
        _
      $region36: #{nonlocal_block_forward.1} parent=11 // pred_fallthru
        _
    $region12: #{nonlocal_block_forward.1} parent=5 // pred_fallthru
      _
    %p224 = scmp.lt.s32.totalorder %s13, 2
    // Predicated region
    $region37: #{nonlocal_block_forward.1} parent=5 // pred_check
      %p225 = pneg %p224
    $region38: #{nonlocal_block_forward.1} parent=5 // pred_check_branch
      %227 = sbr.rel (%p225) target = $region40
    $region39: #{nonlocal_block_forward.1} parent=5 // pred_region
      // Predicated region
      $region41: #{nonlocal_block_forward.1} parent=39 // pred_check
        %p228 = pneg %p33
      $region42: #{nonlocal_block_forward.1} parent=39 // pred_check_branch
        %230 = sbr.rel (%p228) target = $region44
      $region43: #{nonlocal_block_forward.1} parent=39 // pred_region
        %p231 = scmp.lt.s32.totalorder %s13, 1
        %s232 = scalar_select %p231, %s13, 1
        %s233 = smul.addr %s232, 16
        %s234 = smul.addr %s233, 8
        %s235 = scalar_lea.vmem %s0, %s234
      $region44: #{nonlocal_block_forward.1} parent=39 // pred_fallthru
        _
    $region40: #{nonlocal_block_forward.1} parent=5 // pred_fallthru
      _
    %p236 = scmp.le.s32.totalorder 1, %s13
    %p237 = scmp.lt.s32.totalorder %s13, 3
    %p238 = pnand %p236, %p237
    %p239 = pneg %p238
    // Predicated region
    $region45: #{nonlocal_block_forward.1} parent=5 // pred_check
      _
    $region46: #{nonlocal_block_forward.1} parent=5 // pred_check_branch
      %241 = sbr.rel (%p238) target = $region48
    $region47: #{nonlocal_block_forward.1} parent=5 // pred_region
      %s242 = ssub.s32 %s13, 1
      %p243 = scmp.lt.s32.totalorder %s18, 1
      %s244 = scalar_select %p243, %s18, 1
      %s245 = smul.addr %s244, 16
      %s246 = smul.addr %s245, 8
      %s247 = scalar_lea.vmem %s0, %s246
      %p248 = pneg %p39
      %p249 = pneg %p36
      %p250 = pneg %p60
      %p251 = pneg %p57
      %p252 = pneg %p81
      %p253 = pneg %p78
      %p254 = pneg %p102
      %p255 = pneg %p99
      %p256 = pneg %p123
      %p257 = pneg %p120
      %p258 = pneg %p144
      %p259 = pneg %p141
      %p260 = pneg %p165
      %p261 = pneg %p162
      %p262 = pneg %p191
      %p263 = pneg %p188
      %p264 = scmp.lt.s32.totalorder %s18, 1
      %s265 = scalar_select %p264, %s18, 1
      %s266 = smul.addr %s265, 16
      %s267 = smul.addr %s266, 8
      %s268 = scalar_lea.vmem %s7, %s267
      %p269 = scmp.lt.s32.totalorder %s18, 1
      %s270 = scalar_select %p269, %s18, 1
      %s271 = smul.addr %s270, 16
      %s272 = smul.addr %s271, 8
      %s273 = scalar_lea.vmem %s0, %s272
      %p274 = scmp.lt.s32.totalorder %s18, 1
      %s275 = scalar_select %p274, %s18, 1
      %s276 = smul.addr %s275, 16
      %s277 = smul.addr %s276, 8
      %s278 = scalar_lea.vmem %s7, %s277
      %v280 = vld [vmem:[%s273] sm:$0xff]
      %v281 = vld [vmem:[%s273 + $0x8] sm:$0xff]
      %v282 = vld [vmem:[%s273 + $0x10] sm:$0xff]
      %v283 = vld [vmem:[%s273 + $0x18] sm:$0xff]
      %v284 = vld [vmem:[%s273 + $0x20] sm:$0xff]
      %v285 = vld [vmem:[%s273 + $0x28] sm:$0xff]
      %v286 = vld [vmem:[%s273 + $0x30] sm:$0xff]
      %v287 = vld [vmem:[%s273 + $0x38] sm:$0xff]
      %v288 = vld [vmem:[%s273 + $0x40] sm:$0xff]
      %v289 = vld [vmem:[%s273 + $0x48] sm:$0xff]
      %v290 = vld [vmem:[%s273 + $0x50] sm:$0xff]
      %v291 = vld [vmem:[%s273 + $0x58] sm:$0xff]
      %v292 = vld [vmem:[%s273 + $0x60] sm:$0xff]
      %v293 = vld [vmem:[%s273 + $0x68] sm:$0xff]
      %v294 = vld [vmem:[%s273 + $0x70] sm:$0xff]
      %v295 = vld [vmem:[%s273 + $0x78] sm:$0xff]
      %v296 = vadd.f32 %v280, %v281
      %297 = vadd.xlane.f32.xlu0 %v296
      %v298 = vpop.xlane.xlu0 %297
      %v299 = vadd.f32 %v282, %v283
      %300 = vadd.xlane.f32.xlu0 %v299
      %v301 = vpop.xlane.xlu0 %300
      %v302 = vadd.f32 %v284, %v285
      %303 = vadd.xlane.f32.xlu0 %v302
      %v304 = vpop.xlane.xlu0 %303
      %v305 = vadd.f32 %v286, %v287
      %306 = vadd.xlane.f32.xlu0 %v305
      %v307 = vpop.xlane.xlu0 %306
      %v308 = vadd.f32 %v288, %v289
      %309 = vadd.xlane.f32.xlu0 %v308
      %v310 = vpop.xlane.xlu0 %309
      %v311 = vadd.f32 %v290, %v291
      %312 = vadd.xlane.f32.xlu0 %v311
      %v313 = vpop.xlane.xlu0 %312
      %v314 = vadd.f32 %v292, %v293
      %315 = vadd.xlane.f32.xlu0 %v314
      %v316 = vpop.xlane.xlu0 %315
      %v317 = vadd.f32 %v294, %v295
      %318 = vadd.xlane.f32.xlu0 %v317
      %v319 = vpop.xlane.xlu0 %318
      %v320 = vmul.f32 %v280, %v280
      %v321 = vmul.f32 %v281, %v281
      %v322 = vmul.f32 %v282, %v282
      %v323 = vmul.f32 %v283, %v283
      %v324 = vmul.f32 %v284, %v284
      %v325 = vmul.f32 %v285, %v285
      %v326 = vmul.f32 %v286, %v286
      %v327 = vmul.f32 %v287, %v287
      %v328 = vmul.f32 %v288, %v288
      %v329 = vmul.f32 %v289, %v289
      %v330 = vmul.f32 %v290, %v290
      %v331 = vmul.f32 %v291, %v291
      %v332 = vmul.f32 %v292, %v292
      %v333 = vmul.f32 %v293, %v293
      %v334 = vmul.f32 %v294, %v294
      %v335 = vmul.f32 %v295, %v295
      %v336 = vadd.f32 %v320, %v321
      %337 = vadd.xlane.f32.xlu0 %v336
      %v338 = vpop.xlane.xlu0 %337
      %v339 = vadd.f32 %v322, %v323
      %340 = vadd.xlane.f32.xlu0 %v339
      %v341 = vpop.xlane.xlu0 %340
      %v342 = vadd.f32 %v324, %v325
      %343 = vadd.xlane.f32.xlu0 %v342
      %v344 = vpop.xlane.xlu0 %343
      %v345 = vadd.f32 %v326, %v327
      %346 = vadd.xlane.f32.xlu0 %v345
      %v347 = vpop.xlane.xlu0 %346
      %v348 = vadd.f32 %v328, %v329
      %349 = vadd.xlane.f32.xlu0 %v348
      %v350 = vpop.xlane.xlu0 %349
      %v351 = vadd.f32 %v330, %v331
      %352 = vadd.xlane.f32.xlu0 %v351
      %v353 = vpop.xlane.xlu0 %352
      %v354 = vadd.f32 %v332, %v333
      %355 = vadd.xlane.f32.xlu0 %v354
      %v356 = vpop.xlane.xlu0 %355
      %v357 = vadd.f32 %v334, %v335
      %358 = vadd.xlane.f32.xlu0 %v357
      %v359 = vpop.xlane.xlu0 %358
      %v360 = vld [vmem:[%s3] sm:$0xff]
      %v361 = vld [vmem:[%s3 + $0x8] sm:$0xff]
      %v362 = vld [vmem:[%s3 + $0x10] sm:$0xff]
      %v363 = vld [vmem:[%s3 + $0x18] sm:$0xff]
      %v364 = vld [vmem:[%s3 + $0x20] sm:$0xff]
      %v365 = vld [vmem:[%s3 + $0x28] sm:$0xff]
      %v366 = vld [vmem:[%s3 + $0x30] sm:$0xff]
      %v367 = vld [vmem:[%s3 + $0x38] sm:$0xff]
      %v368 = vld [vmem:[%s4] sm:$0x1]
      %370 = vset.pattern.permute.xlu0 0
      %371 = vperm.xlu0 %370, %v360
      %v372 = vpop.permute.xlu0 %371
      %375 = vset.pattern.permute.xlu0 0
      %376 = vperm.xlu0 %375, %v361
      %v377 = vpop.permute.xlu0 %376
      %380 = vset.pattern.permute.xlu0 0
      %381 = vperm.xlu0 %380, %v362
      %v382 = vpop.permute.xlu0 %381
      %385 = vset.pattern.permute.xlu0 0
      %386 = vperm.xlu0 %385, %v363
      %v387 = vpop.permute.xlu0 %386
      %390 = vset.pattern.permute.xlu0 0
      %391 = vperm.xlu0 %390, %v364
      %v392 = vpop.permute.xlu0 %391
      %395 = vset.pattern.permute.xlu0 0
      %396 = vperm.xlu0 %395, %v365
      %v397 = vpop.permute.xlu0 %396
      %400 = vset.pattern.permute.xlu0 0
      %401 = vperm.xlu0 %400, %v366
      %v402 = vpop.permute.xlu0 %401
      %405 = vset.pattern.permute.xlu0 0
      %406 = vperm.xlu0 %405, %v367
      %v407 = vpop.permute.xlu0 %406
      %v410 = vlaneseq
      %v411 = vshrl.u32 %v410, 7
      %v412 = vsub.s32 0, %v411
      %v413 = vrot.slane %v368, %v412
      %vm415 = vcmp.eq.f32.partialorder %v372, %v413
      %vm416 = vcmp.eq.f32.partialorder %v377, %v413
      %vm417 = vcmp.eq.f32.partialorder %v382, %v413
      %vm418 = vcmp.eq.f32.partialorder %v387, %v413
      %vm419 = vcmp.eq.f32.partialorder %v392, %v413
      %vm420 = vcmp.eq.f32.partialorder %v397, %v413
      %vm421 = vcmp.eq.f32.partialorder %v402, %v413
      %vm422 = vcmp.eq.f32.partialorder %v407, %v413
      %v423 = vsel %vm415, 1, 0
      %v424 = vsel %vm416, 1, 0
      %v425 = vsel %vm417, 1, 0
      %v426 = vsel %vm418, 1, 0
      %v427 = vsel %vm419, 1, 0
      %v428 = vsel %vm420, 1, 0
      %v429 = vsel %vm421, 1, 0
      %v430 = vsel %vm422, 1, 0
      %v431 = vcvt.s32.f32 %v423
      %v432 = vcvt.s32.f32 %v424
      %v433 = vcvt.s32.f32 %v425
      %v434 = vcvt.s32.f32 %v426
      %v435 = vcvt.s32.f32 %v427
      %v436 = vcvt.s32.f32 %v428
      %v437 = vcvt.s32.f32 %v429
      %v438 = vcvt.s32.f32 %v430
      %vm439 = vcmask 523264
      %v441 = vsel %vm439, %v431, 0
      %v444 = vsel %vm439, %v432, 0
      %v447 = vsel %vm439, %v433, 0
      %v450 = vsel %vm439, %v434, 0
      %v453 = vsel %vm439, %v435, 0
      %v456 = vsel %vm439, %v436, 0
      %v459 = vsel %vm439, %v437, 0
      %v462 = vsel %vm439, %v438, 0
      %464 = vmatprep.subr.mxu0 0.0
      %465 = vmatpush1.msra.mxu0 0.0
      %466 = vmatprep.subr.mxu0 0.0
      %467 = vmatpush1.msra.mxu0 0.0
      %468 = vmatprep.subr.mxu0 0.0
      %469 = vmatpush1.msra.mxu0 0.0
      %470 = vmatprep.subr.mxu0 0.0
      %471 = vmatpush1.msra.mxu0 0.0
      %472 = vmatprep.subr.mxu0 0.0
      %473 = vmatpush1.msra.mxu0 0.0
      %474 = vmatprep.subr.mxu0 0.0
      %475 = vmatpush1.msra.mxu0 0.0
      %476 = vmatprep.subr.mxu0 0.0
      %477 = vmatpush1.msra.mxu0 0.0
      %478 = vmatprep.subr.mxu0 0.0
      %479 = vmatpush1.msra.mxu0 0.0
      %480 = vmatprep.subr.mxu0 0.0
      %v481 = vand.u32 %v319, 4294901760
      %482 = vmatpush1.msra.mxu0 %v481
      %483 = vmatprep.subr.mxu0 0.0
      %v484 = vand.u32 %v316, 4294901760
      %485 = vmatpush1.msra.mxu0 %v484
      %486 = vmatprep.subr.mxu0 0.0
      %v487 = vand.u32 %v313, 4294901760
      %488 = vmatpush1.msra.mxu0 %v487
      %489 = vmatprep.subr.mxu0 0.0
      %v490 = vand.u32 %v310, 4294901760
      %491 = vmatpush1.msra.mxu0 %v490
      %492 = vmatprep.subr.mxu0 0.0
      %v493 = vand.u32 %v307, 4294901760
      %494 = vmatpush1.msra.mxu0 %v493
      %495 = vmatprep.subr.mxu0 0.0
      %v496 = vand.u32 %v304, 4294901760
      %497 = vmatpush1.msra.mxu0 %v496
      %498 = vmatprep.subr.mxu0 0.0
      %v499 = vand.u32 %v301, 4294901760
      %500 = vmatpush1.msra.mxu0 %v499
      %501 = vmatprep.subr.mxu0 0.0
      %v502 = vand.u32 %v298, 4294901760
      %503 = vmatpush1.msra.mxu0 %v502
      %504 = vmatprep.subr.mxu0 0.0
      %505 = vmatpush2.msra.mxu0 0.0
      %506 = vmatprep.subr.mxu0 0.0
      %507 = vmatpush2.msra.mxu0 0.0
      %508 = vmatprep.subr.mxu0 0.0
      %509 = vmatpush2.msra.mxu0 0.0
      %510 = vmatprep.subr.mxu0 0.0
      %511 = vmatpush2.msra.mxu0 0.0
      %512 = vmatprep.subr.mxu0 0.0
      %513 = vmatpush2.msra.mxu0 0.0
      %514 = vmatprep.subr.mxu0 0.0
      %515 = vmatpush2.msra.mxu0 0.0
      %516 = vmatprep.subr.mxu0 0.0
      %517 = vmatpush2.msra.mxu0 0.0
      %518 = vmatprep.subr.mxu0 0.0
      %519 = vmatpush2.msra.mxu0 0.0
      %520 = vmatprep.subr.mxu0 0.0
      %521 = vmatpush2.msra.mxu0 0.0
      %522 = vmatprep.subr.mxu0 0.0
      %523 = vmatpush2.msra.mxu0 0.0
      %524 = vmatprep.subr.mxu0 0.0
      %525 = vmatpush2.msra.mxu0 0.0
      %526 = vmatprep.subr.mxu0 0.0
      %527 = vmatpush2.msra.mxu0 0.0
      %528 = vmatprep.subr.mxu0 0.0
      %529 = vmatpush2.msra.mxu0 0.0
      %530 = vmatprep.subr.mxu0 0.0
      %531 = vmatpush2.msra.mxu0 0.0
      %532 = vmatprep.subr.mxu0 0.0
      %533 = vmatpush2.msra.mxu0 0.0
      %534 = vmatprep.subr.mxu0 0.0
      %535 = vmatpush2.msra.mxu0 0.0
      %536 = vmatprep.mubr.f32.mxu0 0.0
      %v537 = vand.u32 %v441, 4294901760
      %v538 = vsub.f32 %v441, %v537
      %v539 = vand.u32 %v538, 4294901760
      %v540 = vsub.f32 %v538, %v539
      %v541 = vand.u32 %v540, 4294901760
      %542 = vmatmul.mubr.f32.gmra.mxu0 %v541
      %v543 = vpop.f32.mrf.mxu0
      %v544 = vadd.f32 0.0, %v543
      %v545 = vpop.f32.mrf.mxu0
      %546 = vmatprep.mubr.f32.mxu0 0.0
      %v547 = vand.u32 %v444, 4294901760
      %v548 = vsub.f32 %v444, %v547
      %v549 = vand.u32 %v548, 4294901760
      %v550 = vsub.f32 %v548, %v549
      %v551 = vand.u32 %v550, 4294901760
      %552 = vmatmul.mubr.f32.gmra.mxu0 %v551
      %v553 = vpop.f32.mrf.mxu0
      %v554 = vadd.f32 0.0, %v553
      %v555 = vpop.f32.mrf.mxu0
      %556 = vmatprep.mubr.f32.mxu0 0.0
      %v557 = vand.u32 %v447, 4294901760
      %v558 = vsub.f32 %v447, %v557
      %v559 = vand.u32 %v558, 4294901760
      %v560 = vsub.f32 %v558, %v559
      %v561 = vand.u32 %v560, 4294901760
      %562 = vmatmul.mubr.f32.gmra.mxu0 %v561
      %v563 = vpop.f32.mrf.mxu0
      %v564 = vadd.f32 0.0, %v563
      %v565 = vpop.f32.mrf.mxu0
      %566 = vmatprep.mubr.f32.mxu0 0.0
      %v567 = vand.u32 %v450, 4294901760
      %v568 = vsub.f32 %v450, %v567
      %v569 = vand.u32 %v568, 4294901760
      %v570 = vsub.f32 %v568, %v569
      %v571 = vand.u32 %v570, 4294901760
      %572 = vmatmul.mubr.f32.gmra.mxu0 %v571
      %v573 = vpop.f32.mrf.mxu0
      %v574 = vadd.f32 0.0, %v573
      %v575 = vpop.f32.mrf.mxu0
      %576 = vmatprep.mubr.f32.mxu0 0.0
      %v577 = vand.u32 %v453, 4294901760
      %v578 = vsub.f32 %v453, %v577
      %v579 = vand.u32 %v578, 4294901760
      %v580 = vsub.f32 %v578, %v579
      %v581 = vand.u32 %v580, 4294901760
      %582 = vmatmul.mubr.f32.gmra.mxu0 %v581
      %v583 = vpop.f32.mrf.mxu0
      %v584 = vadd.f32 0.0, %v583
      %v585 = vpop.f32.mrf.mxu0
      %586 = vmatprep.mubr.f32.mxu0 0.0
      %v587 = vand.u32 %v456, 4294901760
      %v588 = vsub.f32 %v456, %v587
      %v589 = vand.u32 %v588, 4294901760
      %v590 = vsub.f32 %v588, %v589
      %v591 = vand.u32 %v590, 4294901760
      %592 = vmatmul.mubr.f32.gmra.mxu0 %v591
      %v593 = vpop.f32.mrf.mxu0
      %v594 = vadd.f32 0.0, %v593
      %v595 = vpop.f32.mrf.mxu0
      %596 = vmatprep.mubr.f32.mxu0 0.0
      %v597 = vand.u32 %v459, 4294901760
      %v598 = vsub.f32 %v459, %v597
      %v599 = vand.u32 %v598, 4294901760
      %v600 = vsub.f32 %v598, %v599
      %v601 = vand.u32 %v600, 4294901760
      %602 = vmatmul.mubr.f32.gmra.mxu0 %v601
      %v603 = vpop.f32.mrf.mxu0
      %v604 = vadd.f32 0.0, %v603
      %v605 = vpop.f32.mrf.mxu0
      %606 = vmatprep.mubr.f32.mxu0 0.0
      %v607 = vand.u32 %v462, 4294901760
      %v608 = vsub.f32 %v462, %v607
      %v609 = vand.u32 %v608, 4294901760
      %v610 = vsub.f32 %v608, %v609
      %v611 = vand.u32 %v610, 4294901760
      %612 = vmatmul.mubr.f32.gmra.mxu0 %v611
      %v613 = vpop.f32.mrf.mxu0
      %v614 = vadd.f32 0.0, %v613
      %v615 = vpop.f32.mrf.mxu0
      %616 = vdwg.mxu0
      %617 = vmatprep.subr.mxu0 0.0
      %618 = vmatpush1.msra.mxu0 0.0
      %619 = vmatprep.subr.mxu0 0.0
      %620 = vmatpush1.msra.mxu0 0.0
      %621 = vmatprep.subr.mxu0 0.0
      %622 = vmatpush1.msra.mxu0 0.0
      %623 = vmatprep.subr.mxu0 0.0
      %624 = vmatpush1.msra.mxu0 0.0
      %625 = vmatprep.subr.mxu0 0.0
      %626 = vmatpush1.msra.mxu0 0.0
      %627 = vmatprep.subr.mxu0 0.0
      %628 = vmatpush1.msra.mxu0 0.0
      %629 = vmatprep.subr.mxu0 0.0
      %630 = vmatpush1.msra.mxu0 0.0
      %631 = vmatprep.subr.mxu0 0.0
      %632 = vmatpush1.msra.mxu0 0.0
      %633 = vmatprep.subr.mxu0 0.0
      %v634 = vand.u32 %v319, 4294901760
      %v635 = vsub.f32 %v319, %v634
      %v636 = vand.u32 %v635, 4294901760
      %v637 = vsub.f32 %v635, %v636
      %v638 = vand.u32 %v637, 4294901760
      %639 = vmatpush1.msra.mxu0 %v638
      %640 = vmatprep.subr.mxu0 0.0
      %v641 = vand.u32 %v316, 4294901760
      %v642 = vsub.f32 %v316, %v641
      %v643 = vand.u32 %v642, 4294901760
      %v644 = vsub.f32 %v642, %v643
      %v645 = vand.u32 %v644, 4294901760
      %646 = vmatpush1.msra.mxu0 %v645
      %647 = vmatprep.subr.mxu0 0.0
      %v648 = vand.u32 %v313, 4294901760
      %v649 = vsub.f32 %v313, %v648
      %v650 = vand.u32 %v649, 4294901760
      %v651 = vsub.f32 %v649, %v650
      %v652 = vand.u32 %v651, 4294901760
      %653 = vmatpush1.msra.mxu0 %v652
      %654 = vmatprep.subr.mxu0 0.0
      %v655 = vand.u32 %v310, 4294901760
      %v656 = vsub.f32 %v310, %v655
      %v657 = vand.u32 %v656, 4294901760
      %v658 = vsub.f32 %v656, %v657
      %v659 = vand.u32 %v658, 4294901760
      %660 = vmatpush1.msra.mxu0 %v659
      %661 = vmatprep.subr.mxu0 0.0
      %v662 = vand.u32 %v307, 4294901760
      %v663 = vsub.f32 %v307, %v662
      %v664 = vand.u32 %v663, 4294901760
      %v665 = vsub.f32 %v663, %v664
      %v666 = vand.u32 %v665, 4294901760
      %667 = vmatpush1.msra.mxu0 %v666
      %668 = vmatprep.subr.mxu0 0.0
      %v669 = vand.u32 %v304, 4294901760
      %v670 = vsub.f32 %v304, %v669
      %v671 = vand.u32 %v670, 4294901760
      %v672 = vsub.f32 %v670, %v671
      %v673 = vand.u32 %v672, 4294901760
      %674 = vmatpush1.msra.mxu0 %v673
      %675 = vmatprep.subr.mxu0 0.0
      %v676 = vand.u32 %v301, 4294901760
      %v677 = vsub.f32 %v301, %v676
      %v678 = vand.u32 %v677, 4294901760
      %v679 = vsub.f32 %v677, %v678
      %v680 = vand.u32 %v679, 4294901760
      %681 = vmatpush1.msra.mxu0 %v680
      %682 = vmatprep.subr.mxu0 0.0
      %v683 = vand.u32 %v298, 4294901760
      %v684 = vsub.f32 %v298, %v683
      %v685 = vand.u32 %v684, 4294901760
      %v686 = vsub.f32 %v684, %v685
      %v687 = vand.u32 %v686, 4294901760
      %688 = vmatpush1.msra.mxu0 %v687
      %689 = vmatprep.subr.mxu0 0.0
      %690 = vmatpush2.msra.mxu0 0.0
      %691 = vmatprep.subr.mxu0 0.0
      %692 = vmatpush2.msra.mxu0 0.0
      %693 = vmatprep.subr.mxu0 0.0
      %694 = vmatpush2.msra.mxu0 0.0
      %695 = vmatprep.subr.mxu0 0.0
      %696 = vmatpush2.msra.mxu0 0.0
      %697 = vmatprep.subr.mxu0 0.0
      %698 = vmatpush2.msra.mxu0 0.0
      %699 = vmatprep.subr.mxu0 0.0
      %700 = vmatpush2.msra.mxu0 0.0
      %701 = vmatprep.subr.mxu0 0.0
      %702 = vmatpush2.msra.mxu0 0.0
      %703 = vmatprep.subr.mxu0 0.0
      %704 = vmatpush2.msra.mxu0 0.0
      %705 = vmatprep.subr.mxu0 0.0
      %706 = vmatpush2.msra.mxu0 0.0
      %707 = vmatprep.subr.mxu0 0.0
      %708 = vmatpush2.msra.mxu0 0.0
      %709 = vmatprep.subr.mxu0 0.0
      %710 = vmatpush2.msra.mxu0 0.0
      %711 = vmatprep.subr.mxu0 0.0
      %712 = vmatpush2.msra.mxu0 0.0
      %713 = vmatprep.subr.mxu0 0.0
      %714 = vmatpush2.msra.mxu0 0.0
      %715 = vmatprep.subr.mxu0 0.0
      %716 = vmatpush2.msra.mxu0 0.0
      %717 = vmatprep.subr.mxu0 0.0
      %718 = vmatpush2.msra.mxu0 0.0
      %719 = vmatprep.subr.mxu0 0.0
      %720 = vmatpush2.msra.mxu0 0.0
      %721 = vmatprep.mubr.f32.mxu0 0.0
      %v722 = vand.u32 %v441, 4294901760
      %723 = vmatmul.mubr.f32.gmra.mxu0 %v722
      %v724 = vpop.f32.mrf.mxu0
      %v725 = vadd.f32 %v544, %v724
      %v726 = vpop.f32.mrf.mxu0
      %727 = vmatprep.mubr.f32.mxu0 0.0
      %v728 = vand.u32 %v444, 4294901760
      %729 = vmatmul.mubr.f32.gmra.mxu0 %v728
      %v730 = vpop.f32.mrf.mxu0
      %v731 = vadd.f32 %v554, %v730
      %v732 = vpop.f32.mrf.mxu0
      %733 = vmatprep.mubr.f32.mxu0 0.0
      %v734 = vand.u32 %v447, 4294901760
      %735 = vmatmul.mubr.f32.gmra.mxu0 %v734
      %v736 = vpop.f32.mrf.mxu0
      %v737 = vadd.f32 %v564, %v736
      %v738 = vpop.f32.mrf.mxu0
      %739 = vmatprep.mubr.f32.mxu0 0.0
      %v740 = vand.u32 %v450, 4294901760
      %741 = vmatmul.mubr.f32.gmra.mxu0 %v740
      %v742 = vpop.f32.mrf.mxu0
      %v743 = vadd.f32 %v574, %v742
      %v744 = vpop.f32.mrf.mxu0
      %745 = vmatprep.mubr.f32.mxu0 0.0
      %v746 = vand.u32 %v453, 4294901760
      %747 = vmatmul.mubr.f32.gmra.mxu0 %v746
      %v748 = vpop.f32.mrf.mxu0
      %v749 = vadd.f32 %v584, %v748
      %v750 = vpop.f32.mrf.mxu0
      %751 = vmatprep.mubr.f32.mxu0 0.0
      %v752 = vand.u32 %v456, 4294901760
      %753 = vmatmul.mubr.f32.gmra.mxu0 %v752
      %v754 = vpop.f32.mrf.mxu0
      %v755 = vadd.f32 %v594, %v754
      %v756 = vpop.f32.mrf.mxu0
      %757 = vmatprep.mubr.f32.mxu0 0.0
      %v758 = vand.u32 %v459, 4294901760
      %759 = vmatmul.mubr.f32.gmra.mxu0 %v758
      %v760 = vpop.f32.mrf.mxu0
      %v761 = vadd.f32 %v604, %v760
      %v762 = vpop.f32.mrf.mxu0
      %763 = vmatprep.mubr.f32.mxu0 0.0
      %v764 = vand.u32 %v462, 4294901760
      %765 = vmatmul.mubr.f32.gmra.mxu0 %v764
      %v766 = vpop.f32.mrf.mxu0
      %v767 = vadd.f32 %v614, %v766
      %v768 = vpop.f32.mrf.mxu0
      %769 = vdwg.mxu0
      %770 = vmatprep.subr.mxu0 0.0
      %771 = vmatpush1.msra.mxu0 0.0
      %772 = vmatprep.subr.mxu0 0.0
      %773 = vmatpush1.msra.mxu0 0.0
      %774 = vmatprep.subr.mxu0 0.0
      %775 = vmatpush1.msra.mxu0 0.0
      %776 = vmatprep.subr.mxu0 0.0
      %777 = vmatpush1.msra.mxu0 0.0
      %778 = vmatprep.subr.mxu0 0.0
      %779 = vmatpush1.msra.mxu0 0.0
      %780 = vmatprep.subr.mxu0 0.0
      %781 = vmatpush1.msra.mxu0 0.0
      %782 = vmatprep.subr.mxu0 0.0
      %783 = vmatpush1.msra.mxu0 0.0
      %784 = vmatprep.subr.mxu0 0.0
      %785 = vmatpush1.msra.mxu0 0.0
      %786 = vmatprep.subr.mxu0 0.0
      %v787 = vand.u32 %v319, 4294901760
      %v788 = vsub.f32 %v319, %v787
      %789 = vmatpush1.msra.mxu0 %v788
      %790 = vmatprep.subr.mxu0 0.0
      %v791 = vand.u32 %v316, 4294901760
      %v792 = vsub.f32 %v316, %v791
      %793 = vmatpush1.msra.mxu0 %v792
      %794 = vmatprep.subr.mxu0 0.0
      %v795 = vand.u32 %v313, 4294901760
      %v796 = vsub.f32 %v313, %v795
      %797 = vmatpush1.msra.mxu0 %v796
      %798 = vmatprep.subr.mxu0 0.0
      %v799 = vand.u32 %v310, 4294901760
      %v800 = vsub.f32 %v310, %v799
      %801 = vmatpush1.msra.mxu0 %v800
      %802 = vmatprep.subr.mxu0 0.0
      %v803 = vand.u32 %v307, 4294901760
      %v804 = vsub.f32 %v307, %v803
      %805 = vmatpush1.msra.mxu0 %v804
      %806 = vmatprep.subr.mxu0 0.0
      %v807 = vand.u32 %v304, 4294901760
      %v808 = vsub.f32 %v304, %v807
      %809 = vmatpush1.msra.mxu0 %v808
      %810 = vmatprep.subr.mxu0 0.0
      %v811 = vand.u32 %v301, 4294901760
      %v812 = vsub.f32 %v301, %v811
      %813 = vmatpush1.msra.mxu0 %v812
      %814 = vmatprep.subr.mxu0 0.0
      %v815 = vand.u32 %v298, 4294901760
      %v816 = vsub.f32 %v298, %v815
      %817 = vmatpush1.msra.mxu0 %v816
      %818 = vmatprep.subr.mxu0 0.0
      %819 = vmatpush2.msra.mxu0 0.0
      %820 = vmatprep.subr.mxu0 0.0
      %821 = vmatpush2.msra.mxu0 0.0
      %822 = vmatprep.subr.mxu0 0.0
      %823 = vmatpush2.msra.mxu0 0.0
      %824 = vmatprep.subr.mxu0 0.0
      %825 = vmatpush2.msra.mxu0 0.0
      %826 = vmatprep.subr.mxu0 0.0
      %827 = vmatpush2.msra.mxu0 0.0
      %828 = vmatprep.subr.mxu0 0.0
      %829 = vmatpush2.msra.mxu0 0.0
      %830 = vmatprep.subr.mxu0 0.0
      %831 = vmatpush2.msra.mxu0 0.0
      %832 = vmatprep.subr.mxu0 0.0
      %833 = vmatpush2.msra.mxu0 0.0
      %834 = vmatprep.subr.mxu0 0.0
      %835 = vmatpush2.msra.mxu0 0.0
      %836 = vmatprep.subr.mxu0 0.0
      %837 = vmatpush2.msra.mxu0 0.0
      %838 = vmatprep.subr.mxu0 0.0
      %839 = vmatpush2.msra.mxu0 0.0
      %840 = vmatprep.subr.mxu0 0.0
      %841 = vmatpush2.msra.mxu0 0.0
      %842 = vmatprep.subr.mxu0 0.0
      %843 = vmatpush2.msra.mxu0 0.0
      %844 = vmatprep.subr.mxu0 0.0
      %845 = vmatpush2.msra.mxu0 0.0
      %846 = vmatprep.subr.mxu0 0.0
      %847 = vmatpush2.msra.mxu0 0.0
      %848 = vmatprep.subr.mxu0 0.0
      %849 = vmatpush2.msra.mxu0 0.0
      %850 = vmatprep.mubr.f32.mxu0 0.0
      %v851 = vand.u32 %v441, 4294901760
      %v852 = vsub.f32 %v441, %v851
      %853 = vmatmul.mubr.f32.gmra.mxu0 %v852
      %v854 = vpop.f32.mrf.mxu0
      %v855 = vadd.f32 %v725, %v854
      %v856 = vpop.f32.mrf.mxu0
      %857 = vmatprep.mubr.f32.mxu0 0.0
      %v858 = vand.u32 %v444, 4294901760
      %v859 = vsub.f32 %v444, %v858
      %860 = vmatmul.mubr.f32.gmra.mxu0 %v859
      %v861 = vpop.f32.mrf.mxu0
      %v862 = vadd.f32 %v731, %v861
      %v863 = vpop.f32.mrf.mxu0
      %864 = vmatprep.mubr.f32.mxu0 0.0
      %v865 = vand.u32 %v447, 4294901760
      %v866 = vsub.f32 %v447, %v865
      %867 = vmatmul.mubr.f32.gmra.mxu0 %v866
      %v868 = vpop.f32.mrf.mxu0
      %v869 = vadd.f32 %v737, %v868
      %v870 = vpop.f32.mrf.mxu0
      %871 = vmatprep.mubr.f32.mxu0 0.0
      %v872 = vand.u32 %v450, 4294901760
      %v873 = vsub.f32 %v450, %v872
      %874 = vmatmul.mubr.f32.gmra.mxu0 %v873
      %v875 = vpop.f32.mrf.mxu0
      %v876 = vadd.f32 %v743, %v875
      %v877 = vpop.f32.mrf.mxu0
      %878 = vmatprep.mubr.f32.mxu0 0.0
      %v879 = vand.u32 %v453, 4294901760
      %v880 = vsub.f32 %v453, %v879
      %881 = vmatmul.mubr.f32.gmra.mxu0 %v880
      %v882 = vpop.f32.mrf.mxu0
      %v883 = vadd.f32 %v749, %v882
      %v884 = vpop.f32.mrf.mxu0
      %885 = vmatprep.mubr.f32.mxu0 0.0
      %v886 = vand.u32 %v456, 4294901760
      %v887 = vsub.f32 %v456, %v886
      %888 = vmatmul.mubr.f32.gmra.mxu0 %v887
      %v889 = vpop.f32.mrf.mxu0
      %v890 = vadd.f32 %v755, %v889
      %v891 = vpop.f32.mrf.mxu0
      %892 = vmatprep.mubr.f32.mxu0 0.0
      %v893 = vand.u32 %v459, 4294901760
      %v894 = vsub.f32 %v459, %v893
      %895 = vmatmul.mubr.f32.gmra.mxu0 %v894
      %v896 = vpop.f32.mrf.mxu0
      %v897 = vadd.f32 %v761, %v896
      %v898 = vpop.f32.mrf.mxu0
      %899 = vmatprep.mubr.f32.mxu0 0.0
      %v900 = vand.u32 %v462, 4294901760
      %v901 = vsub.f32 %v462, %v900
      %902 = vmatmul.mubr.f32.gmra.mxu0 %v901
      %v903 = vpop.f32.mrf.mxu0
      %v904 = vadd.f32 %v767, %v903
      %v905 = vpop.f32.mrf.mxu0
      %906 = vdwg.mxu0
      %907 = vmatprep.subr.mxu0 0.0
      %908 = vmatpush1.msra.mxu0 0.0
      %909 = vmatprep.subr.mxu0 0.0
      %910 = vmatpush1.msra.mxu0 0.0
      %911 = vmatprep.subr.mxu0 0.0
      %912 = vmatpush1.msra.mxu0 0.0
      %913 = vmatprep.subr.mxu0 0.0
      %914 = vmatpush1.msra.mxu0 0.0
      %915 = vmatprep.subr.mxu0 0.0
      %916 = vmatpush1.msra.mxu0 0.0
      %917 = vmatprep.subr.mxu0 0.0
      %918 = vmatpush1.msra.mxu0 0.0
      %919 = vmatprep.subr.mxu0 0.0
      %920 = vmatpush1.msra.mxu0 0.0
      %921 = vmatprep.subr.mxu0 0.0
      %922 = vmatpush1.msra.mxu0 0.0
      %923 = vmatprep.subr.mxu0 0.0
      %v924 = vand.u32 %v319, 4294901760
      %925 = vmatpush1.msra.mxu0 %v924
      %926 = vmatprep.subr.mxu0 0.0
      %v927 = vand.u32 %v316, 4294901760
      %928 = vmatpush1.msra.mxu0 %v927
      %929 = vmatprep.subr.mxu0 0.0
      %v930 = vand.u32 %v313, 4294901760
      %931 = vmatpush1.msra.mxu0 %v930
      %932 = vmatprep.subr.mxu0 0.0
      %v933 = vand.u32 %v310, 4294901760
      %934 = vmatpush1.msra.mxu0 %v933
      %935 = vmatprep.subr.mxu0 0.0
      %v936 = vand.u32 %v307, 4294901760
      %937 = vmatpush1.msra.mxu0 %v936
      %938 = vmatprep.subr.mxu0 0.0
      %v939 = vand.u32 %v304, 4294901760
      %940 = vmatpush1.msra.mxu0 %v939
      %941 = vmatprep.subr.mxu0 0.0
      %v942 = vand.u32 %v301, 4294901760
      %943 = vmatpush1.msra.mxu0 %v942
      %944 = vmatprep.subr.mxu0 0.0
      %v945 = vand.u32 %v298, 4294901760
      %946 = vmatpush1.msra.mxu0 %v945
      %947 = vmatprep.subr.mxu0 0.0
      %948 = vmatpush2.msra.mxu0 0.0
      %949 = vmatprep.subr.mxu0 0.0
      %950 = vmatpush2.msra.mxu0 0.0
      %951 = vmatprep.subr.mxu0 0.0
      %952 = vmatpush2.msra.mxu0 0.0
      %953 = vmatprep.subr.mxu0 0.0
      %954 = vmatpush2.msra.mxu0 0.0
      %955 = vmatprep.subr.mxu0 0.0
      %956 = vmatpush2.msra.mxu0 0.0
      %957 = vmatprep.subr.mxu0 0.0
      %958 = vmatpush2.msra.mxu0 0.0
      %959 = vmatprep.subr.mxu0 0.0
      %960 = vmatpush2.msra.mxu0 0.0
      %961 = vmatprep.subr.mxu0 0.0
      %962 = vmatpush2.msra.mxu0 0.0
      %963 = vmatprep.subr.mxu0 0.0
      %964 = vmatpush2.msra.mxu0 0.0
      %965 = vmatprep.subr.mxu0 0.0
      %966 = vmatpush2.msra.mxu0 0.0
      %967 = vmatprep.subr.mxu0 0.0
      %968 = vmatpush2.msra.mxu0 0.0
      %969 = vmatprep.subr.mxu0 0.0
      %970 = vmatpush2.msra.mxu0 0.0
      %971 = vmatprep.subr.mxu0 0.0
      %972 = vmatpush2.msra.mxu0 0.0
      %973 = vmatprep.subr.mxu0 0.0
      %974 = vmatpush2.msra.mxu0 0.0
      %975 = vmatprep.subr.mxu0 0.0
      %976 = vmatpush2.msra.mxu0 0.0
      %977 = vmatprep.subr.mxu0 0.0
      %978 = vmatpush2.msra.mxu0 0.0
      %979 = vmatprep.mubr.f32.mxu0 0.0
      %v980 = vand.u32 %v441, 4294901760
      %v981 = vsub.f32 %v441, %v980
      %v982 = vand.u32 %v981, 4294901760
      %983 = vmatmul.mubr.f32.gmra.mxu0 %v982
      %v984 = vpop.f32.mrf.mxu0
      %v985 = vadd.f32 %v855, %v984
      %v986 = vpop.f32.mrf.mxu0
      %987 = vmatprep.mubr.f32.mxu0 0.0
      %v988 = vand.u32 %v444, 4294901760
      %v989 = vsub.f32 %v444, %v988
      %v990 = vand.u32 %v989, 4294901760
      %991 = vmatmul.mubr.f32.gmra.mxu0 %v990
      %v992 = vpop.f32.mrf.mxu0
      %v993 = vadd.f32 %v862, %v992
      %v994 = vpop.f32.mrf.mxu0
      %995 = vmatprep.mubr.f32.mxu0 0.0
      %v996 = vand.u32 %v447, 4294901760
      %v997 = vsub.f32 %v447, %v996
      %v998 = vand.u32 %v997, 4294901760
      %999 = vmatmul.mubr.f32.gmra.mxu0 %v998
      %v1000 = vpop.f32.mrf.mxu0
      %v1001 = vadd.f32 %v869, %v1000
      %v1002 = vpop.f32.mrf.mxu0
      %1003 = vmatprep.mubr.f32.mxu0 0.0
      %v1004 = vand.u32 %v450, 4294901760
      %v1005 = vsub.f32 %v450, %v1004
      %v1006 = vand.u32 %v1005, 4294901760
      %1007 = vmatmul.mubr.f32.gmra.mxu0 %v1006
      %v1008 = vpop.f32.mrf.mxu0
      %v1009 = vadd.f32 %v876, %v1008
      %v1010 = vpop.f32.mrf.mxu0
      %1011 = vmatprep.mubr.f32.mxu0 0.0
      %v1012 = vand.u32 %v453, 4294901760
      %v1013 = vsub.f32 %v453, %v1012
      %v1014 = vand.u32 %v1013, 4294901760
      %1015 = vmatmul.mubr.f32.gmra.mxu0 %v1014
      %v1016 = vpop.f32.mrf.mxu0
      %v1017 = vadd.f32 %v883, %v1016
      %v1018 = vpop.f32.mrf.mxu0
      %1019 = vmatprep.mubr.f32.mxu0 0.0
      %v1020 = vand.u32 %v456, 4294901760
      %v1021 = vsub.f32 %v456, %v1020
      %v1022 = vand.u32 %v1021, 4294901760
      %1023 = vmatmul.mubr.f32.gmra.mxu0 %v1022
      %v1024 = vpop.f32.mrf.mxu0
      %v1025 = vadd.f32 %v890, %v1024
      %v1026 = vpop.f32.mrf.mxu0
      %1027 = vmatprep.mubr.f32.mxu0 0.0
      %v1028 = vand.u32 %v459, 4294901760
      %v1029 = vsub.f32 %v459, %v1028
      %v1030 = vand.u32 %v1029, 4294901760
      %1031 = vmatmul.mubr.f32.gmra.mxu0 %v1030
      %v1032 = vpop.f32.mrf.mxu0
      %v1033 = vadd.f32 %v897, %v1032
      %v1034 = vpop.f32.mrf.mxu0
      %1035 = vmatprep.mubr.f32.mxu0 0.0
      %v1036 = vand.u32 %v462, 4294901760
      %v1037 = vsub.f32 %v462, %v1036
      %v1038 = vand.u32 %v1037, 4294901760
      %1039 = vmatmul.mubr.f32.gmra.mxu0 %v1038
      %v1040 = vpop.f32.mrf.mxu0
      %v1041 = vadd.f32 %v904, %v1040
      %v1042 = vpop.f32.mrf.mxu0
      %1043 = vdwg.mxu0
      %1044 = vmatprep.subr.mxu0 0.0
      %1045 = vmatpush1.msra.mxu0 0.0
      %1046 = vmatprep.subr.mxu0 0.0
      %1047 = vmatpush1.msra.mxu0 0.0
      %1048 = vmatprep.subr.mxu0 0.0
      %1049 = vmatpush1.msra.mxu0 0.0
      %1050 = vmatprep.subr.mxu0 0.0
      %1051 = vmatpush1.msra.mxu0 0.0
      %1052 = vmatprep.subr.mxu0 0.0
      %1053 = vmatpush1.msra.mxu0 0.0
      %1054 = vmatprep.subr.mxu0 0.0
      %1055 = vmatpush1.msra.mxu0 0.0
      %1056 = vmatprep.subr.mxu0 0.0
      %1057 = vmatpush1.msra.mxu0 0.0
      %1058 = vmatprep.subr.mxu0 0.0
      %1059 = vmatpush1.msra.mxu0 0.0
      %1060 = vmatprep.subr.mxu0 0.0
      %v1061 = vand.u32 %v319, 4294901760
      %v1062 = vsub.f32 %v319, %v1061
      %v1063 = vand.u32 %v1062, 4294901760
      %1064 = vmatpush1.msra.mxu0 %v1063
      %1065 = vmatprep.subr.mxu0 0.0
      %v1066 = vand.u32 %v316, 4294901760
      %v1067 = vsub.f32 %v316, %v1066
      %v1068 = vand.u32 %v1067, 4294901760
      %1069 = vmatpush1.msra.mxu0 %v1068
      %1070 = vmatprep.subr.mxu0 0.0
      %v1071 = vand.u32 %v313, 4294901760
      %v1072 = vsub.f32 %v313, %v1071
      %v1073 = vand.u32 %v1072, 4294901760
      %1074 = vmatpush1.msra.mxu0 %v1073
      %1075 = vmatprep.subr.mxu0 0.0
      %v1076 = vand.u32 %v310, 4294901760
      %v1077 = vsub.f32 %v310, %v1076
      %v1078 = vand.u32 %v1077, 4294901760
      %1079 = vmatpush1.msra.mxu0 %v1078
      %1080 = vmatprep.subr.mxu0 0.0
      %v1081 = vand.u32 %v307, 4294901760
      %v1082 = vsub.f32 %v307, %v1081
      %v1083 = vand.u32 %v1082, 4294901760
      %1084 = vmatpush1.msra.mxu0 %v1083
      %1085 = vmatprep.subr.mxu0 0.0
      %v1086 = vand.u32 %v304, 4294901760
      %v1087 = vsub.f32 %v304, %v1086
      %v1088 = vand.u32 %v1087, 4294901760
      %1089 = vmatpush1.msra.mxu0 %v1088
      %1090 = vmatprep.subr.mxu0 0.0
      %v1091 = vand.u32 %v301, 4294901760
      %v1092 = vsub.f32 %v301, %v1091
      %v1093 = vand.u32 %v1092, 4294901760
      %1094 = vmatpush1.msra.mxu0 %v1093
      %1095 = vmatprep.subr.mxu0 0.0
      %v1096 = vand.u32 %v298, 4294901760
      %v1097 = vsub.f32 %v298, %v1096
      %v1098 = vand.u32 %v1097, 4294901760
      %1099 = vmatpush1.msra.mxu0 %v1098
      %1100 = vmatprep.subr.mxu0 0.0
      %1101 = vmatpush2.msra.mxu0 0.0
      %1102 = vmatprep.subr.mxu0 0.0
      %1103 = vmatpush2.msra.mxu0 0.0
      %1104 = vmatprep.subr.mxu0 0.0
      %1105 = vmatpush2.msra.mxu0 0.0
      %1106 = vmatprep.subr.mxu0 0.0
      %1107 = vmatpush2.msra.mxu0 0.0
      %1108 = vmatprep.subr.mxu0 0.0
      %1109 = vmatpush2.msra.mxu0 0.0
      %1110 = vmatprep.subr.mxu0 0.0
      %1111 = vmatpush2.msra.mxu0 0.0
      %1112 = vmatprep.subr.mxu0 0.0
      %1113 = vmatpush2.msra.mxu0 0.0
      %1114 = vmatprep.subr.mxu0 0.0
      %1115 = vmatpush2.msra.mxu0 0.0
      %1116 = vmatprep.subr.mxu0 0.0
      %1117 = vmatpush2.msra.mxu0 0.0
      %1118 = vmatprep.subr.mxu0 0.0
      %1119 = vmatpush2.msra.mxu0 0.0
      %1120 = vmatprep.subr.mxu0 0.0
      %1121 = vmatpush2.msra.mxu0 0.0
      %1122 = vmatprep.subr.mxu0 0.0
      %1123 = vmatpush2.msra.mxu0 0.0
      %1124 = vmatprep.subr.mxu0 0.0
      %1125 = vmatpush2.msra.mxu0 0.0
      %1126 = vmatprep.subr.mxu0 0.0
      %1127 = vmatpush2.msra.mxu0 0.0
      %1128 = vmatprep.subr.mxu0 0.0
      %1129 = vmatpush2.msra.mxu0 0.0
      %1130 = vmatprep.subr.mxu0 0.0
      %1131 = vmatpush2.msra.mxu0 0.0
      %1132 = vmatprep.mubr.f32.mxu0 0.0
      %v1133 = vand.u32 %v441, 4294901760
      %1134 = vmatmul.mubr.f32.gmra.mxu0 %v1133
      %v1135 = vpop.f32.mrf.mxu0
      %v1136 = vadd.f32 %v985, %v1135
      %v1137 = vpop.f32.mrf.mxu0
      %1138 = vmatprep.mubr.f32.mxu0 0.0
      %v1139 = vand.u32 %v444, 4294901760
      %1140 = vmatmul.mubr.f32.gmra.mxu0 %v1139
      %v1141 = vpop.f32.mrf.mxu0
      %v1142 = vadd.f32 %v993, %v1141
      %v1143 = vpop.f32.mrf.mxu0
      %1144 = vmatprep.mubr.f32.mxu0 0.0
      %v1145 = vand.u32 %v447, 4294901760
      %1146 = vmatmul.mubr.f32.gmra.mxu0 %v1145
      %v1147 = vpop.f32.mrf.mxu0
      %v1148 = vadd.f32 %v1001, %v1147
      %v1149 = vpop.f32.mrf.mxu0
      %1150 = vmatprep.mubr.f32.mxu0 0.0
      %v1151 = vand.u32 %v450, 4294901760
      %1152 = vmatmul.mubr.f32.gmra.mxu0 %v1151
      %v1153 = vpop.f32.mrf.mxu0
      %v1154 = vadd.f32 %v1009, %v1153
      %v1155 = vpop.f32.mrf.mxu0
      %1156 = vmatprep.mubr.f32.mxu0 0.0
      %v1157 = vand.u32 %v453, 4294901760
      %1158 = vmatmul.mubr.f32.gmra.mxu0 %v1157
      %v1159 = vpop.f32.mrf.mxu0
      %v1160 = vadd.f32 %v1017, %v1159
      %v1161 = vpop.f32.mrf.mxu0
      %1162 = vmatprep.mubr.f32.mxu0 0.0
      %v1163 = vand.u32 %v456, 4294901760
      %1164 = vmatmul.mubr.f32.gmra.mxu0 %v1163
      %v1165 = vpop.f32.mrf.mxu0
      %v1166 = vadd.f32 %v1025, %v1165
      %v1167 = vpop.f32.mrf.mxu0
      %1168 = vmatprep.mubr.f32.mxu0 0.0
      %v1169 = vand.u32 %v459, 4294901760
      %1170 = vmatmul.mubr.f32.gmra.mxu0 %v1169
      %v1171 = vpop.f32.mrf.mxu0
      %v1172 = vadd.f32 %v1033, %v1171
      %v1173 = vpop.f32.mrf.mxu0
      %1174 = vmatprep.mubr.f32.mxu0 0.0
      %v1175 = vand.u32 %v462, 4294901760
      %1176 = vmatmul.mubr.f32.gmra.mxu0 %v1175
      %v1177 = vpop.f32.mrf.mxu0
      %v1178 = vadd.f32 %v1041, %v1177
      %v1179 = vpop.f32.mrf.mxu0
      %1180 = vdwg.mxu0
      %1181 = vmatprep.subr.mxu0 0.0
      %1182 = vmatpush1.msra.mxu0 0.0
      %1183 = vmatprep.subr.mxu0 0.0
      %1184 = vmatpush1.msra.mxu0 0.0
      %1185 = vmatprep.subr.mxu0 0.0
      %1186 = vmatpush1.msra.mxu0 0.0
      %1187 = vmatprep.subr.mxu0 0.0
      %1188 = vmatpush1.msra.mxu0 0.0
      %1189 = vmatprep.subr.mxu0 0.0
      %1190 = vmatpush1.msra.mxu0 0.0
      %1191 = vmatprep.subr.mxu0 0.0
      %1192 = vmatpush1.msra.mxu0 0.0
      %1193 = vmatprep.subr.mxu0 0.0
      %1194 = vmatpush1.msra.mxu0 0.0
      %1195 = vmatprep.subr.mxu0 0.0
      %1196 = vmatpush1.msra.mxu0 0.0
      %1197 = vmatprep.subr.mxu0 0.0
      %v1198 = vand.u32 %v319, 4294901760
      %1199 = vmatpush1.msra.mxu0 %v1198
      %1200 = vmatprep.subr.mxu0 0.0
      %v1201 = vand.u32 %v316, 4294901760
      %1202 = vmatpush1.msra.mxu0 %v1201
      %1203 = vmatprep.subr.mxu0 0.0
      %v1204 = vand.u32 %v313, 4294901760
      %1205 = vmatpush1.msra.mxu0 %v1204
      %1206 = vmatprep.subr.mxu0 0.0
      %v1207 = vand.u32 %v310, 4294901760
      %1208 = vmatpush1.msra.mxu0 %v1207
      %1209 = vmatprep.subr.mxu0 0.0
      %v1210 = vand.u32 %v307, 4294901760
      %1211 = vmatpush1.msra.mxu0 %v1210
      %1212 = vmatprep.subr.mxu0 0.0
      %v1213 = vand.u32 %v304, 4294901760
      %1214 = vmatpush1.msra.mxu0 %v1213
      %1215 = vmatprep.subr.mxu0 0.0
      %v1216 = vand.u32 %v301, 4294901760
      %1217 = vmatpush1.msra.mxu0 %v1216
      %1218 = vmatprep.subr.mxu0 0.0
      %v1219 = vand.u32 %v298, 4294901760
      %1220 = vmatpush1.msra.mxu0 %v1219
      %1221 = vmatprep.subr.mxu0 0.0
      %1222 = vmatpush2.msra.mxu0 0.0
      %1223 = vmatprep.subr.mxu0 0.0
      %1224 = vmatpush2.msra.mxu0 0.0
      %1225 = vmatprep.subr.mxu0 0.0
      %1226 = vmatpush2.msra.mxu0 0.0
      %1227 = vmatprep.subr.mxu0 0.0
      %1228 = vmatpush2.msra.mxu0 0.0
      %1229 = vmatprep.subr.mxu0 0.0
      %1230 = vmatpush2.msra.mxu0 0.0
      %1231 = vmatprep.subr.mxu0 0.0
      %1232 = vmatpush2.msra.mxu0 0.0
      %1233 = vmatprep.subr.mxu0 0.0
      %1234 = vmatpush2.msra.mxu0 0.0
      %1235 = vmatprep.subr.mxu0 0.0
      %1236 = vmatpush2.msra.mxu0 0.0
      %1237 = vmatprep.subr.mxu0 0.0
      %1238 = vmatpush2.msra.mxu0 0.0
      %1239 = vmatprep.subr.mxu0 0.0
      %1240 = vmatpush2.msra.mxu0 0.0
      %1241 = vmatprep.subr.mxu0 0.0
      %1242 = vmatpush2.msra.mxu0 0.0
      %1243 = vmatprep.subr.mxu0 0.0
      %1244 = vmatpush2.msra.mxu0 0.0
      %1245 = vmatprep.subr.mxu0 0.0
      %1246 = vmatpush2.msra.mxu0 0.0
      %1247 = vmatprep.subr.mxu0 0.0
      %1248 = vmatpush2.msra.mxu0 0.0
      %1249 = vmatprep.subr.mxu0 0.0
      %1250 = vmatpush2.msra.mxu0 0.0
      %1251 = vmatprep.subr.mxu0 0.0
      %1252 = vmatpush2.msra.mxu0 0.0
      %1253 = vmatprep.mubr.f32.mxu0 0.0
      %v1254 = vand.u32 %v441, 4294901760
      %1255 = vmatmul.mubr.f32.gmra.mxu0 %v1254
      %v1256 = vpop.f32.mrf.mxu0
      %v1257 = vadd.f32 %v1136, %v1256
      %v1258 = vpop.f32.mrf.mxu0
      %1259 = vmatprep.mubr.f32.mxu0 0.0
      %v1260 = vand.u32 %v444, 4294901760
      %1261 = vmatmul.mubr.f32.gmra.mxu0 %v1260
      %v1262 = vpop.f32.mrf.mxu0
      %v1263 = vadd.f32 %v1142, %v1262
      %v1264 = vpop.f32.mrf.mxu0
      %1265 = vmatprep.mubr.f32.mxu0 0.0
      %v1266 = vand.u32 %v447, 4294901760
      %1267 = vmatmul.mubr.f32.gmra.mxu0 %v1266
      %v1268 = vpop.f32.mrf.mxu0
      %v1269 = vadd.f32 %v1148, %v1268
      %v1270 = vpop.f32.mrf.mxu0
      %1271 = vmatprep.mubr.f32.mxu0 0.0
      %v1272 = vand.u32 %v450, 4294901760
      %1273 = vmatmul.mubr.f32.gmra.mxu0 %v1272
      %v1274 = vpop.f32.mrf.mxu0
      %v1275 = vadd.f32 %v1154, %v1274
      %v1276 = vpop.f32.mrf.mxu0
      %1277 = vmatprep.mubr.f32.mxu0 0.0
      %v1278 = vand.u32 %v453, 4294901760
      %1279 = vmatmul.mubr.f32.gmra.mxu0 %v1278
      %v1280 = vpop.f32.mrf.mxu0
      %v1281 = vadd.f32 %v1160, %v1280
      %v1282 = vpop.f32.mrf.mxu0
      %1283 = vmatprep.mubr.f32.mxu0 0.0
      %v1284 = vand.u32 %v456, 4294901760
      %1285 = vmatmul.mubr.f32.gmra.mxu0 %v1284
      %v1286 = vpop.f32.mrf.mxu0
      %v1287 = vadd.f32 %v1166, %v1286
      %v1288 = vpop.f32.mrf.mxu0
      %1289 = vmatprep.mubr.f32.mxu0 0.0
      %v1290 = vand.u32 %v459, 4294901760
      %1291 = vmatmul.mubr.f32.gmra.mxu0 %v1290
      %v1292 = vpop.f32.mrf.mxu0
      %v1293 = vadd.f32 %v1172, %v1292
      %v1294 = vpop.f32.mrf.mxu0
      %1295 = vmatprep.mubr.f32.mxu0 0.0
      %v1296 = vand.u32 %v462, 4294901760
      %1297 = vmatmul.mubr.f32.gmra.mxu0 %v1296
      %v1298 = vpop.f32.mrf.mxu0
      %v1299 = vadd.f32 %v1178, %v1298
      %v1300 = vpop.f32.mrf.mxu0
      %1301 = vdwg.mxu0
      %1302 = vmatprep.subr.mxu0 0.0
      %1303 = vmatpush1.msra.mxu0 0.0
      %1304 = vmatprep.subr.mxu0 0.0
      %1305 = vmatpush1.msra.mxu0 0.0
      %1306 = vmatprep.subr.mxu0 0.0
      %1307 = vmatpush1.msra.mxu0 0.0
      %1308 = vmatprep.subr.mxu0 0.0
      %1309 = vmatpush1.msra.mxu0 0.0
      %1310 = vmatprep.subr.mxu0 0.0
      %1311 = vmatpush1.msra.mxu0 0.0
      %1312 = vmatprep.subr.mxu0 0.0
      %1313 = vmatpush1.msra.mxu0 0.0
      %1314 = vmatprep.subr.mxu0 0.0
      %1315 = vmatpush1.msra.mxu0 0.0
      %1316 = vmatprep.subr.mxu0 0.0
      %1317 = vmatpush1.msra.mxu0 0.0
      %1318 = vmatprep.subr.mxu0 0.0
      %v1319 = vand.u32 %v359, 4294901760
      %1320 = vmatpush1.msra.mxu0 %v1319
      %1321 = vmatprep.subr.mxu0 0.0
      %v1322 = vand.u32 %v356, 4294901760
      %1323 = vmatpush1.msra.mxu0 %v1322
      %1324 = vmatprep.subr.mxu0 0.0
      %v1325 = vand.u32 %v353, 4294901760
      %1326 = vmatpush1.msra.mxu0 %v1325
      %1327 = vmatprep.subr.mxu0 0.0
      %v1328 = vand.u32 %v350, 4294901760
      %1329 = vmatpush1.msra.mxu0 %v1328
      %1330 = vmatprep.subr.mxu0 0.0
      %v1331 = vand.u32 %v347, 4294901760
      %1332 = vmatpush1.msra.mxu0 %v1331
      %1333 = vmatprep.subr.mxu0 0.0
      %v1334 = vand.u32 %v344, 4294901760
      %1335 = vmatpush1.msra.mxu0 %v1334
      %1336 = vmatprep.subr.mxu0 0.0
      %v1337 = vand.u32 %v341, 4294901760
      %1338 = vmatpush1.msra.mxu0 %v1337
      %1339 = vmatprep.subr.mxu0 0.0
      %v1340 = vand.u32 %v338, 4294901760
      %1341 = vmatpush1.msra.mxu0 %v1340
      %1342 = vmatprep.subr.mxu0 0.0
      %1343 = vmatpush2.msra.mxu0 0.0
      %1344 = vmatprep.subr.mxu0 0.0
      %1345 = vmatpush2.msra.mxu0 0.0
      %1346 = vmatprep.subr.mxu0 0.0
      %1347 = vmatpush2.msra.mxu0 0.0
      %1348 = vmatprep.subr.mxu0 0.0
      %1349 = vmatpush2.msra.mxu0 0.0
      %1350 = vmatprep.subr.mxu0 0.0
      %1351 = vmatpush2.msra.mxu0 0.0
      %1352 = vmatprep.subr.mxu0 0.0
      %1353 = vmatpush2.msra.mxu0 0.0
      %1354 = vmatprep.subr.mxu0 0.0
      %1355 = vmatpush2.msra.mxu0 0.0
      %1356 = vmatprep.subr.mxu0 0.0
      %1357 = vmatpush2.msra.mxu0 0.0
      %1358 = vmatprep.subr.mxu0 0.0
      %1359 = vmatpush2.msra.mxu0 0.0
      %1360 = vmatprep.subr.mxu0 0.0
      %1361 = vmatpush2.msra.mxu0 0.0
      %1362 = vmatprep.subr.mxu0 0.0
      %1363 = vmatpush2.msra.mxu0 0.0
      %1364 = vmatprep.subr.mxu0 0.0
      %1365 = vmatpush2.msra.mxu0 0.0
      %1366 = vmatprep.subr.mxu0 0.0
      %1367 = vmatpush2.msra.mxu0 0.0
      %1368 = vmatprep.subr.mxu0 0.0
      %1369 = vmatpush2.msra.mxu0 0.0
      %1370 = vmatprep.subr.mxu0 0.0
      %1371 = vmatpush2.msra.mxu0 0.0
      %1372 = vmatprep.subr.mxu0 0.0
      %1373 = vmatpush2.msra.mxu0 0.0
      %1374 = vmatprep.mubr.f32.mxu0 0.0
      %v1375 = vand.u32 %v441, 4294901760
      %v1376 = vsub.f32 %v441, %v1375
      %v1377 = vand.u32 %v1376, 4294901760
      %v1378 = vsub.f32 %v1376, %v1377
      %v1379 = vand.u32 %v1378, 4294901760
      %1380 = vmatmul.mubr.f32.gmra.mxu0 %v1379
      %v1381 = vpop.f32.mrf.mxu0
      %v1382 = vadd.f32 0.0, %v1381
      %v1383 = vpop.f32.mrf.mxu0
      %1384 = vmatprep.mubr.f32.mxu0 0.0
      %v1385 = vand.u32 %v444, 4294901760
      %v1386 = vsub.f32 %v444, %v1385
      %v1387 = vand.u32 %v1386, 4294901760
      %v1388 = vsub.f32 %v1386, %v1387
      %v1389 = vand.u32 %v1388, 4294901760
      %1390 = vmatmul.mubr.f32.gmra.mxu0 %v1389
      %v1391 = vpop.f32.mrf.mxu0
      %v1392 = vadd.f32 0.0, %v1391
      %v1393 = vpop.f32.mrf.mxu0
      %1394 = vmatprep.mubr.f32.mxu0 0.0
      %v1395 = vand.u32 %v447, 4294901760
      %v1396 = vsub.f32 %v447, %v1395
      %v1397 = vand.u32 %v1396, 4294901760
      %v1398 = vsub.f32 %v1396, %v1397
      %v1399 = vand.u32 %v1398, 4294901760
      %1400 = vmatmul.mubr.f32.gmra.mxu0 %v1399
      %v1401 = vpop.f32.mrf.mxu0
      %v1402 = vadd.f32 0.0, %v1401
      %v1403 = vpop.f32.mrf.mxu0
      %1404 = vmatprep.mubr.f32.mxu0 0.0
      %v1405 = vand.u32 %v450, 4294901760
      %v1406 = vsub.f32 %v450, %v1405
      %v1407 = vand.u32 %v1406, 4294901760
      %v1408 = vsub.f32 %v1406, %v1407
      %v1409 = vand.u32 %v1408, 4294901760
      %1410 = vmatmul.mubr.f32.gmra.mxu0 %v1409
      %v1411 = vpop.f32.mrf.mxu0
      %v1412 = vadd.f32 0.0, %v1411
      %v1413 = vpop.f32.mrf.mxu0
      %1414 = vmatprep.mubr.f32.mxu0 0.0
      %v1415 = vand.u32 %v453, 4294901760
      %v1416 = vsub.f32 %v453, %v1415
      %v1417 = vand.u32 %v1416, 4294901760
      %v1418 = vsub.f32 %v1416, %v1417
      %v1419 = vand.u32 %v1418, 4294901760
      %1420 = vmatmul.mubr.f32.gmra.mxu0 %v1419
      %v1421 = vpop.f32.mrf.mxu0
      %v1422 = vadd.f32 0.0, %v1421
      %v1423 = vpop.f32.mrf.mxu0
      %1424 = vmatprep.mubr.f32.mxu0 0.0
      %v1425 = vand.u32 %v456, 4294901760
      %v1426 = vsub.f32 %v456, %v1425
      %v1427 = vand.u32 %v1426, 4294901760
      %v1428 = vsub.f32 %v1426, %v1427
      %v1429 = vand.u32 %v1428, 4294901760
      %1430 = vmatmul.mubr.f32.gmra.mxu0 %v1429
      %v1431 = vpop.f32.mrf.mxu0
      %v1432 = vadd.f32 0.0, %v1431
      %v1433 = vpop.f32.mrf.mxu0
      %1434 = vmatprep.mubr.f32.mxu0 0.0
      %v1435 = vand.u32 %v459, 4294901760
      %v1436 = vsub.f32 %v459, %v1435
      %v1437 = vand.u32 %v1436, 4294901760
      %v1438 = vsub.f32 %v1436, %v1437
      %v1439 = vand.u32 %v1438, 4294901760
      %1440 = vmatmul.mubr.f32.gmra.mxu0 %v1439
      %v1441 = vpop.f32.mrf.mxu0
      %v1442 = vadd.f32 0.0, %v1441
      %v1443 = vpop.f32.mrf.mxu0
      %1444 = vmatprep.mubr.f32.mxu0 0.0
      %v1445 = vand.u32 %v462, 4294901760
      %v1446 = vsub.f32 %v462, %v1445
      %v1447 = vand.u32 %v1446, 4294901760
      %v1448 = vsub.f32 %v1446, %v1447
      %v1449 = vand.u32 %v1448, 4294901760
      %1450 = vmatmul.mubr.f32.gmra.mxu0 %v1449
      %v1451 = vpop.f32.mrf.mxu0
      %v1452 = vadd.f32 0.0, %v1451
      %v1453 = vpop.f32.mrf.mxu0
      %1454 = vdwg.mxu0
      %1455 = vmatprep.subr.mxu0 0.0
      %1456 = vmatpush1.msra.mxu0 0.0
      %1457 = vmatprep.subr.mxu0 0.0
      %1458 = vmatpush1.msra.mxu0 0.0
      %1459 = vmatprep.subr.mxu0 0.0
      %1460 = vmatpush1.msra.mxu0 0.0
      %1461 = vmatprep.subr.mxu0 0.0
      %1462 = vmatpush1.msra.mxu0 0.0
      %1463 = vmatprep.subr.mxu0 0.0
      %1464 = vmatpush1.msra.mxu0 0.0
      %1465 = vmatprep.subr.mxu0 0.0
      %1466 = vmatpush1.msra.mxu0 0.0
      %1467 = vmatprep.subr.mxu0 0.0
      %1468 = vmatpush1.msra.mxu0 0.0
      %1469 = vmatprep.subr.mxu0 0.0
      %1470 = vmatpush1.msra.mxu0 0.0
      %1471 = vmatprep.subr.mxu0 0.0
      %v1472 = vand.u32 %v359, 4294901760
      %v1473 = vsub.f32 %v359, %v1472
      %v1474 = vand.u32 %v1473, 4294901760
      %v1475 = vsub.f32 %v1473, %v1474
      %v1476 = vand.u32 %v1475, 4294901760
      %1477 = vmatpush1.msra.mxu0 %v1476
      %1478 = vmatprep.subr.mxu0 0.0
      %v1479 = vand.u32 %v356, 4294901760
      %v1480 = vsub.f32 %v356, %v1479
      %v1481 = vand.u32 %v1480, 4294901760
      %v1482 = vsub.f32 %v1480, %v1481
      %v1483 = vand.u32 %v1482, 4294901760
      %1484 = vmatpush1.msra.mxu0 %v1483
      %1485 = vmatprep.subr.mxu0 0.0
      %v1486 = vand.u32 %v353, 4294901760
      %v1487 = vsub.f32 %v353, %v1486
      %v1488 = vand.u32 %v1487, 4294901760
      %v1489 = vsub.f32 %v1487, %v1488
      %v1490 = vand.u32 %v1489, 4294901760
      %1491 = vmatpush1.msra.mxu0 %v1490
      %1492 = vmatprep.subr.mxu0 0.0
      %v1493 = vand.u32 %v350, 4294901760
      %v1494 = vsub.f32 %v350, %v1493
      %v1495 = vand.u32 %v1494, 4294901760
      %v1496 = vsub.f32 %v1494, %v1495
      %v1497 = vand.u32 %v1496, 4294901760
      %1498 = vmatpush1.msra.mxu0 %v1497
      %1499 = vmatprep.subr.mxu0 0.0
      %v1500 = vand.u32 %v347, 4294901760
      %v1501 = vsub.f32 %v347, %v1500
      %v1502 = vand.u32 %v1501, 4294901760
      %v1503 = vsub.f32 %v1501, %v1502
      %v1504 = vand.u32 %v1503, 4294901760
      %1505 = vmatpush1.msra.mxu0 %v1504
      %1506 = vmatprep.subr.mxu0 0.0
      %v1507 = vand.u32 %v344, 4294901760
      %v1508 = vsub.f32 %v344, %v1507
      %v1509 = vand.u32 %v1508, 4294901760
      %v1510 = vsub.f32 %v1508, %v1509
      %v1511 = vand.u32 %v1510, 4294901760
      %1512 = vmatpush1.msra.mxu0 %v1511
      %1513 = vmatprep.subr.mxu0 0.0
      %v1514 = vand.u32 %v341, 4294901760
      %v1515 = vsub.f32 %v341, %v1514
      %v1516 = vand.u32 %v1515, 4294901760
      %v1517 = vsub.f32 %v1515, %v1516
      %v1518 = vand.u32 %v1517, 4294901760
      %1519 = vmatpush1.msra.mxu0 %v1518
      %1520 = vmatprep.subr.mxu0 0.0
      %v1521 = vand.u32 %v338, 4294901760
      %v1522 = vsub.f32 %v338, %v1521
      %v1523 = vand.u32 %v1522, 4294901760
      %v1524 = vsub.f32 %v1522, %v1523
      %v1525 = vand.u32 %v1524, 4294901760
      %1526 = vmatpush1.msra.mxu0 %v1525
      %1527 = vmatprep.subr.mxu0 0.0
      %1528 = vmatpush2.msra.mxu0 0.0
      %1529 = vmatprep.subr.mxu0 0.0
      %1530 = vmatpush2.msra.mxu0 0.0
      %1531 = vmatprep.subr.mxu0 0.0
      %1532 = vmatpush2.msra.mxu0 0.0
      %1533 = vmatprep.subr.mxu0 0.0
      %1534 = vmatpush2.msra.mxu0 0.0
      %1535 = vmatprep.subr.mxu0 0.0
      %1536 = vmatpush2.msra.mxu0 0.0
      %1537 = vmatprep.subr.mxu0 0.0
      %1538 = vmatpush2.msra.mxu0 0.0
      %1539 = vmatprep.subr.mxu0 0.0
      %1540 = vmatpush2.msra.mxu0 0.0
      %1541 = vmatprep.subr.mxu0 0.0
      %1542 = vmatpush2.msra.mxu0 0.0
      %1543 = vmatprep.subr.mxu0 0.0
      %1544 = vmatpush2.msra.mxu0 0.0
      %1545 = vmatprep.subr.mxu0 0.0
      %1546 = vmatpush2.msra.mxu0 0.0
      %1547 = vmatprep.subr.mxu0 0.0
      %1548 = vmatpush2.msra.mxu0 0.0
      %1549 = vmatprep.subr.mxu0 0.0
      %1550 = vmatpush2.msra.mxu0 0.0
      %1551 = vmatprep.subr.mxu0 0.0
      %1552 = vmatpush2.msra.mxu0 0.0
      %1553 = vmatprep.subr.mxu0 0.0
      %1554 = vmatpush2.msra.mxu0 0.0
      %1555 = vmatprep.subr.mxu0 0.0
      %1556 = vmatpush2.msra.mxu0 0.0
      %1557 = vmatprep.subr.mxu0 0.0
      %1558 = vmatpush2.msra.mxu0 0.0
      %1559 = vmatprep.mubr.f32.mxu0 0.0
      %v1560 = vand.u32 %v441, 4294901760
      %1561 = vmatmul.mubr.f32.gmra.mxu0 %v1560
      %v1562 = vpop.f32.mrf.mxu0
      %v1563 = vadd.f32 %v1382, %v1562
      %v1564 = vpop.f32.mrf.mxu0
      %1565 = vmatprep.mubr.f32.mxu0 0.0
      %v1566 = vand.u32 %v444, 4294901760
      %1567 = vmatmul.mubr.f32.gmra.mxu0 %v1566
      %v1568 = vpop.f32.mrf.mxu0
      %v1569 = vadd.f32 %v1392, %v1568
      %v1570 = vpop.f32.mrf.mxu0
      %1571 = vmatprep.mubr.f32.mxu0 0.0
      %v1572 = vand.u32 %v447, 4294901760
      %1573 = vmatmul.mubr.f32.gmra.mxu0 %v1572
      %v1574 = vpop.f32.mrf.mxu0
      %v1575 = vadd.f32 %v1402, %v1574
      %v1576 = vpop.f32.mrf.mxu0
      %1577 = vmatprep.mubr.f32.mxu0 0.0
      %v1578 = vand.u32 %v450, 4294901760
      %1579 = vmatmul.mubr.f32.gmra.mxu0 %v1578
      %v1580 = vpop.f32.mrf.mxu0
      %v1581 = vadd.f32 %v1412, %v1580
      %v1582 = vpop.f32.mrf.mxu0
      %1583 = vmatprep.mubr.f32.mxu0 0.0
      %v1584 = vand.u32 %v453, 4294901760
      %1585 = vmatmul.mubr.f32.gmra.mxu0 %v1584
      %v1586 = vpop.f32.mrf.mxu0
      %v1587 = vadd.f32 %v1422, %v1586
      %v1588 = vpop.f32.mrf.mxu0
      %1589 = vmatprep.mubr.f32.mxu0 0.0
      %v1590 = vand.u32 %v456, 4294901760
      %1591 = vmatmul.mubr.f32.gmra.mxu0 %v1590
      %v1592 = vpop.f32.mrf.mxu0
      %v1593 = vadd.f32 %v1432, %v1592
      %v1594 = vpop.f32.mrf.mxu0
      %1595 = vmatprep.mubr.f32.mxu0 0.0
      %v1596 = vand.u32 %v459, 4294901760
      %1597 = vmatmul.mubr.f32.gmra.mxu0 %v1596
      %v1598 = vpop.f32.mrf.mxu0
      %v1599 = vadd.f32 %v1442, %v1598
      %v1600 = vpop.f32.mrf.mxu0
      %1601 = vmatprep.mubr.f32.mxu0 0.0
      %v1602 = vand.u32 %v462, 4294901760
      %1603 = vmatmul.mubr.f32.gmra.mxu0 %v1602
      %v1604 = vpop.f32.mrf.mxu0
      %v1605 = vadd.f32 %v1452, %v1604
      %v1606 = vpop.f32.mrf.mxu0
      %1607 = vdwg.mxu0
      %1608 = vmatprep.subr.mxu0 0.0
      %1609 = vmatpush1.msra.mxu0 0.0
      %1610 = vmatprep.subr.mxu0 0.0
      %1611 = vmatpush1.msra.mxu0 0.0
      %1612 = vmatprep.subr.mxu0 0.0
      %1613 = vmatpush1.msra.mxu0 0.0
      %1614 = vmatprep.subr.mxu0 0.0
      %1615 = vmatpush1.msra.mxu0 0.0
      %1616 = vmatprep.subr.mxu0 0.0
      %1617 = vmatpush1.msra.mxu0 0.0
      %1618 = vmatprep.subr.mxu0 0.0
      %1619 = vmatpush1.msra.mxu0 0.0
      %1620 = vmatprep.subr.mxu0 0.0
      %1621 = vmatpush1.msra.mxu0 0.0
      %1622 = vmatprep.subr.mxu0 0.0
      %1623 = vmatpush1.msra.mxu0 0.0
      %1624 = vmatprep.subr.mxu0 0.0
      %v1625 = vand.u32 %v359, 4294901760
      %v1626 = vsub.f32 %v359, %v1625
      %1627 = vmatpush1.msra.mxu0 %v1626
      %1628 = vmatprep.subr.mxu0 0.0
      %v1629 = vand.u32 %v356, 4294901760
      %v1630 = vsub.f32 %v356, %v1629
      %1631 = vmatpush1.msra.mxu0 %v1630
      %1632 = vmatprep.subr.mxu0 0.0
      %v1633 = vand.u32 %v353, 4294901760
      %v1634 = vsub.f32 %v353, %v1633
      %1635 = vmatpush1.msra.mxu0 %v1634
      %1636 = vmatprep.subr.mxu0 0.0
      %v1637 = vand.u32 %v350, 4294901760
      %v1638 = vsub.f32 %v350, %v1637
      %1639 = vmatpush1.msra.mxu0 %v1638
      %1640 = vmatprep.subr.mxu0 0.0
      %v1641 = vand.u32 %v347, 4294901760
      %v1642 = vsub.f32 %v347, %v1641
      %1643 = vmatpush1.msra.mxu0 %v1642
      %1644 = vmatprep.subr.mxu0 0.0
      %v1645 = vand.u32 %v344, 4294901760
      %v1646 = vsub.f32 %v344, %v1645
      %1647 = vmatpush1.msra.mxu0 %v1646
      %1648 = vmatprep.subr.mxu0 0.0
      %v1649 = vand.u32 %v341, 4294901760
      %v1650 = vsub.f32 %v341, %v1649
      %1651 = vmatpush1.msra.mxu0 %v1650
      %1652 = vmatprep.subr.mxu0 0.0
      %v1653 = vand.u32 %v338, 4294901760
      %v1654 = vsub.f32 %v338, %v1653
      %1655 = vmatpush1.msra.mxu0 %v1654
      %1656 = vmatprep.subr.mxu0 0.0
      %1657 = vmatpush2.msra.mxu0 0.0
      %1658 = vmatprep.subr.mxu0 0.0
      %1659 = vmatpush2.msra.mxu0 0.0
      %1660 = vmatprep.subr.mxu0 0.0
      %1661 = vmatpush2.msra.mxu0 0.0
      %1662 = vmatprep.subr.mxu0 0.0
      %1663 = vmatpush2.msra.mxu0 0.0
      %1664 = vmatprep.subr.mxu0 0.0
      %1665 = vmatpush2.msra.mxu0 0.0
      %1666 = vmatprep.subr.mxu0 0.0
      %1667 = vmatpush2.msra.mxu0 0.0
      %1668 = vmatprep.subr.mxu0 0.0
      %1669 = vmatpush2.msra.mxu0 0.0
      %1670 = vmatprep.subr.mxu0 0.0
      %1671 = vmatpush2.msra.mxu0 0.0
      %1672 = vmatprep.subr.mxu0 0.0
      %1673 = vmatpush2.msra.mxu0 0.0
      %1674 = vmatprep.subr.mxu0 0.0
      %1675 = vmatpush2.msra.mxu0 0.0
      %1676 = vmatprep.subr.mxu0 0.0
      %1677 = vmatpush2.msra.mxu0 0.0
      %1678 = vmatprep.subr.mxu0 0.0
      %1679 = vmatpush2.msra.mxu0 0.0
      %1680 = vmatprep.subr.mxu0 0.0
      %1681 = vmatpush2.msra.mxu0 0.0
      %1682 = vmatprep.subr.mxu0 0.0
      %1683 = vmatpush2.msra.mxu0 0.0
      %1684 = vmatprep.subr.mxu0 0.0
      %1685 = vmatpush2.msra.mxu0 0.0
      %1686 = vmatprep.subr.mxu0 0.0
      %1687 = vmatpush2.msra.mxu0 0.0
      %1688 = vmatprep.mubr.f32.mxu0 0.0
      %v1689 = vand.u32 %v441, 4294901760
      %v1690 = vsub.f32 %v441, %v1689
      %1691 = vmatmul.mubr.f32.gmra.mxu0 %v1690
      %v1692 = vpop.f32.mrf.mxu0
      %v1693 = vadd.f32 %v1563, %v1692
      %v1694 = vpop.f32.mrf.mxu0
      %1695 = vmatprep.mubr.f32.mxu0 0.0
      %v1696 = vand.u32 %v444, 4294901760
      %v1697 = vsub.f32 %v444, %v1696
      %1698 = vmatmul.mubr.f32.gmra.mxu0 %v1697
      %v1699 = vpop.f32.mrf.mxu0
      %v1700 = vadd.f32 %v1569, %v1699
      %v1701 = vpop.f32.mrf.mxu0
      %1702 = vmatprep.mubr.f32.mxu0 0.0
      %v1703 = vand.u32 %v447, 4294901760
      %v1704 = vsub.f32 %v447, %v1703
      %1705 = vmatmul.mubr.f32.gmra.mxu0 %v1704
      %v1706 = vpop.f32.mrf.mxu0
      %v1707 = vadd.f32 %v1575, %v1706
      %v1708 = vpop.f32.mrf.mxu0
      %1709 = vmatprep.mubr.f32.mxu0 0.0
      %v1710 = vand.u32 %v450, 4294901760
      %v1711 = vsub.f32 %v450, %v1710
      %1712 = vmatmul.mubr.f32.gmra.mxu0 %v1711
      %v1713 = vpop.f32.mrf.mxu0
      %v1714 = vadd.f32 %v1581, %v1713
      %v1715 = vpop.f32.mrf.mxu0
      %1716 = vmatprep.mubr.f32.mxu0 0.0
      %v1717 = vand.u32 %v453, 4294901760
      %v1718 = vsub.f32 %v453, %v1717
      %1719 = vmatmul.mubr.f32.gmra.mxu0 %v1718
      %v1720 = vpop.f32.mrf.mxu0
      %v1721 = vadd.f32 %v1587, %v1720
      %v1722 = vpop.f32.mrf.mxu0
      %1723 = vmatprep.mubr.f32.mxu0 0.0
      %v1724 = vand.u32 %v456, 4294901760
      %v1725 = vsub.f32 %v456, %v1724
      %1726 = vmatmul.mubr.f32.gmra.mxu0 %v1725
      %v1727 = vpop.f32.mrf.mxu0
      %v1728 = vadd.f32 %v1593, %v1727
      %v1729 = vpop.f32.mrf.mxu0
      %1730 = vmatprep.mubr.f32.mxu0 0.0
      %v1731 = vand.u32 %v459, 4294901760
      %v1732 = vsub.f32 %v459, %v1731
      %1733 = vmatmul.mubr.f32.gmra.mxu0 %v1732
      %v1734 = vpop.f32.mrf.mxu0
      %v1735 = vadd.f32 %v1599, %v1734
      %v1736 = vpop.f32.mrf.mxu0
      %1737 = vmatprep.mubr.f32.mxu0 0.0
      %v1738 = vand.u32 %v462, 4294901760
      %v1739 = vsub.f32 %v462, %v1738
      %1740 = vmatmul.mubr.f32.gmra.mxu0 %v1739
      %v1741 = vpop.f32.mrf.mxu0
      %v1742 = vadd.f32 %v1605, %v1741
      %v1743 = vpop.f32.mrf.mxu0
      %1744 = vdwg.mxu0
      %1745 = vmatprep.subr.mxu0 0.0
      %1746 = vmatpush1.msra.mxu0 0.0
      %1747 = vmatprep.subr.mxu0 0.0
      %1748 = vmatpush1.msra.mxu0 0.0
      %1749 = vmatprep.subr.mxu0 0.0
      %1750 = vmatpush1.msra.mxu0 0.0
      %1751 = vmatprep.subr.mxu0 0.0
      %1752 = vmatpush1.msra.mxu0 0.0
      %1753 = vmatprep.subr.mxu0 0.0
      %1754 = vmatpush1.msra.mxu0 0.0
      %1755 = vmatprep.subr.mxu0 0.0
      %1756 = vmatpush1.msra.mxu0 0.0
      %1757 = vmatprep.subr.mxu0 0.0
      %1758 = vmatpush1.msra.mxu0 0.0
      %1759 = vmatprep.subr.mxu0 0.0
      %1760 = vmatpush1.msra.mxu0 0.0
      %1761 = vmatprep.subr.mxu0 0.0
      %v1762 = vand.u32 %v359, 4294901760
      %1763 = vmatpush1.msra.mxu0 %v1762
      %1764 = vmatprep.subr.mxu0 0.0
      %v1765 = vand.u32 %v356, 4294901760
      %1766 = vmatpush1.msra.mxu0 %v1765
      %1767 = vmatprep.subr.mxu0 0.0
      %v1768 = vand.u32 %v353, 4294901760
      %1769 = vmatpush1.msra.mxu0 %v1768
      %1770 = vmatprep.subr.mxu0 0.0
      %v1771 = vand.u32 %v350, 4294901760
      %1772 = vmatpush1.msra.mxu0 %v1771
      %1773 = vmatprep.subr.mxu0 0.0
      %v1774 = vand.u32 %v347, 4294901760
      %1775 = vmatpush1.msra.mxu0 %v1774
      %1776 = vmatprep.subr.mxu0 0.0
      %v1777 = vand.u32 %v344, 4294901760
      %1778 = vmatpush1.msra.mxu0 %v1777
      %1779 = vmatprep.subr.mxu0 0.0
      %v1780 = vand.u32 %v341, 4294901760
      %1781 = vmatpush1.msra.mxu0 %v1780
      %1782 = vmatprep.subr.mxu0 0.0
      %v1783 = vand.u32 %v338, 4294901760
      %1784 = vmatpush1.msra.mxu0 %v1783
      %1785 = vmatprep.subr.mxu0 0.0
      %1786 = vmatpush2.msra.mxu0 0.0
      %1787 = vmatprep.subr.mxu0 0.0
      %1788 = vmatpush2.msra.mxu0 0.0
      %1789 = vmatprep.subr.mxu0 0.0
      %1790 = vmatpush2.msra.mxu0 0.0
      %1791 = vmatprep.subr.mxu0 0.0
      %1792 = vmatpush2.msra.mxu0 0.0
      %1793 = vmatprep.subr.mxu0 0.0
      %1794 = vmatpush2.msra.mxu0 0.0
      %1795 = vmatprep.subr.mxu0 0.0
      %1796 = vmatpush2.msra.mxu0 0.0
      %1797 = vmatprep.subr.mxu0 0.0
      %1798 = vmatpush2.msra.mxu0 0.0
      %1799 = vmatprep.subr.mxu0 0.0
      %1800 = vmatpush2.msra.mxu0 0.0
      %1801 = vmatprep.subr.mxu0 0.0
      %1802 = vmatpush2.msra.mxu0 0.0
      %1803 = vmatprep.subr.mxu0 0.0
      %1804 = vmatpush2.msra.mxu0 0.0
      %1805 = vmatprep.subr.mxu0 0.0
      %1806 = vmatpush2.msra.mxu0 0.0
      %1807 = vmatprep.subr.mxu0 0.0
      %1808 = vmatpush2.msra.mxu0 0.0
      %1809 = vmatprep.subr.mxu0 0.0
      %1810 = vmatpush2.msra.mxu0 0.0
      %1811 = vmatprep.subr.mxu0 0.0
      %1812 = vmatpush2.msra.mxu0 0.0
      %1813 = vmatprep.subr.mxu0 0.0
      %1814 = vmatpush2.msra.mxu0 0.0
      %1815 = vmatprep.subr.mxu0 0.0
      %1816 = vmatpush2.msra.mxu0 0.0
      %1817 = vmatprep.mubr.f32.mxu0 0.0
      %v1818 = vand.u32 %v441, 4294901760
      %v1819 = vsub.f32 %v441, %v1818
      %v1820 = vand.u32 %v1819, 4294901760
      %1821 = vmatmul.mubr.f32.gmra.mxu0 %v1820
      %v1822 = vpop.f32.mrf.mxu0
      %v1823 = vadd.f32 %v1693, %v1822
      %v1824 = vpop.f32.mrf.mxu0
      %1825 = vmatprep.mubr.f32.mxu0 0.0
      %v1826 = vand.u32 %v444, 4294901760
      %v1827 = vsub.f32 %v444, %v1826
      %v1828 = vand.u32 %v1827, 4294901760
      %1829 = vmatmul.mubr.f32.gmra.mxu0 %v1828
      %v1830 = vpop.f32.mrf.mxu0
      %v1831 = vadd.f32 %v1700, %v1830
      %v1832 = vpop.f32.mrf.mxu0
      %1833 = vmatprep.mubr.f32.mxu0 0.0
      %v1834 = vand.u32 %v447, 4294901760
      %v1835 = vsub.f32 %v447, %v1834
      %v1836 = vand.u32 %v1835, 4294901760
      %1837 = vmatmul.mubr.f32.gmra.mxu0 %v1836
      %v1838 = vpop.f32.mrf.mxu0
      %v1839 = vadd.f32 %v1707, %v1838
      %v1840 = vpop.f32.mrf.mxu0
      %1841 = vmatprep.mubr.f32.mxu0 0.0
      %v1842 = vand.u32 %v450, 4294901760
      %v1843 = vsub.f32 %v450, %v1842
      %v1844 = vand.u32 %v1843, 4294901760
      %1845 = vmatmul.mubr.f32.gmra.mxu0 %v1844
      %v1846 = vpop.f32.mrf.mxu0
      %v1847 = vadd.f32 %v1714, %v1846
      %v1848 = vpop.f32.mrf.mxu0
      %1849 = vmatprep.mubr.f32.mxu0 0.0
      %v1850 = vand.u32 %v453, 4294901760
      %v1851 = vsub.f32 %v453, %v1850
      %v1852 = vand.u32 %v1851, 4294901760
      %1853 = vmatmul.mubr.f32.gmra.mxu0 %v1852
      %v1854 = vpop.f32.mrf.mxu0
      %v1855 = vadd.f32 %v1721, %v1854
      %v1856 = vpop.f32.mrf.mxu0
      %1857 = vmatprep.mubr.f32.mxu0 0.0
      %v1858 = vand.u32 %v456, 4294901760
      %v1859 = vsub.f32 %v456, %v1858
      %v1860 = vand.u32 %v1859, 4294901760
      %1861 = vmatmul.mubr.f32.gmra.mxu0 %v1860
      %v1862 = vpop.f32.mrf.mxu0
      %v1863 = vadd.f32 %v1728, %v1862
      %v1864 = vpop.f32.mrf.mxu0
      %1865 = vmatprep.mubr.f32.mxu0 0.0
      %v1866 = vand.u32 %v459, 4294901760
      %v1867 = vsub.f32 %v459, %v1866
      %v1868 = vand.u32 %v1867, 4294901760
      %1869 = vmatmul.mubr.f32.gmra.mxu0 %v1868
      %v1870 = vpop.f32.mrf.mxu0
      %v1871 = vadd.f32 %v1735, %v1870
      %v1872 = vpop.f32.mrf.mxu0
      %1873 = vmatprep.mubr.f32.mxu0 0.0
      %v1874 = vand.u32 %v462, 4294901760
      %v1875 = vsub.f32 %v462, %v1874
      %v1876 = vand.u32 %v1875, 4294901760
      %1877 = vmatmul.mubr.f32.gmra.mxu0 %v1876
      %v1878 = vpop.f32.mrf.mxu0
      %v1879 = vadd.f32 %v1742, %v1878
      %v1880 = vpop.f32.mrf.mxu0
      %1881 = vdwg.mxu0
      %1882 = vmatprep.subr.mxu0 0.0
      %1883 = vmatpush1.msra.mxu0 0.0
      %1884 = vmatprep.subr.mxu0 0.0
      %1885 = vmatpush1.msra.mxu0 0.0
      %1886 = vmatprep.subr.mxu0 0.0
      %1887 = vmatpush1.msra.mxu0 0.0
      %1888 = vmatprep.subr.mxu0 0.0
      %1889 = vmatpush1.msra.mxu0 0.0
      %1890 = vmatprep.subr.mxu0 0.0
      %1891 = vmatpush1.msra.mxu0 0.0
      %1892 = vmatprep.subr.mxu0 0.0
      %1893 = vmatpush1.msra.mxu0 0.0
      %1894 = vmatprep.subr.mxu0 0.0
      %1895 = vmatpush1.msra.mxu0 0.0
      %1896 = vmatprep.subr.mxu0 0.0
      %1897 = vmatpush1.msra.mxu0 0.0
      %1898 = vmatprep.subr.mxu0 0.0
      %v1899 = vand.u32 %v359, 4294901760
      %v1900 = vsub.f32 %v359, %v1899
      %v1901 = vand.u32 %v1900, 4294901760
      %1902 = vmatpush1.msra.mxu0 %v1901
      %1903 = vmatprep.subr.mxu0 0.0
      %v1904 = vand.u32 %v356, 4294901760
      %v1905 = vsub.f32 %v356, %v1904
      %v1906 = vand.u32 %v1905, 4294901760
      %1907 = vmatpush1.msra.mxu0 %v1906
      %1908 = vmatprep.subr.mxu0 0.0
      %v1909 = vand.u32 %v353, 4294901760
      %v1910 = vsub.f32 %v353, %v1909
      %v1911 = vand.u32 %v1910, 4294901760
      %1912 = vmatpush1.msra.mxu0 %v1911
      %1913 = vmatprep.subr.mxu0 0.0
      %v1914 = vand.u32 %v350, 4294901760
      %v1915 = vsub.f32 %v350, %v1914
      %v1916 = vand.u32 %v1915, 4294901760
      %1917 = vmatpush1.msra.mxu0 %v1916
      %1918 = vmatprep.subr.mxu0 0.0
      %v1919 = vand.u32 %v347, 4294901760
      %v1920 = vsub.f32 %v347, %v1919
      %v1921 = vand.u32 %v1920, 4294901760
      %1922 = vmatpush1.msra.mxu0 %v1921
      %1923 = vmatprep.subr.mxu0 0.0
      %v1924 = vand.u32 %v344, 4294901760
      %v1925 = vsub.f32 %v344, %v1924
      %v1926 = vand.u32 %v1925, 4294901760
      %1927 = vmatpush1.msra.mxu0 %v1926
      %1928 = vmatprep.subr.mxu0 0.0
      %v1929 = vand.u32 %v341, 4294901760
      %v1930 = vsub.f32 %v341, %v1929
      %v1931 = vand.u32 %v1930, 4294901760
      %1932 = vmatpush1.msra.mxu0 %v1931
      %1933 = vmatprep.subr.mxu0 0.0
      %v1934 = vand.u32 %v338, 4294901760
      %v1935 = vsub.f32 %v338, %v1934
      %v1936 = vand.u32 %v1935, 4294901760
      %1937 = vmatpush1.msra.mxu0 %v1936
      %1938 = vmatprep.subr.mxu0 0.0
      %1939 = vmatpush2.msra.mxu0 0.0
      %1940 = vmatprep.subr.mxu0 0.0
      %1941 = vmatpush2.msra.mxu0 0.0
      %1942 = vmatprep.subr.mxu0 0.0
      %1943 = vmatpush2.msra.mxu0 0.0
      %1944 = vmatprep.subr.mxu0 0.0
      %1945 = vmatpush2.msra.mxu0 0.0
      %1946 = vmatprep.subr.mxu0 0.0
      %1947 = vmatpush2.msra.mxu0 0.0
      %1948 = vmatprep.subr.mxu0 0.0
      %1949 = vmatpush2.msra.mxu0 0.0
      %1950 = vmatprep.subr.mxu0 0.0
      %1951 = vmatpush2.msra.mxu0 0.0
      %1952 = vmatprep.subr.mxu0 0.0
      %1953 = vmatpush2.msra.mxu0 0.0
      %1954 = vmatprep.subr.mxu0 0.0
      %1955 = vmatpush2.msra.mxu0 0.0
      %1956 = vmatprep.subr.mxu0 0.0
      %1957 = vmatpush2.msra.mxu0 0.0
      %1958 = vmatprep.subr.mxu0 0.0
      %1959 = vmatpush2.msra.mxu0 0.0
      %1960 = vmatprep.subr.mxu0 0.0
      %1961 = vmatpush2.msra.mxu0 0.0
      %1962 = vmatprep.subr.mxu0 0.0
      %1963 = vmatpush2.msra.mxu0 0.0
      %1964 = vmatprep.subr.mxu0 0.0
      %1965 = vmatpush2.msra.mxu0 0.0
      %1966 = vmatprep.subr.mxu0 0.0
      %1967 = vmatpush2.msra.mxu0 0.0
      %1968 = vmatprep.subr.mxu0 0.0
      %1969 = vmatpush2.msra.mxu0 0.0
      %1970 = vmatprep.mubr.f32.mxu0 0.0
      %v1971 = vand.u32 %v441, 4294901760
      %1972 = vmatmul.mubr.f32.gmra.mxu0 %v1971
      %v1973 = vpop.f32.mrf.mxu0
      %v1974 = vadd.f32 %v1823, %v1973
      %v1975 = vpop.f32.mrf.mxu0
      %1976 = vmatprep.mubr.f32.mxu0 0.0
      %v1977 = vand.u32 %v444, 4294901760
      %1978 = vmatmul.mubr.f32.gmra.mxu0 %v1977
      %v1979 = vpop.f32.mrf.mxu0
      %v1980 = vadd.f32 %v1831, %v1979
      %v1981 = vpop.f32.mrf.mxu0
      %1982 = vmatprep.mubr.f32.mxu0 0.0
      %v1983 = vand.u32 %v447, 4294901760
      %1984 = vmatmul.mubr.f32.gmra.mxu0 %v1983
      %v1985 = vpop.f32.mrf.mxu0
      %v1986 = vadd.f32 %v1839, %v1985
      %v1987 = vpop.f32.mrf.mxu0
      %1988 = vmatprep.mubr.f32.mxu0 0.0
      %v1989 = vand.u32 %v450, 4294901760
      %1990 = vmatmul.mubr.f32.gmra.mxu0 %v1989
      %v1991 = vpop.f32.mrf.mxu0
      %v1992 = vadd.f32 %v1847, %v1991
      %v1993 = vpop.f32.mrf.mxu0
      %1994 = vmatprep.mubr.f32.mxu0 0.0
      %v1995 = vand.u32 %v453, 4294901760
      %1996 = vmatmul.mubr.f32.gmra.mxu0 %v1995
      %v1997 = vpop.f32.mrf.mxu0
      %v1998 = vadd.f32 %v1855, %v1997
      %v1999 = vpop.f32.mrf.mxu0
      %2000 = vmatprep.mubr.f32.mxu0 0.0
      %v2001 = vand.u32 %v456, 4294901760
      %2002 = vmatmul.mubr.f32.gmra.mxu0 %v2001
      %v2003 = vpop.f32.mrf.mxu0
      %v2004 = vadd.f32 %v1863, %v2003
      %v2005 = vpop.f32.mrf.mxu0
      %2006 = vmatprep.mubr.f32.mxu0 0.0
      %v2007 = vand.u32 %v459, 4294901760
      %2008 = vmatmul.mubr.f32.gmra.mxu0 %v2007
      %v2009 = vpop.f32.mrf.mxu0
      %v2010 = vadd.f32 %v1871, %v2009
      %v2011 = vpop.f32.mrf.mxu0
      %2012 = vmatprep.mubr.f32.mxu0 0.0
      %v2013 = vand.u32 %v462, 4294901760
      %2014 = vmatmul.mubr.f32.gmra.mxu0 %v2013
      %v2015 = vpop.f32.mrf.mxu0
      %v2016 = vadd.f32 %v1879, %v2015
      %v2017 = vpop.f32.mrf.mxu0
      %2018 = vdwg.mxu0
      %2019 = vmatprep.subr.mxu0 0.0
      %2020 = vmatpush1.msra.mxu0 0.0
      %2021 = vmatprep.subr.mxu0 0.0
      %2022 = vmatpush1.msra.mxu0 0.0
      %2023 = vmatprep.subr.mxu0 0.0
      %2024 = vmatpush1.msra.mxu0 0.0
      %2025 = vmatprep.subr.mxu0 0.0
      %2026 = vmatpush1.msra.mxu0 0.0
      %2027 = vmatprep.subr.mxu0 0.0
      %2028 = vmatpush1.msra.mxu0 0.0
      %2029 = vmatprep.subr.mxu0 0.0
      %2030 = vmatpush1.msra.mxu0 0.0
      %2031 = vmatprep.subr.mxu0 0.0
      %2032 = vmatpush1.msra.mxu0 0.0
      %2033 = vmatprep.subr.mxu0 0.0
      %2034 = vmatpush1.msra.mxu0 0.0
      %2035 = vmatprep.subr.mxu0 0.0
      %v2036 = vand.u32 %v359, 4294901760
      %2037 = vmatpush1.msra.mxu0 %v2036
      %2038 = vmatprep.subr.mxu0 0.0
      %v2039 = vand.u32 %v356, 4294901760
      %2040 = vmatpush1.msra.mxu0 %v2039
      %2041 = vmatprep.subr.mxu0 0.0
      %v2042 = vand.u32 %v353, 4294901760
      %2043 = vmatpush1.msra.mxu0 %v2042
      %2044 = vmatprep.subr.mxu0 0.0
      %v2045 = vand.u32 %v350, 4294901760
      %2046 = vmatpush1.msra.mxu0 %v2045
      %2047 = vmatprep.subr.mxu0 0.0
      %v2048 = vand.u32 %v347, 4294901760
      %2049 = vmatpush1.msra.mxu0 %v2048
      %2050 = vmatprep.subr.mxu0 0.0
      %v2051 = vand.u32 %v344, 4294901760
      %2052 = vmatpush1.msra.mxu0 %v2051
      %2053 = vmatprep.subr.mxu0 0.0
      %v2054 = vand.u32 %v341, 4294901760
      %2055 = vmatpush1.msra.mxu0 %v2054
      %2056 = vmatprep.subr.mxu0 0.0
      %v2057 = vand.u32 %v338, 4294901760
      %2058 = vmatpush1.msra.mxu0 %v2057
      %2059 = vmatprep.subr.mxu0 0.0
      %2060 = vmatpush2.msra.mxu0 0.0
      %2061 = vmatprep.subr.mxu0 0.0
      %2062 = vmatpush2.msra.mxu0 0.0
      %2063 = vmatprep.subr.mxu0 0.0
      %2064 = vmatpush2.msra.mxu0 0.0
      %2065 = vmatprep.subr.mxu0 0.0
      %2066 = vmatpush2.msra.mxu0 0.0
      %2067 = vmatprep.subr.mxu0 0.0
      %2068 = vmatpush2.msra.mxu0 0.0
      %2069 = vmatprep.subr.mxu0 0.0
      %2070 = vmatpush2.msra.mxu0 0.0
      %2071 = vmatprep.subr.mxu0 0.0
      %2072 = vmatpush2.msra.mxu0 0.0
      %2073 = vmatprep.subr.mxu0 0.0
      %2074 = vmatpush2.msra.mxu0 0.0
      %2075 = vmatprep.subr.mxu0 0.0
      %2076 = vmatpush2.msra.mxu0 0.0
      %2077 = vmatprep.subr.mxu0 0.0
      %2078 = vmatpush2.msra.mxu0 0.0
      %2079 = vmatprep.subr.mxu0 0.0
      %2080 = vmatpush2.msra.mxu0 0.0
      %2081 = vmatprep.subr.mxu0 0.0
      %2082 = vmatpush2.msra.mxu0 0.0
      %2083 = vmatprep.subr.mxu0 0.0
      %2084 = vmatpush2.msra.mxu0 0.0
      %2085 = vmatprep.subr.mxu0 0.0
      %2086 = vmatpush2.msra.mxu0 0.0
      %2087 = vmatprep.subr.mxu0 0.0
      %2088 = vmatpush2.msra.mxu0 0.0
      %2089 = vmatprep.subr.mxu0 0.0
      %2090 = vmatpush2.msra.mxu0 0.0
      %2091 = vmatprep.mubr.f32.mxu0 0.0
      %v2092 = vand.u32 %v441, 4294901760
      %2093 = vmatmul.mubr.f32.gmra.mxu0 %v2092
      %v2094 = vpop.f32.mrf.mxu0
      %v2095 = vadd.f32 %v1974, %v2094
      %v2096 = vpop.f32.mrf.mxu0
      %2097 = vmatprep.mubr.f32.mxu0 0.0
      %v2098 = vand.u32 %v444, 4294901760
      %2099 = vmatmul.mubr.f32.gmra.mxu0 %v2098
      %v2100 = vpop.f32.mrf.mxu0
      %v2101 = vadd.f32 %v1980, %v2100
      %v2102 = vpop.f32.mrf.mxu0
      %2103 = vmatprep.mubr.f32.mxu0 0.0
      %v2104 = vand.u32 %v447, 4294901760
      %2105 = vmatmul.mubr.f32.gmra.mxu0 %v2104
      %v2106 = vpop.f32.mrf.mxu0
      %v2107 = vadd.f32 %v1986, %v2106
      %v2108 = vpop.f32.mrf.mxu0
      %2109 = vmatprep.mubr.f32.mxu0 0.0
      %v2110 = vand.u32 %v450, 4294901760
      %2111 = vmatmul.mubr.f32.gmra.mxu0 %v2110
      %v2112 = vpop.f32.mrf.mxu0
      %v2113 = vadd.f32 %v1992, %v2112
      %v2114 = vpop.f32.mrf.mxu0
      %2115 = vmatprep.mubr.f32.mxu0 0.0
      %v2116 = vand.u32 %v453, 4294901760
      %2117 = vmatmul.mubr.f32.gmra.mxu0 %v2116
      %v2118 = vpop.f32.mrf.mxu0
      %v2119 = vadd.f32 %v1998, %v2118
      %v2120 = vpop.f32.mrf.mxu0
      %2121 = vmatprep.mubr.f32.mxu0 0.0
      %v2122 = vand.u32 %v456, 4294901760
      %2123 = vmatmul.mubr.f32.gmra.mxu0 %v2122
      %v2124 = vpop.f32.mrf.mxu0
      %v2125 = vadd.f32 %v2004, %v2124
      %v2126 = vpop.f32.mrf.mxu0
      %2127 = vmatprep.mubr.f32.mxu0 0.0
      %v2128 = vand.u32 %v459, 4294901760
      %2129 = vmatmul.mubr.f32.gmra.mxu0 %v2128
      %v2130 = vpop.f32.mrf.mxu0
      %v2131 = vadd.f32 %v2010, %v2130
      %v2132 = vpop.f32.mrf.mxu0
      %2133 = vmatprep.mubr.f32.mxu0 0.0
      %v2134 = vand.u32 %v462, 4294901760
      %2135 = vmatmul.mubr.f32.gmra.mxu0 %v2134
      %v2136 = vpop.f32.mrf.mxu0
      %v2137 = vadd.f32 %v2016, %v2136
      %v2138 = vpop.f32.mrf.mxu0
      %2139 = vdwg.mxu0
      %v2140 = vmul.f32 %v1257, 0.001953125
      %v2141 = vmul.f32 %v1263, 0.001953125
      %v2142 = vmul.f32 %v1269, 0.001953125
      %v2143 = vmul.f32 %v1275, 0.001953125
      %v2144 = vmul.f32 %v1281, 0.001953125
      %v2145 = vmul.f32 %v1287, 0.001953125
      %v2146 = vmul.f32 %v1293, 0.001953125
      %v2147 = vmul.f32 %v1299, 0.001953125
      %v2148 = vmul.f32 %v2095, 0.001953125
      %v2149 = vmul.f32 %v2101, 0.001953125
      %v2150 = vmul.f32 %v2107, 0.001953125
      %v2151 = vmul.f32 %v2113, 0.001953125
      %v2152 = vmul.f32 %v2119, 0.001953125
      %v2153 = vmul.f32 %v2125, 0.001953125
      %v2154 = vmul.f32 %v2131, 0.001953125
      %v2155 = vmul.f32 %v2137, 0.001953125
      %v2156 = vmul.f32 %v2140, %v2140
      %v2157 = vmul.f32 %v2141, %v2141
      %v2158 = vmul.f32 %v2142, %v2142
      %v2159 = vmul.f32 %v2143, %v2143
      %v2160 = vmul.f32 %v2144, %v2144
      %v2161 = vmul.f32 %v2145, %v2145
      %v2162 = vmul.f32 %v2146, %v2146
      %v2163 = vmul.f32 %v2147, %v2147
      %v2164 = vsub.f32 %v2148, %v2156
      %v2165 = vsub.f32 %v2149, %v2157
      %v2166 = vsub.f32 %v2150, %v2158
      %v2167 = vsub.f32 %v2151, %v2159
      %v2168 = vsub.f32 %v2152, %v2160
      %v2169 = vsub.f32 %v2153, %v2161
      %v2170 = vsub.f32 %v2154, %v2162
      %v2171 = vsub.f32 %v2155, %v2163
      %v2172 = vadd.f32 %v2164, 1e-05
      %v2173 = vadd.f32 %v2165, 1e-05
      %v2174 = vadd.f32 %v2166, 1e-05
      %v2175 = vadd.f32 %v2167, 1e-05
      %v2176 = vadd.f32 %v2168, 1e-05
      %v2177 = vadd.f32 %v2169, 1e-05
      %v2178 = vadd.f32 %v2170, 1e-05
      %v2179 = vadd.f32 %v2171, 1e-05
      %v2180 = vrsqrt.pop %v2172
      %v2181 = vrsqrt.pop %v2173
      %v2182 = vrsqrt.pop %v2174
      %v2183 = vrsqrt.pop %v2175
      %v2184 = vrsqrt.pop %v2176
      %v2185 = vrsqrt.pop %v2177
      %v2186 = vrsqrt.pop %v2178
      %v2187 = vrsqrt.pop %v2179
      %v2188 = vld [vmem:[%s1] sm:$0xff]
      %v2189 = vld [vmem:[%s1 + $0x8] sm:$0xff]
      %v2190 = vld [vmem:[%s1 + $0x10] sm:$0xff]
      %v2191 = vld [vmem:[%s1 + $0x18] sm:$0xff]
      %v2192 = vld [vmem:[%s1 + $0x20] sm:$0xff]
      %v2193 = vld [vmem:[%s1 + $0x28] sm:$0xff]
      %v2194 = vld [vmem:[%s1 + $0x30] sm:$0xff]
      %v2195 = vld [vmem:[%s1 + $0x38] sm:$0xff]
      %v2196 = vmul.f32 %v2180, %v2188
      %v2197 = vmul.f32 %v2181, %v2189
      %v2198 = vmul.f32 %v2182, %v2190
      %v2199 = vmul.f32 %v2183, %v2191
      %v2200 = vmul.f32 %v2184, %v2192
      %v2201 = vmul.f32 %v2185, %v2193
      %v2202 = vmul.f32 %v2186, %v2194
      %v2203 = vmul.f32 %v2187, %v2195
      %v2204 = vld [vmem:[%s2] sm:$0xff]
      %v2205 = vld [vmem:[%s2 + $0x8] sm:$0xff]
      %v2206 = vld [vmem:[%s2 + $0x10] sm:$0xff]
      %v2207 = vld [vmem:[%s2 + $0x18] sm:$0xff]
      %v2208 = vld [vmem:[%s2 + $0x20] sm:$0xff]
      %v2209 = vld [vmem:[%s2 + $0x28] sm:$0xff]
      %v2210 = vld [vmem:[%s2 + $0x30] sm:$0xff]
      %v2211 = vld [vmem:[%s2 + $0x38] sm:$0xff]
      %v2212 = vmul.f32 %v2140, %v2196
      %v2213 = vmul.f32 %v2141, %v2197
      %v2214 = vmul.f32 %v2142, %v2198
      %v2215 = vmul.f32 %v2143, %v2199
      %v2216 = vmul.f32 %v2144, %v2200
      %v2217 = vmul.f32 %v2145, %v2201
      %v2218 = vmul.f32 %v2146, %v2202
      %v2219 = vmul.f32 %v2147, %v2203
      %v2220 = vsub.f32 %v2204, %v2212
      %v2221 = vsub.f32 %v2205, %v2213
      %v2222 = vsub.f32 %v2206, %v2214
      %v2223 = vsub.f32 %v2207, %v2215
      %v2224 = vsub.f32 %v2208, %v2216
      %v2225 = vsub.f32 %v2209, %v2217
      %v2226 = vsub.f32 %v2210, %v2218
      %v2227 = vsub.f32 %v2211, %v2219
      %2229 = vset.pattern.permute.xlu0 0
      %2230 = vperm.xlu0 %2229, %v2196
      %v2231 = vpop.permute.xlu0 %2230
      %2234 = vset.pattern.permute.xlu0 0
      %2235 = vperm.xlu0 %2234, %v2197
      %v2236 = vpop.permute.xlu0 %2235
      %2239 = vset.pattern.permute.xlu0 0
      %2240 = vperm.xlu0 %2239, %v2198
      %v2241 = vpop.permute.xlu0 %2240
      %2244 = vset.pattern.permute.xlu0 0
      %2245 = vperm.xlu0 %2244, %v2199
      %v2246 = vpop.permute.xlu0 %2245
      %2249 = vset.pattern.permute.xlu0 0
      %2250 = vperm.xlu0 %2249, %v2200
      %v2251 = vpop.permute.xlu0 %2250
      %2254 = vset.pattern.permute.xlu0 0
      %2255 = vperm.xlu0 %2254, %v2201
      %v2256 = vpop.permute.xlu0 %2255
      %2259 = vset.pattern.permute.xlu0 0
      %2260 = vperm.xlu0 %2259, %v2202
      %v2261 = vpop.permute.xlu0 %2260
      %2264 = vset.pattern.permute.xlu0 0
      %2265 = vperm.xlu0 %2264, %v2203
      %v2266 = vpop.permute.xlu0 %2265
      %v2268 = vmul.f32 %v280, %v2231
      %v2269 = vmul.f32 %v281, %v2231
      %v2270 = vmul.f32 %v282, %v2236
      %v2271 = vmul.f32 %v283, %v2236
      %v2272 = vmul.f32 %v284, %v2241
      %v2273 = vmul.f32 %v285, %v2241
      %v2274 = vmul.f32 %v286, %v2246
      %v2275 = vmul.f32 %v287, %v2246
      %v2276 = vmul.f32 %v288, %v2251
      %v2277 = vmul.f32 %v289, %v2251
      %v2278 = vmul.f32 %v290, %v2256
      %v2279 = vmul.f32 %v291, %v2256
      %v2280 = vmul.f32 %v292, %v2261
      %v2281 = vmul.f32 %v293, %v2261
      %v2282 = vmul.f32 %v294, %v2266
      %v2283 = vmul.f32 %v295, %v2266
      %2285 = vset.pattern.permute.xlu0 0
      %2286 = vperm.xlu0 %2285, %v2220
      %v2287 = vpop.permute.xlu0 %2286
      %2290 = vset.pattern.permute.xlu0 0
      %2291 = vperm.xlu0 %2290, %v2221
      %v2292 = vpop.permute.xlu0 %2291
      %2295 = vset.pattern.permute.xlu0 0
      %2296 = vperm.xlu0 %2295, %v2222
      %v2297 = vpop.permute.xlu0 %2296
      %2300 = vset.pattern.permute.xlu0 0
      %2301 = vperm.xlu0 %2300, %v2223
      %v2302 = vpop.permute.xlu0 %2301
      %2305 = vset.pattern.permute.xlu0 0
      %2306 = vperm.xlu0 %2305, %v2224
      %v2307 = vpop.permute.xlu0 %2306
      %2310 = vset.pattern.permute.xlu0 0
      %2311 = vperm.xlu0 %2310, %v2225
      %v2312 = vpop.permute.xlu0 %2311
      %2315 = vset.pattern.permute.xlu0 0
      %2316 = vperm.xlu0 %2315, %v2226
      %v2317 = vpop.permute.xlu0 %2316
      %2320 = vset.pattern.permute.xlu0 0
      %2321 = vperm.xlu0 %2320, %v2227
      %v2322 = vpop.permute.xlu0 %2321
      %v2324 = vadd.f32 %v2268, %v2287
      %v2325 = vadd.f32 %v2269, %v2287
      %v2326 = vadd.f32 %v2270, %v2292
      %v2327 = vadd.f32 %v2271, %v2292
      %v2328 = vadd.f32 %v2272, %v2297
      %v2329 = vadd.f32 %v2273, %v2297
      %v2330 = vadd.f32 %v2274, %v2302
      %v2331 = vadd.f32 %v2275, %v2302
      %v2332 = vadd.f32 %v2276, %v2307
      %v2333 = vadd.f32 %v2277, %v2307
      %v2334 = vadd.f32 %v2278, %v2312
      %v2335 = vadd.f32 %v2279, %v2312
      %v2336 = vadd.f32 %v2280, %v2317
      %v2337 = vadd.f32 %v2281, %v2317
      %v2338 = vadd.f32 %v2282, %v2322
      %v2339 = vadd.f32 %v2283, %v2322
      %v2340 = vpack.c.bf16 %v2326, %v2324
      %v2341 = vpack.c.bf16 %v2327, %v2325
      %v2342 = vpack.c.bf16 %v2330, %v2328
      %v2343 = vpack.c.bf16 %v2331, %v2329
      %v2344 = vpack.c.bf16 %v2334, %v2332
      %v2345 = vpack.c.bf16 %v2335, %v2333
      %v2346 = vpack.c.bf16 %v2338, %v2336
      %v2347 = vpack.c.bf16 %v2339, %v2337
      %v2348 = vld [vmem:[%s5] sm:$0xf]
      %v2349 = vld [vmem:[%s5 + $0x4] sm:$0xf]
      %v2350 = vld [vmem:[%s5 + $0x8] sm:$0xf]
      %v2351 = vld [vmem:[%s5 + $0xc] sm:$0xf]
      %v2352 = vld [vmem:[%s5 + $0x10] sm:$0xf]
      %v2353 = vld [vmem:[%s5 + $0x14] sm:$0xf]
      %v2354 = vld [vmem:[%s5 + $0x18] sm:$0xf]
      %v2355 = vld [vmem:[%s5 + $0x1c] sm:$0xf]
      %v2356 = vld [vmem:[%s5 + $0x20] sm:$0xf]
      %v2357 = vld [vmem:[%s5 + $0x24] sm:$0xf]
      %v2358 = vld [vmem:[%s5 + $0x28] sm:$0xf]
      %v2359 = vld [vmem:[%s5 + $0x2c] sm:$0xf]
      %v2360 = vld [vmem:[%s5 + $0x30] sm:$0xf]
      %v2361 = vld [vmem:[%s5 + $0x34] sm:$0xf]
      %v2362 = vld [vmem:[%s5 + $0x38] sm:$0xf]
      %v2363 = vld [vmem:[%s5 + $0x3c] sm:$0xf]
      %v2364 = vld [vmem:[%s5 + $0x40] sm:$0xf]
      %v2365 = vld [vmem:[%s5 + $0x44] sm:$0xf]
      %v2366 = vld [vmem:[%s5 + $0x48] sm:$0xf]
      %v2367 = vld [vmem:[%s5 + $0x4c] sm:$0xf]
      %v2368 = vld [vmem:[%s5 + $0x50] sm:$0xf]
      %v2369 = vld [vmem:[%s5 + $0x54] sm:$0xf]
      %v2370 = vld [vmem:[%s5 + $0x58] sm:$0xf]
      %v2371 = vld [vmem:[%s5 + $0x5c] sm:$0xf]
      %v2372 = vld [vmem:[%s6] sm:$0xff]
      %v2373 = vld [vmem:[%s6 + $0x8] sm:$0xff]
      %v2374 = vld [vmem:[%s6 + $0x10] sm:$0xff]
      %v2375 = vld [vmem:[%s6 + $0x18] sm:$0xff]
      %v2376 = vld [vmem:[%s6 + $0x20] sm:$0xff]
      %v2377 = vld [vmem:[%s6 + $0x28] sm:$0xff]
      %v2378 = vld [vmem:[%s6 + $0x30] sm:$0xff]
      %v2379 = vld [vmem:[%s6 + $0x38] sm:$0xff]
      %v2380 = vld [vmem:[%s6 + $0x40] sm:$0xff]
      %v2381 = vld [vmem:[%s6 + $0x48] sm:$0xff]
      %v2382 = vld [vmem:[%s6 + $0x50] sm:$0xff]
      %v2383 = vld [vmem:[%s6 + $0x58] sm:$0xff]
      %v2384 = vld [vmem:[%s6 + $0x60] sm:$0xff]
      %v2385 = vld [vmem:[%s6 + $0x68] sm:$0xff]
      %v2386 = vld [vmem:[%s6 + $0x70] sm:$0xff]
      %v2387 = vld [vmem:[%s6 + $0x78] sm:$0xff]
      %v2388 = vld [vmem:[%s6 + $0x80] sm:$0xff]
      %v2389 = vld [vmem:[%s6 + $0x88] sm:$0xff]
      %v2390 = vld [vmem:[%s6 + $0x90] sm:$0xff]
      %v2391 = vld [vmem:[%s6 + $0x98] sm:$0xff]
      %v2392 = vld [vmem:[%s6 + $0xa0] sm:$0xff]
      %v2393 = vld [vmem:[%s6 + $0xa8] sm:$0xff]
      %v2394 = vld [vmem:[%s6 + $0xb0] sm:$0xff]
      %v2395 = vld [vmem:[%s6 + $0xb8] sm:$0xff]
      %2397 = vset.pattern.permute.xlu0 0
      %2398 = vperm.xlu0 %2397, %v2372
      %v2399 = vpop.permute.xlu0 %2398
      %2402 = vset.pattern.permute.xlu0 0
      %2403 = vperm.xlu0 %2402, %v2373
      %v2404 = vpop.permute.xlu0 %2403
      %2407 = vset.pattern.permute.xlu0 0
      %2408 = vperm.xlu0 %2407, %v2374
      %v2409 = vpop.permute.xlu0 %2408
      %2412 = vset.pattern.permute.xlu0 0
      %2413 = vperm.xlu0 %2412, %v2375
      %v2414 = vpop.permute.xlu0 %2413
      %2417 = vset.pattern.permute.xlu0 0
      %2418 = vperm.xlu0 %2417, %v2376
      %v2419 = vpop.permute.xlu0 %2418
      %2422 = vset.pattern.permute.xlu0 0
      %2423 = vperm.xlu0 %2422, %v2377
      %v2424 = vpop.permute.xlu0 %2423
      %2427 = vset.pattern.permute.xlu0 0
      %2428 = vperm.xlu0 %2427, %v2378
      %v2429 = vpop.permute.xlu0 %2428
      %2432 = vset.pattern.permute.xlu0 0
      %2433 = vperm.xlu0 %2432, %v2379
      %v2434 = vpop.permute.xlu0 %2433
      %2437 = vset.pattern.permute.xlu0 0
      %2438 = vperm.xlu0 %2437, %v2380
      %v2439 = vpop.permute.xlu0 %2438
      %2442 = vset.pattern.permute.xlu0 0
      %2443 = vperm.xlu0 %2442, %v2381
      %v2444 = vpop.permute.xlu0 %2443
      %2447 = vset.pattern.permute.xlu0 0
      %2448 = vperm.xlu0 %2447, %v2382
      %v2449 = vpop.permute.xlu0 %2448
      %2452 = vset.pattern.permute.xlu0 0
      %2453 = vperm.xlu0 %2452, %v2383
      %v2454 = vpop.permute.xlu0 %2453
      %2457 = vset.pattern.permute.xlu0 0
      %2458 = vperm.xlu0 %2457, %v2384
      %v2459 = vpop.permute.xlu0 %2458
      %2462 = vset.pattern.permute.xlu0 0
      %2463 = vperm.xlu0 %2462, %v2385
      %v2464 = vpop.permute.xlu0 %2463
      %2467 = vset.pattern.permute.xlu0 0
      %2468 = vperm.xlu0 %2467, %v2386
      %v2469 = vpop.permute.xlu0 %2468
      %2472 = vset.pattern.permute.xlu0 0
      %2473 = vperm.xlu0 %2472, %v2387
      %v2474 = vpop.permute.xlu0 %2473
      %2477 = vset.pattern.permute.xlu0 0
      %2478 = vperm.xlu0 %2477, %v2388
      %v2479 = vpop.permute.xlu0 %2478
      %2482 = vset.pattern.permute.xlu0 0
      %2483 = vperm.xlu0 %2482, %v2389
      %v2484 = vpop.permute.xlu0 %2483
      %2487 = vset.pattern.permute.xlu0 0
      %2488 = vperm.xlu0 %2487, %v2390
      %v2489 = vpop.permute.xlu0 %2488
      %2492 = vset.pattern.permute.xlu0 0
      %2493 = vperm.xlu0 %2492, %v2391
      %v2494 = vpop.permute.xlu0 %2493
      %2497 = vset.pattern.permute.xlu0 0
      %2498 = vperm.xlu0 %2497, %v2392
      %v2499 = vpop.permute.xlu0 %2498
      %2502 = vset.pattern.permute.xlu0 0
      %2503 = vperm.xlu0 %2502, %v2393
      %v2504 = vpop.permute.xlu0 %2503
      %2507 = vset.pattern.permute.xlu0 0
      %2508 = vperm.xlu0 %2507, %v2394
      %v2509 = vpop.permute.xlu0 %2508
      %2512 = vset.pattern.permute.xlu0 0
      %2513 = vperm.xlu0 %2512, %v2395
      %v2514 = vpop.permute.xlu0 %2513
      %v2540 = vunpack.c.l.b16 %v2348
      %v2541 = vunpack.c.l.b16 %v2349
      %v2542 = vunpack.c.l.b16 %v2350
      %v2543 = vunpack.c.l.b16 %v2351
      %v2544 = vunpack.c.l.b16 %v2352
      %v2545 = vunpack.c.l.b16 %v2353
      %v2546 = vunpack.c.l.b16 %v2354
      %v2547 = vunpack.c.l.b16 %v2355
      %v2548 = vunpack.c.l.b16 %v2356
      %v2549 = vunpack.c.l.b16 %v2357
      %v2550 = vunpack.c.l.b16 %v2358
      %v2551 = vunpack.c.l.b16 %v2359
      %v2552 = vunpack.c.l.b16 %v2360
      %v2553 = vunpack.c.l.b16 %v2361
      %v2554 = vunpack.c.l.b16 %v2362
      %v2555 = vunpack.c.l.b16 %v2363
      %v2556 = vunpack.c.l.b16 %v2364
      %v2557 = vunpack.c.l.b16 %v2365
      %v2558 = vunpack.c.l.b16 %v2366
      %v2559 = vunpack.c.l.b16 %v2367
      %v2560 = vunpack.c.l.b16 %v2368
      %v2561 = vunpack.c.l.b16 %v2369
      %v2562 = vunpack.c.l.b16 %v2370
      %v2563 = vunpack.c.l.b16 %v2371
      %v2564 = vpack.c.b16 %v2541, %v2540
      %v2565 = vpack.c.b16 %v2543, %v2542
      %v2566 = vpack.c.b16 %v2545, %v2544
      %v2567 = vpack.c.b16 %v2547, %v2546
      %v2568 = vpack.c.b16 %v2549, %v2548
      %v2569 = vpack.c.b16 %v2551, %v2550
      %v2570 = vpack.c.b16 %v2553, %v2552
      %v2571 = vpack.c.b16 %v2555, %v2554
      %v2572 = vpack.c.b16 %v2557, %v2556
      %v2573 = vpack.c.b16 %v2559, %v2558
      %v2574 = vpack.c.b16 %v2561, %v2560
      %v2575 = vpack.c.b16 %v2563, %v2562
      %v2577 = vsel %vm439, %v2564, 0
      %v2580 = vsel %vm439, %v2565, 0
      %v2583 = vsel %vm439, %v2566, 0
      %v2586 = vsel %vm439, %v2567, 0
      %v2589 = vsel %vm439, %v2568, 0
      %v2592 = vsel %vm439, %v2569, 0
      %v2595 = vsel %vm439, %v2570, 0
      %v2598 = vsel %vm439, %v2571, 0
      %v2601 = vsel %vm439, %v2572, 0
      %v2604 = vsel %vm439, %v2573, 0
      %v2607 = vsel %vm439, %v2574, 0
      %v2610 = vsel %vm439, %v2575, 0
      %2612 = vmatprep.subr.bf16.mxu0 0
      %2613 = vmatpush1.bf16.msra.mxu0 0
      %2614 = vmatprep.subr.bf16.mxu0 0
      %2615 = vmatpush1.bf16.msra.mxu0 0
      %2616 = vmatprep.subr.bf16.mxu0 0
      %2617 = vmatpush1.bf16.msra.mxu0 0
      %2618 = vmatprep.subr.bf16.mxu0 0
      %2619 = vmatpush1.bf16.msra.mxu0 0
      %2620 = vmatprep.subr.bf16.mxu0 %v2347
      %2621 = vmatpush1.bf16.msra.mxu0 %v2346
      %2622 = vmatprep.subr.bf16.mxu0 %v2345
      %2623 = vmatpush1.bf16.msra.mxu0 %v2344
      %2624 = vmatprep.subr.bf16.mxu0 %v2343
      %2625 = vmatpush1.bf16.msra.mxu0 %v2342
      %2626 = vmatprep.subr.bf16.mxu0 %v2341
      %2627 = vmatpush1.bf16.msra.mxu0 %v2340
      %2628 = vmatprep.subr.bf16.mxu0 0
      %2629 = vmatpush2.bf16.msra.mxu0 0
      %2630 = vmatprep.subr.bf16.mxu0 0
      %2631 = vmatpush2.bf16.msra.mxu0 0
      %2632 = vmatprep.subr.bf16.mxu0 0
      %2633 = vmatpush2.bf16.msra.mxu0 0
      %2634 = vmatprep.subr.bf16.mxu0 0
      %2635 = vmatpush2.bf16.msra.mxu0 0
      %2636 = vmatprep.subr.bf16.mxu0 0
      %2637 = vmatpush2.bf16.msra.mxu0 0
      %2638 = vmatprep.subr.bf16.mxu0 0
      %2639 = vmatpush2.bf16.msra.mxu0 0
      %2640 = vmatprep.subr.bf16.mxu0 0
      %2641 = vmatpush2.bf16.msra.mxu0 0
      %2642 = vmatprep.subr.bf16.mxu0 0
      %2643 = vmatpush2.bf16.msra.mxu0 0
      %2644 = vmatprep.mubr.bf16.mxu0 0
      %2645 = vmatmul.mubr.bf16.gmra.mxu0 %v2577
      %v2646 = vpop.f32.mrf.mxu0
      %v2647 = vadd.f32 %v2399, %v2646
      %v2648 = vpop.f32.mrf.mxu0
      %v2649 = vadd.f32 %v2399, %v2648
      %v2650 = vpop.f32.mrf.mxu0
      %v2651 = vadd.f32 %v2404, %v2650
      %v2652 = vpop.f32.mrf.mxu0
      %v2653 = vadd.f32 %v2404, %v2652
      %2654 = vmatprep.mubr.bf16.mxu0 0
      %2655 = vmatmul.mubr.bf16.gmra.mxu0 %v2580
      %v2656 = vpop.f32.mrf.mxu0
      %v2657 = vadd.f32 %v2409, %v2656
      %v2658 = vpop.f32.mrf.mxu0
      %v2659 = vadd.f32 %v2409, %v2658
      %v2660 = vpop.f32.mrf.mxu0
      %v2661 = vadd.f32 %v2414, %v2660
      %v2662 = vpop.f32.mrf.mxu0
      %v2663 = vadd.f32 %v2414, %v2662
      %2664 = vmatprep.mubr.bf16.mxu0 0
      %2665 = vmatmul.mubr.bf16.gmra.mxu0 %v2583
      %v2666 = vpop.f32.mrf.mxu0
      %v2667 = vadd.f32 %v2419, %v2666
      %v2668 = vpop.f32.mrf.mxu0
      %v2669 = vadd.f32 %v2419, %v2668
      %v2670 = vpop.f32.mrf.mxu0
      %v2671 = vadd.f32 %v2424, %v2670
      %v2672 = vpop.f32.mrf.mxu0
      %v2673 = vadd.f32 %v2424, %v2672
      %2674 = vmatprep.mubr.bf16.mxu0 0
      %2675 = vmatmul.mubr.bf16.gmra.mxu0 %v2586
      %v2676 = vpop.f32.mrf.mxu0
      %v2677 = vadd.f32 %v2429, %v2676
      %v2678 = vpop.f32.mrf.mxu0
      %v2679 = vadd.f32 %v2429, %v2678
      %v2680 = vpop.f32.mrf.mxu0
      %v2681 = vadd.f32 %v2434, %v2680
      %v2682 = vpop.f32.mrf.mxu0
      %v2683 = vadd.f32 %v2434, %v2682
      %2684 = vmatprep.mubr.bf16.mxu0 0
      %2685 = vmatmul.mubr.bf16.gmra.mxu0 %v2589
      %v2686 = vpop.f32.mrf.mxu0
      %v2687 = vadd.f32 %v2439, %v2686
      %v2688 = vpop.f32.mrf.mxu0
      %v2689 = vadd.f32 %v2439, %v2688
      %v2690 = vpop.f32.mrf.mxu0
      %v2691 = vadd.f32 %v2444, %v2690
      %v2692 = vpop.f32.mrf.mxu0
      %v2693 = vadd.f32 %v2444, %v2692
      %2694 = vmatprep.mubr.bf16.mxu0 0
      %2695 = vmatmul.mubr.bf16.gmra.mxu0 %v2592
      %v2696 = vpop.f32.mrf.mxu0
      %v2697 = vadd.f32 %v2449, %v2696
      %v2698 = vpop.f32.mrf.mxu0
      %v2699 = vadd.f32 %v2449, %v2698
      %v2700 = vpop.f32.mrf.mxu0
      %v2701 = vadd.f32 %v2454, %v2700
      %v2702 = vpop.f32.mrf.mxu0
      %v2703 = vadd.f32 %v2454, %v2702
      %2704 = vmatprep.mubr.bf16.mxu0 0
      %2705 = vmatmul.mubr.bf16.gmra.mxu0 %v2595
      %v2706 = vpop.f32.mrf.mxu0
      %v2707 = vadd.f32 %v2459, %v2706
      %v2708 = vpop.f32.mrf.mxu0
      %v2709 = vadd.f32 %v2459, %v2708
      %v2710 = vpop.f32.mrf.mxu0
      %v2711 = vadd.f32 %v2464, %v2710
      %v2712 = vpop.f32.mrf.mxu0
      %v2713 = vadd.f32 %v2464, %v2712
      %2714 = vmatprep.mubr.bf16.mxu0 0
      %2715 = vmatmul.mubr.bf16.gmra.mxu0 %v2598
      %v2716 = vpop.f32.mrf.mxu0
      %v2717 = vadd.f32 %v2469, %v2716
      %v2718 = vpop.f32.mrf.mxu0
      %v2719 = vadd.f32 %v2469, %v2718
      %v2720 = vpop.f32.mrf.mxu0
      %v2721 = vadd.f32 %v2474, %v2720
      %v2722 = vpop.f32.mrf.mxu0
      %v2723 = vadd.f32 %v2474, %v2722
      %2724 = vmatprep.mubr.bf16.mxu0 0
      %2725 = vmatmul.mubr.bf16.gmra.mxu0 %v2601
      %v2726 = vpop.f32.mrf.mxu0
      %v2727 = vadd.f32 %v2479, %v2726
      %v2728 = vpop.f32.mrf.mxu0
      %v2729 = vadd.f32 %v2479, %v2728
      %v2730 = vpop.f32.mrf.mxu0
      %v2731 = vadd.f32 %v2484, %v2730
      %v2732 = vpop.f32.mrf.mxu0
      %v2733 = vadd.f32 %v2484, %v2732
      %2734 = vmatprep.mubr.bf16.mxu0 0
      %2735 = vmatmul.mubr.bf16.gmra.mxu0 %v2604
      %v2736 = vpop.f32.mrf.mxu0
      %v2737 = vadd.f32 %v2489, %v2736
      %v2738 = vpop.f32.mrf.mxu0
      %v2739 = vadd.f32 %v2489, %v2738
      %v2740 = vpop.f32.mrf.mxu0
      %v2741 = vadd.f32 %v2494, %v2740
      %v2742 = vpop.f32.mrf.mxu0
      %v2743 = vadd.f32 %v2494, %v2742
      %2744 = vmatprep.mubr.bf16.mxu0 0
      %2745 = vmatmul.mubr.bf16.gmra.mxu0 %v2607
      %v2746 = vpop.f32.mrf.mxu0
      %v2747 = vadd.f32 %v2499, %v2746
      %v2748 = vpop.f32.mrf.mxu0
      %v2749 = vadd.f32 %v2499, %v2748
      %v2750 = vpop.f32.mrf.mxu0
      %v2751 = vadd.f32 %v2504, %v2750
      %v2752 = vpop.f32.mrf.mxu0
      %v2753 = vadd.f32 %v2504, %v2752
      %2754 = vmatprep.mubr.bf16.mxu0 0
      %2755 = vmatmul.mubr.bf16.gmra.mxu0 %v2610
      %v2756 = vpop.f32.mrf.mxu0
      %v2757 = vadd.f32 %v2509, %v2756
      %v2758 = vpop.f32.mrf.mxu0
      %v2759 = vadd.f32 %v2509, %v2758
      %v2760 = vpop.f32.mrf.mxu0
      %v2761 = vadd.f32 %v2514, %v2760
      %v2762 = vpop.f32.mrf.mxu0
      %v2763 = vadd.f32 %v2514, %v2762
      %2764 = vdwg.mxu0
      %v2765 = vpack.c.bf16 %v2651, %v2647
      %v2766 = vpack.c.bf16 %v2653, %v2649
      %v2767 = vpack.c.bf16 %v2661, %v2657
      %v2768 = vpack.c.bf16 %v2663, %v2659
      %v2769 = vpack.c.bf16 %v2671, %v2667
      %v2770 = vpack.c.bf16 %v2673, %v2669
      %v2771 = vpack.c.bf16 %v2681, %v2677
      %v2772 = vpack.c.bf16 %v2683, %v2679
      %v2773 = vpack.c.bf16 %v2691, %v2687
      %v2774 = vpack.c.bf16 %v2693, %v2689
      %v2775 = vpack.c.bf16 %v2701, %v2697
      %v2776 = vpack.c.bf16 %v2703, %v2699
      %v2777 = vpack.c.bf16 %v2711, %v2707
      %v2778 = vpack.c.bf16 %v2713, %v2709
      %v2779 = vpack.c.bf16 %v2721, %v2717
      %v2780 = vpack.c.bf16 %v2723, %v2719
      %v2781 = vpack.c.bf16 %v2731, %v2727
      %v2782 = vpack.c.bf16 %v2733, %v2729
      %v2783 = vpack.c.bf16 %v2741, %v2737
      %v2784 = vpack.c.bf16 %v2743, %v2739
      %v2785 = vpack.c.bf16 %v2751, %v2747
      %v2786 = vpack.c.bf16 %v2753, %v2749
      %v2787 = vpack.c.bf16 %v2761, %v2757
      %v2788 = vpack.c.bf16 %v2763, %v2759
      %2789 = vmatprep.subr.bf16.mxu0 0
      %2790 = vmatpush1.bf16.xpose.msra.mxu0 0
      %2791 = vmatprep.subr.bf16.mxu0 0
      %2792 = vmatpush1.bf16.xpose.msra.mxu0 0
      %2793 = vmatprep.subr.bf16.mxu0 0
      %2794 = vmatpush1.bf16.xpose.msra.mxu0 0
      %2795 = vmatprep.subr.bf16.mxu0 0
      %2796 = vmatpush1.bf16.xpose.msra.mxu0 0
      %2797 = vmatprep.subr.bf16.mxu0 %v2772
      %2798 = vmatpush1.bf16.xpose.msra.mxu0 %v2771
      %2799 = vmatprep.subr.bf16.mxu0 %v2770
      %2800 = vmatpush1.bf16.xpose.msra.mxu0 %v2769
      %2801 = vmatprep.subr.bf16.mxu0 %v2768
      %2802 = vmatpush1.bf16.xpose.msra.mxu0 %v2767
      %2803 = vmatprep.subr.bf16.mxu0 %v2766
      %2804 = vmatpush1.bf16.xpose.msra.mxu0 %v2765
      %2805 = vmatprep.subr.bf16.mxu0 0
      %2806 = vmatpush2.bf16.xpose.msra.mxu0 0
      %2807 = vmatprep.subr.bf16.mxu0 0
      %2808 = vmatpush2.bf16.xpose.msra.mxu0 0
      %2809 = vmatprep.subr.bf16.mxu0 0
      %2810 = vmatpush2.bf16.xpose.msra.mxu0 0
      %2811 = vmatprep.subr.bf16.mxu0 0
      %2812 = vmatpush2.bf16.xpose.msra.mxu0 0
      %2813 = vmatprep.subr.bf16.mxu0 0
      %2814 = vmatpush2.bf16.xpose.msra.mxu0 0
      %2815 = vmatprep.subr.bf16.mxu0 0
      %2816 = vmatpush2.bf16.xpose.msra.mxu0 0
      %2817 = vmatprep.subr.bf16.mxu0 0
      %2818 = vmatpush2.bf16.xpose.msra.mxu0 0
      %2819 = vmatprep.subr.bf16.mxu0 0
      %2820 = vmatpush2.bf16.xpose.msra.mxu0 0
      %2821 = vmatprep.mubr.bf16.mxu0 %v2774
      %2822 = vmatmul.mubr.bf16.gmra.mxu0 %v2773
      %v2823 = vpop.f32.mrf.mxu0
      %v2824 = vadd.f32 0.0, %v2823
      %v2825 = vpop.f32.mrf.mxu0
      %v2826 = vpop.f32.mrf.mxu0
      %v2827 = vadd.f32 0.0, %v2826
      %v2828 = vpop.f32.mrf.mxu0
      %2829 = vmatprep.mubr.bf16.mxu0 %v2776
      %2830 = vmatmul.mubr.bf16.gmra.mxu0 %v2775
      %v2831 = vpop.f32.mrf.mxu0
      %v2832 = vadd.f32 0.0, %v2831
      %v2833 = vpop.f32.mrf.mxu0
      %v2834 = vpop.f32.mrf.mxu0
      %v2835 = vadd.f32 0.0, %v2834
      %v2836 = vpop.f32.mrf.mxu0
      %2837 = vmatprep.mubr.bf16.mxu0 %v2778
      %2838 = vmatmul.mubr.bf16.gmra.mxu0 %v2777
      %v2839 = vpop.f32.mrf.mxu0
      %v2840 = vadd.f32 0.0, %v2839
      %v2841 = vpop.f32.mrf.mxu0
      %v2842 = vpop.f32.mrf.mxu0
      %v2843 = vadd.f32 0.0, %v2842
      %v2844 = vpop.f32.mrf.mxu0
      %2845 = vmatprep.mubr.bf16.mxu0 %v2780
      %2846 = vmatmul.mubr.bf16.gmra.mxu0 %v2779
      %v2847 = vpop.f32.mrf.mxu0
      %v2848 = vadd.f32 0.0, %v2847
      %v2849 = vpop.f32.mrf.mxu0
      %v2850 = vpop.f32.mrf.mxu0
      %v2851 = vadd.f32 0.0, %v2850
      %v2852 = vpop.f32.mrf.mxu0
      %2853 = vdwg.mxu0
      %v2854 = vsel %vm439, %v2824, -inf
      %v2855 = vsel %vm439, %v2827, -inf
      %v2856 = vsel %vm439, %v2832, -inf
      %v2857 = vsel %vm439, %v2835, -inf
      %v2858 = vsel %vm439, %v2840, -inf
      %v2859 = vmax.f32 %v2854, %v2858
      %v2860 = vsel %vm439, %v2843, -inf
      %v2861 = vmax.f32 %v2855, %v2860
      %v2862 = vsel %vm439, %v2848, -inf
      %v2863 = vmax.f32 %v2856, %v2862
      %v2864 = vsel %vm439, %v2851, -inf
      %v2865 = vmax.f32 %v2857, %v2864
      %v2866 = vmax.f32 %v2859, %v2861
      %v2867 = vmax.f32 %v2863, %v2865
      %v2868 = vmax.f32 %v2866, %v2867
      %v2869 = vrot.slane %v2868, 4
      %v2870 = vmax.f32 %v2868, %v2869
      %v2871 = vrot.slane %v2870, 2
      %v2872 = vmax.f32 %v2870, %v2871
      %v2873 = vrot.slane %v2872, 1
      %v2874 = vmax.f32 %v2872, %v2873
      %v2875 = vsub.f32 %v2824, %v2874
      %v2876 = vsub.f32 %v2827, %v2874
      %v2877 = vsub.f32 %v2832, %v2874
      %v2878 = vsub.f32 %v2835, %v2874
      %v2879 = vsub.f32 %v2840, %v2874
      %v2880 = vsub.f32 %v2843, %v2874
      %v2881 = vsub.f32 %v2848, %v2874
      %v2882 = vsub.f32 %v2851, %v2874
      %v2883 = vmul.f32 %v2875, 1.442695
      %v2884 = vpow.pop %v2883
      %v2885 = vmul.f32 %v2876, 1.442695
      %v2886 = vpow.pop %v2885
      %v2887 = vmul.f32 %v2877, 1.442695
      %v2888 = vpow.pop %v2887
      %v2889 = vmul.f32 %v2878, 1.442695
      %v2890 = vpow.pop %v2889
      %v2891 = vmul.f32 %v2879, 1.442695
      %v2892 = vpow.pop %v2891
      %v2893 = vmul.f32 %v2880, 1.442695
      %v2894 = vpow.pop %v2893
      %v2895 = vmul.f32 %v2881, 1.442695
      %v2896 = vpow.pop %v2895
      %v2897 = vmul.f32 %v2882, 1.442695
      %v2898 = vpow.pop %v2897
      %v2899 = vsel %vm439, %v2884, 0.0
      %v2900 = vsel %vm439, %v2886, 0.0
      %v2901 = vadd.f32 %v2899, %v2900
      %v2902 = vsel %vm439, %v2888, 0.0
      %v2903 = vadd.f32 %v2901, %v2902
      %v2904 = vsel %vm439, %v2890, 0.0
      %v2905 = vadd.f32 %v2903, %v2904
      %v2906 = vsel %vm439, %v2892, 0.0
      %v2907 = vadd.f32 %v2905, %v2906
      %v2908 = vsel %vm439, %v2894, 0.0
      %v2909 = vadd.f32 %v2907, %v2908
      %v2910 = vsel %vm439, %v2896, 0.0
      %v2911 = vadd.f32 %v2909, %v2910
      %v2912 = vsel %vm439, %v2898, 0.0
      %v2913 = vadd.f32 %v2911, %v2912
      %v2914 = vrot.slane %v2913, 4
      %v2915 = vadd.f32 %v2913, %v2914
      %v2916 = vrot.slane %v2915, 2
      %v2917 = vadd.f32 %v2915, %v2916
      %v2918 = vrot.slane %v2917, 1
      %v2919 = vadd.f32 %v2917, %v2918
      %v2920 = vrcp.pop %v2919
      %v2921 = vmul.f32 %v2884, %v2920
      %v2922 = vmul.f32 %v2886, %v2920
      %v2923 = vmul.f32 %v2888, %v2920
      %v2924 = vmul.f32 %v2890, %v2920
      %v2925 = vmul.f32 %v2892, %v2920
      %v2926 = vmul.f32 %v2894, %v2920
      %v2927 = vmul.f32 %v2896, %v2920
      %v2928 = vmul.f32 %v2898, %v2920
      %v2929 = vpack.c.bf16 %v2922, %v2921
      %v2930 = vpack.c.bf16 %v2924, %v2923
      %v2931 = vpack.c.bf16 %v2926, %v2925
      %v2932 = vpack.c.bf16 %v2928, %v2927
      %v2934 = vsel %vm439, %v2929, 0
      %v2937 = vsel %vm439, %v2930, 0
      %v2940 = vsel %vm439, %v2931, 0
      %v2943 = vsel %vm439, %v2932, 0
      %2945 = vmatprep.subr.bf16.mxu0 0
      %2946 = vmatpush1.bf16.msra.mxu0 0
      %2947 = vmatprep.subr.bf16.mxu0 0
      %2948 = vmatpush1.bf16.msra.mxu0 0
      %2949 = vmatprep.subr.bf16.mxu0 0
      %2950 = vmatpush1.bf16.msra.mxu0 0
      %2951 = vmatprep.subr.bf16.mxu0 0
      %2952 = vmatpush1.bf16.msra.mxu0 0
      %2953 = vmatprep.subr.bf16.mxu0 %v2788
      %2954 = vmatpush1.bf16.msra.mxu0 %v2787
      %2955 = vmatprep.subr.bf16.mxu0 %v2786
      %2956 = vmatpush1.bf16.msra.mxu0 %v2785
      %2957 = vmatprep.subr.bf16.mxu0 %v2784
      %2958 = vmatpush1.bf16.msra.mxu0 %v2783
      %2959 = vmatprep.subr.bf16.mxu0 %v2782
      %2960 = vmatpush1.bf16.msra.mxu0 %v2781
      %2961 = vmatprep.subr.bf16.mxu0 0
      %2962 = vmatpush2.bf16.msra.mxu0 0
      %2963 = vmatprep.subr.bf16.mxu0 0
      %2964 = vmatpush2.bf16.msra.mxu0 0
      %2965 = vmatprep.subr.bf16.mxu0 0
      %2966 = vmatpush2.bf16.msra.mxu0 0
      %2967 = vmatprep.subr.bf16.mxu0 0
      %2968 = vmatpush2.bf16.msra.mxu0 0
      %2969 = vmatprep.subr.bf16.mxu0 0
      %2970 = vmatpush2.bf16.msra.mxu0 0
      %2971 = vmatprep.subr.bf16.mxu0 0
      %2972 = vmatpush2.bf16.msra.mxu0 0
      %2973 = vmatprep.subr.bf16.mxu0 0
      %2974 = vmatpush2.bf16.msra.mxu0 0
      %2975 = vmatprep.subr.bf16.mxu0 0
      %2976 = vmatpush2.bf16.msra.mxu0 0
      %2977 = vmatprep.mubr.bf16.mxu0 0
      %2978 = vmatmul.mubr.bf16.gmra.mxu0 %v2934
      %v2979 = vpop.f32.mrf.mxu0
      %v2980 = vadd.f32 0.0, %v2979
      %v2981 = vpop.f32.mrf.mxu0
      %v2982 = vadd.f32 0.0, %v2981
      %v2983 = vpop.f32.mrf.mxu0
      %v2984 = vadd.f32 0.0, %v2983
      %v2985 = vpop.f32.mrf.mxu0
      %v2986 = vadd.f32 0.0, %v2985
      %2987 = vmatprep.mubr.bf16.mxu0 0
      %2988 = vmatmul.mubr.bf16.gmra.mxu0 %v2937
      %v2989 = vpop.f32.mrf.mxu0
      %v2990 = vadd.f32 0.0, %v2989
      %v2991 = vpop.f32.mrf.mxu0
      %v2992 = vadd.f32 0.0, %v2991
      %v2993 = vpop.f32.mrf.mxu0
      %v2994 = vadd.f32 0.0, %v2993
      %v2995 = vpop.f32.mrf.mxu0
      %v2996 = vadd.f32 0.0, %v2995
      %2997 = vmatprep.mubr.bf16.mxu0 0
      %2998 = vmatmul.mubr.bf16.gmra.mxu0 %v2940
      %v2999 = vpop.f32.mrf.mxu0
      %v3000 = vadd.f32 0.0, %v2999
      %v3001 = vpop.f32.mrf.mxu0
      %v3002 = vadd.f32 0.0, %v3001
      %v3003 = vpop.f32.mrf.mxu0
      %v3004 = vadd.f32 0.0, %v3003
      %v3005 = vpop.f32.mrf.mxu0
      %v3006 = vadd.f32 0.0, %v3005
      %3007 = vmatprep.mubr.bf16.mxu0 0
      %3008 = vmatmul.mubr.bf16.gmra.mxu0 %v2943
      %v3009 = vpop.f32.mrf.mxu0
      %v3010 = vadd.f32 0.0, %v3009
      %v3011 = vpop.f32.mrf.mxu0
      %v3012 = vadd.f32 0.0, %v3011
      %v3013 = vpop.f32.mrf.mxu0
      %v3014 = vadd.f32 0.0, %v3013
      %v3015 = vpop.f32.mrf.mxu0
      %v3016 = vadd.f32 0.0, %v3015
      %3017 = vdwg.mxu0
      %v3018 = vadd.f32 %v280, %v2980
      %v3019 = vadd.f32 %v281, %v2982
      %v3020 = vadd.f32 %v282, %v2984
      %v3021 = vadd.f32 %v283, %v2986
      %v3022 = vadd.f32 %v284, %v2990
      %v3023 = vadd.f32 %v285, %v2992
      %v3024 = vadd.f32 %v286, %v2994
      %v3025 = vadd.f32 %v287, %v2996
      %v3026 = vadd.f32 %v288, %v3000
      %v3027 = vadd.f32 %v289, %v3002
      %v3028 = vadd.f32 %v290, %v3004
      %v3029 = vadd.f32 %v291, %v3006
      %v3030 = vadd.f32 %v292, %v3010
      %v3031 = vadd.f32 %v293, %v3012
      %v3032 = vadd.f32 %v294, %v3014
      %v3033 = vadd.f32 %v295, %v3016
      %3034 = vst [vmem:[%s278] sm:$0xff] %v3018
      %3035 = vst [vmem:[%s278 + $0x8] sm:$0xff] %v3019
      %3036 = vst [vmem:[%s278 + $0x10] sm:$0xff] %v3020
      %3037 = vst [vmem:[%s278 + $0x18] sm:$0xff] %v3021
      %3038 = vst [vmem:[%s278 + $0x20] sm:$0xff] %v3022
      %3039 = vst [vmem:[%s278 + $0x28] sm:$0xff] %v3023
      %3040 = vst [vmem:[%s278 + $0x30] sm:$0xff] %v3024
      %3041 = vst [vmem:[%s278 + $0x38] sm:$0xff] %v3025
      %3042 = vst [vmem:[%s278 + $0x40] sm:$0xff] %v3026
      %3043 = vst [vmem:[%s278 + $0x48] sm:$0xff] %v3027
      %3044 = vst [vmem:[%s278 + $0x50] sm:$0xff] %v3028
      %3045 = vst [vmem:[%s278 + $0x58] sm:$0xff] %v3029
      %3046 = vst [vmem:[%s278 + $0x60] sm:$0xff] %v3030
      %3047 = vst [vmem:[%s278 + $0x68] sm:$0xff] %v3031
      %3048 = vst [vmem:[%s278 + $0x70] sm:$0xff] %v3032
      %3049 = vst [vmem:[%s278 + $0x78] sm:$0xff] %v3033
      %p3050 = scmp.lt.s32.totalorder %s18, 1
      %s3051 = scalar_select %p3050, %s18, 1
      %s3052 = smul.addr %s3051, 16
      %s3053 = smul.addr %s3052, 8
      %s3054 = scalar_lea.vmem %s7, %s3053
      // Predicated region
      $region49: #{nonlocal_block_forward.1} parent=47 // pred_check
        %p3055 = pneg %p188
      $region50: #{nonlocal_block_forward.1} parent=47 // pred_check_branch
        %3057 = sbr.rel (%p3055) target = $region52
      $region51: #{nonlocal_block_forward.1} parent=47 // pred_region
        _
      $region52: #{nonlocal_block_forward.1} parent=47 // pred_fallthru
        _
    $region48: #{nonlocal_block_forward.1} parent=5 // pred_fallthru
      _
    %p3058 = scmp.le.s32.totalorder 2, %s13
    // Predicated region
    $region53: #{nonlocal_block_forward.1} parent=5 // pred_check
      %p3059 = pneg %p3058
    $region54: #{nonlocal_block_forward.1} parent=5 // pred_check_branch
      %3061 = sbr.rel (%p3059) target = $region56
    $region55: #{nonlocal_block_forward.1} parent=5 // pred_region
      %s3062 = ssub.s32 %s13, 2
      // Predicated region
      $region57: #{nonlocal_block_forward.1} parent=55 // pred_check
        %p3063 = pneg %p194
      $region58: #{nonlocal_block_forward.1} parent=55 // pred_check_branch
        %3065 = sbr.rel (%p3063) target = $region60
      $region59: #{nonlocal_block_forward.1} parent=55 // pred_region
        %p3066 = scmp.lt.s32.totalorder %s19, 1
        %s3067 = scalar_select %p3066, %s19, 1
        %s3068 = smul.addr %s3067, 16
        %s3069 = smul.addr %s3068, 8
        %s3070 = scalar_lea.vmem %s7, %s3069
      $region60: #{nonlocal_block_forward.1} parent=55 // pred_fallthru
        _
    $region56: #{nonlocal_block_forward.1} parent=5 // pred_fallthru
      _
  $region6: #{nonlocal_block_forward.1} parent=0 // loop_footer
    %s17 = sadd.s32 1, %s13
  $region7: #{nonlocal_block_forward.1} parent=0 // loop_footer_branch
    %12 = sbr.rel target = $region3
  $region8: #{nonlocal_block_forward.1} parent=0 // loop_exit
    _

</llo_original>
